<compile_context>
chip_gen: v7x
topology: tpu7x:2x2x1
jax: 0.10.0
libtpu: 0.0.40
codegen_flags: <defaults>
</compile_context>

<pallas_src>
import functools

import numpy as np
import jax
import jax.numpy as jnp
from jax.experimental import pallas as pl
from jax.experimental.pallas import tpu as pltpu


# ----------------------------------------------------------------------------
# Configuration (small shapes consistent with the module's defaults, scaled
# down: hidden/embedding = 32, conv channels = 16/8).
# ----------------------------------------------------------------------------
STATE_DIMS = (2, 10, 10)                 # (C, H, W) -- PyTorch NCHW convention
ACTION_DIMS = (3, 4, 6)
N_ACTIONS = int(np.prod(ACTION_DIMS))    # joint-action softmax (72)
EMBEDDING_SIZE = 32
READOUT_HIDDEN = 32
BACKUP_HIDDEN = 32
EMB_CHANNELS = (16, 16, 16, 8)           # scaled-down [64, 64, 64, 32]
N_RES_BLOCKS = 3
N_SIMULS = 3
HW = STATE_DIMS[1] * STATE_DIMS[2]       # 100 real pixels per state
HWP = 128                                # pixels padded to a full lane block
C_PAD = 8                                # input channels zero-padded to 8
N_STATES = 1 + N_SIMULS                  # root + one leaf state per simulation


# ----------------------------------------------------------------------------
# Per-tap border masks for the roll-based 3x3 conv.
# mask[k, s*HWP + (i*W + j)] == 1  iff  (i + di_k, j + dj_k) is a valid pixel.
# mask[4] (the centre tap) doubles as the "is a real pixel" mask.
# ----------------------------------------------------------------------------
def build_tap_masks(n_states, h, w, hwp):
    m = np.zeros((9, n_states * hwp), np.float32)
    for k in range(9):
        di, dj = k // 3 - 1, k % 3 - 1
        valid = np.zeros(hwp, np.float32)
        for i in range(h):
            if not (0 <= i + di < h):
                continue
            for j in range(w):
                if 0 <= j + dj < w:
                    valid[i * w + j] = 1.0
        m[k] = np.tile(valid, n_states)
    return jnp.asarray(m)


# ----------------------------------------------------------------------------
# The single fused kernel.
# ----------------------------------------------------------------------------
def _mctsnet_kernel(rew_ref, x_ref, mask_ref,
                    w_in_ref, b_in_ref, w_res_ref, b_res_ref,
                    w_out_ref, b_out_ref, wfc_ref, bfc_ref,
                    pw1_ref, pb1_ref, pw2_ref, pb2_ref,
                    rw1_ref, rb1_ref, rw2_ref, rb2_ref,
                    bwh_ref, bwhp_ref, bwr_ref, bwa_ref,
                    bb1_ref, bw2_ref, bb2_ref,
                    o_ref, *, n_simuls):
    n_states = n_simuls + 1
    lanes = n_states * HWP               # 512: (state, pixel) packed on lanes
    w_img = STATE_DIMS[2]

    x = x_ref[...]                       # (C_PAD, lanes)
    masks = mask_ref[...]                # (9, lanes)

    def conv3x3(y, w, b):
        """3x3 'same' conv over each 10x10 state image.

        y: (C_in, lanes) with spatial on lanes (one 128-lane block per state);
        w: (C_out, 9*C_in) tap-concatenated weights; b: (C_out, 1).
        Taps are lane rolls (XLU) + border masks (VPU); the (tap, channel)
        contraction is one lane-dense MXU matmul (N = lanes = 512).
        Valid output lanes never read padding / neighbouring-state lanes
        because those taps are exactly the masked-out ones.
        """
        chunks = []
        for k in range(9):
            off = (k // 3 - 1) * w_img + (k % 3 - 1)
            shifted = y if off == 0 else pltpu.roll(y, shift=(-off) % lanes, axis=1)
            chunks.append(shifted * masks[k:k + 1, :])
        tapcat = jnp.concatenate(chunks, axis=0)            # (9*C_in, lanes)
        return jnp.dot(w, tapcat, preferred_element_type=jnp.float32) + b

    # Stem 3x3 conv + ReLU (input channels zero-padded to C_PAD=8 so every
    # sublane-concat chunk is 8-row aligned and the stem is one matmul).
    y = jnp.maximum(conv3x3(x, w_in_ref[...], b_in_ref[...]), 0.0)

    # Residual 3x3 blocks.
    # TODO(synk): the exact ResidualBlock of EmbeddingNetwork is not in the
    # provided source; single-conv residual blocks are used here.
    for i in range(N_RES_BLOCKS):
        y = jnp.maximum(conv3x3(y, w_res_ref[i], b_res_ref[i]) + y, 0.0)

    # 1x1 projection conv + ReLU, then zero the padding lanes so the flatten
    # below only sees real pixels.
    feat = jnp.maximum(
        jnp.dot(w_out_ref[...], y, preferred_element_type=jnp.float32)
        + b_out_ref[...], 0.0)                               # (C_LAST, lanes)
    feat = feat * masks[4:5, :]

    # Embedding FC per state: channel-major flatten built from lane-aligned
    # 128-wide slices (no sublane/lane relayout), then one small matmul each.
    c_last = EMB_CHANNELS[-1]
    h = []
    for s in range(n_states):
        row = jnp.concatenate(
            [feat[c:c + 1, s * HWP:(s + 1) * HWP] for c in range(c_last)],
            axis=1)                                          # (1, C_LAST*HWP)
        h.append(jnp.dot(row, wfc_ref[...],
                         preferred_element_type=jnp.float32) + bfc_ref[...])
    h_root = h[0]                                            # (1, E)

    ids = jax.lax.broadcasted_iota(
        jnp.int32, (1, N_ACTIONS), 1).astype(jnp.float32)

    for s in range(n_simuls):
        # --- selection: policy MLP over the current root embedding ----------
        z = jnp.maximum(
            jnp.dot(h_root, pw1_ref[...], preferred_element_type=jnp.float32)
            + pb1_ref[...], 0.0)
        logits = (jnp.dot(z, pw2_ref[...], preferred_element_type=jnp.float32)
                  + pb2_ref[...])
        # TODO(synk): Node.next_node(probs) tree traversal / env stepping has
        # no array equivalent; a greedy (argmax) action pick stands in for it.
        mx = jnp.max(logits, axis=-1, keepdims=True)
        amax = jnp.min(jnp.where(logits >= mx, ids, float(N_ACTIONS)),
                       axis=-1, keepdims=True)
        a_onehot = (ids == amax).astype(jnp.float32)         # (1, A)

        # --- expansion + backup along the (depth-1 stand-in) path -----------
        r = rew_ref[s]                                       # SMEM scalar
        z2 = (jnp.dot(h_root, bwh_ref[...], preferred_element_type=jnp.float32)
              + jnp.dot(h[s + 1], bwhp_ref[...],
                        preferred_element_type=jnp.float32)
              + jnp.dot(a_onehot, bwa_ref[...],
                        preferred_element_type=jnp.float32)
              + r * bwr_ref[...]
              + bb1_ref[...])
        z2 = jnp.maximum(z2, 0.0)
        h_root = h_root + (jnp.dot(z2, bw2_ref[...],
                                   preferred_element_type=jnp.float32)
                           + bb2_ref[...])
        # TODO(synk): internal_control / Bernoulli early stopping needs
        # python-side sampling of another module; fixed n_simuls is used.

    # --- readout at the root: MLP + exact softmax ----------------------------
    z = jnp.maximum(
        jnp.dot(h_root, rw1_ref[...], preferred_element_type=jnp.float32)
        + rb1_ref[...], 0.0)
    logits = (jnp.dot(z, rw2_ref[...], preferred_element_type=jnp.float32)
              + rb2_ref[...])
    e = jnp.exp(logits - jnp.max(logits, axis=-1, keepdims=True))
    o_ref[...] = e / jnp.sum(e, axis=-1, keepdims=True)


def _mctsnet_pallas(params, x, rewards, n_simuls):
    emb, po, ro, bk = (params["embedding"], params["policy"],
                       params["readout"], params["backup"])
    kernel = functools.partial(_mctsnet_kernel, n_simuls=n_simuls)
    return pl.pallas_call(
        kernel,
        out_shape=jax.ShapeDtypeStruct((1, N_ACTIONS), jnp.float32),
        in_specs=([pl.BlockSpec(memory_space=pltpu.MemorySpace.SMEM)]
                  + [pl.BlockSpec(memory_space=pltpu.MemorySpace.VMEM)] * 25),
        out_specs=pl.BlockSpec(memory_space=pltpu.MemorySpace.VMEM),
    )(rewards, x, emb["masks"],
      emb["w_in"], emb["b_in"], emb["w_res"], emb["b_res"],
      emb["w_out"], emb["b_out"], emb["w_fc"], emb["b_fc"],
      po["w1"], po["b1"], po["w2"], po["b2"],
      ro["w1"], ro["b1"], ro["w2"], ro["b2"],
      bk["wh"], bk["whp"], bk["wr"], bk["wa"], bk["b1"], bk["w2"], bk["b2"])


# ----------------------------------------------------------------------------
# Deterministic parameter initialization (weights stored in kernel layouts).
# ----------------------------------------------------------------------------
def _dense(key, fan_in, shape):
    return jax.random.normal(key, shape, jnp.float32) / np.sqrt(fan_in)


def _bias(key, shape):
    return 0.01 * jax.random.normal(key, shape, jnp.float32)


def init_params(key, n_states=N_STATES):
    ks = iter(jax.random.split(key, 12))
    c_in, hh, ww = STATE_DIMS
    c0, c_last = EMB_CHANNELS[0], EMB_CHANNELS[-1]

    emb = {
        # constant conv-tap border masks, (9, n_states*HWP)
        "masks": build_tap_masks(n_states, hh, ww, HWP),
        # stem: (C_out, 9*C_PAD); padded input channels are zero so the extra
        # weight columns never contribute.
        "w_in": _dense(next(ks), 9 * c_in, (c0, 9 * C_PAD)),
        "b_in": _bias(next(ks), (c0, 1)),
        "w_res": _dense(next(ks), 9 * c0, (N_RES_BLOCKS, c0, 9 * c0)),
        "b_res": _bias(next(ks), (N_RES_BLOCKS, c0, 1)),
        "w_out": _dense(next(ks), EMB_CHANNELS[-2], (c_last, EMB_CHANNELS[-2])),
        "b_out": _bias(next(ks), (c_last, 1)),
        # FC over the channel-major flatten; rows for padding pixels are
        # multiplied by zeroed lanes, so they never contribute.
        "w_fc": _dense(next(ks), HW * c_last, (c_last * HWP, EMBEDDING_SIZE)),
        "b_fc": _bias(next(ks), (1, EMBEDDING_SIZE)),
    }

    def mlp_head(k):
        k1, k2, k3, k4 = jax.random.split(k, 4)
        return {"w1": _dense(k1, EMBEDDING_SIZE, (EMBEDDING_SIZE, READOUT_HIDDEN)),
                "b1": _bias(k2, (1, READOUT_HIDDEN)),
                "w2": _dense(k3, READOUT_HIDDEN, (READOUT_HIDDEN, N_ACTIONS)),
                "b2": _bias(k4, (1, N_ACTIONS))}

    readout = mlp_head(next(ks))
    policy = mlp_head(next(ks))

    kb = jax.random.split(next(ks), 7)
    backup = {
        "wh": _dense(kb[0], EMBEDDING_SIZE, (EMBEDDING_SIZE, BACKUP_HIDDEN)),
        "whp": _dense(kb[1], EMBEDDING_SIZE, (EMBEDDING_SIZE, BACKUP_HIDDEN)),
        "wr": _dense(kb[2], 1, (1, BACKUP_HIDDEN)),
        "wa": _dense(kb[3], N_ACTIONS, (N_ACTIONS, BACKUP_HIDDEN)),
        "b1": _bias(kb[4], (1, BACKUP_HIDDEN)),
        "w2": _dense(kb[5], BACKUP_HIDDEN, (BACKUP_HIDDEN, EMBEDDING_SIZE)),
        "b2": _bias(kb[6], (1, EMBEDDING_SIZE)),
    }

    return {"embedding": emb, "readout": readout, "policy": policy,
            "backup": backup}


# ----------------------------------------------------------------------------
# MCTSnet forward
# ----------------------------------------------------------------------------
def _forward_impl(params, root_state_nchw, leaf_states_nchw, rewards, n_simuls):
    """Returns (probs, action_mask), mirroring MCTSnet.forward's return.

    root_state_nchw:  (1, C, H, W)          -- tree root state
    leaf_states_nchw: (n_simuls, C, H, W)   -- states reached by each simulation
    rewards:          (n_simuls,)           -- rewards gathered at each leaf
    """
    c, hh, ww = STATE_DIMS
    # Root + all simulation leaf states go through ONE fused kernel pass.
    # Layout prep (tiny ~3 KB array): pad channels to C_PAD, pixels to HWP,
    # put (state, pixel) on the lane axis -> (C_PAD, n_states*HWP).
    states = jnp.concatenate([root_state_nchw, leaf_states_nchw], axis=0)
    x = states.reshape(1 + n_simuls, c, hh * ww)
    x = jnp.pad(x, ((0, 0), (0, C_PAD - c), (0, HWP - hh * ww)))
    x = jnp.transpose(x, (1, 0, 2)).reshape(C_PAD, (1 + n_simuls) * HWP)

    probs = _mctsnet_pallas(params, x, rewards.astype(jnp.float32), n_simuls)
    # TODO(synk): the real action_mask comes from the tree's root node.
    action_mask = jnp.ones_like(probs)
    return probs, action_mask


mctsnet_forward = jax.jit(_forward_impl, static_argnames=("n_simuls",))


# ----------------------------------------------------------------------------
# Main
# ----------------------------------------------------------------------------
if __name__ == "__main__":
    key = jax.random.PRNGKey(0)
    k_params, k_root, k_leaves, k_rew = jax.random.split(key, 4)

    params = init_params(k_params)

    c, h, w = STATE_DIMS
    root_state = jax.random.normal(k_root, (1, c, h, w), jnp.float32)
    leaf_states = jax.random.normal(k_leaves, (N_SIMULS, c, h, w), jnp.float32)
    rewards = jax.random.normal(k_rew, (N_SIMULS,), jnp.float32)

    probs, action_mask = mctsnet_forward(params, root_state, leaf_states,
                                         rewards, n_simuls=N_SIMULS)
    probs = jax.block_until_ready(probs)
    action_mask = jax.block_until_ready(action_mask)

    assert probs.shape == (1, N_ACTIONS)
    assert action_mask.shape == (1, N_ACTIONS)
    assert bool(jnp.all(jnp.isfinite(probs)))
    assert bool(jnp.all(probs >= 0.0))
    # exact softmax output
    assert abs(float(jnp.sum(probs)) - 1.0) < 1e-3

    print("KERNEL_OK")
</pallas_src>

<mosaic_0001>
module attributes {stable_mosaic.version = 11 : i64} {
  func.func @_mctsnet_kernel(%arg0: memref<3xf32, #tpu.memory_space<smem>>, %arg1: memref<8x512xf32, #tpu.memory_space<vmem>>, %arg2: memref<9x512xf32, #tpu.memory_space<vmem>>, %arg3: memref<16x72xf32, #tpu.memory_space<vmem>>, %arg4: memref<16x1xf32, #tpu.memory_space<vmem>>, %arg5: memref<3x16x144xf32, #tpu.memory_space<vmem>>, %arg6: memref<3x16x1xf32, #tpu.memory_space<vmem>>, %arg7: memref<8x16xf32, #tpu.memory_space<vmem>>, %arg8: memref<8x1xf32, #tpu.memory_space<vmem>>, %arg9: memref<1024x32xf32, #tpu.memory_space<vmem>>, %arg10: memref<1x32xf32, #tpu.memory_space<vmem>>, %arg11: memref<32x32xf32, #tpu.memory_space<vmem>>, %arg12: memref<1x32xf32, #tpu.memory_space<vmem>>, %arg13: memref<32x72xf32, #tpu.memory_space<vmem>>, %arg14: memref<1x72xf32, #tpu.memory_space<vmem>>, %arg15: memref<32x32xf32, #tpu.memory_space<vmem>>, %arg16: memref<1x32xf32, #tpu.memory_space<vmem>>, %arg17: memref<32x72xf32, #tpu.memory_space<vmem>>, %arg18: memref<1x72xf32, #tpu.memory_space<vmem>>, %arg19: memref<32x32xf32, #tpu.memory_space<vmem>>, %arg20: memref<32x32xf32, #tpu.memory_space<vmem>>, %arg21: memref<1x32xf32, #tpu.memory_space<vmem>>, %arg22: memref<72x32xf32, #tpu.memory_space<vmem>>, %arg23: memref<1x32xf32, #tpu.memory_space<vmem>>, %arg24: memref<32x32xf32, #tpu.memory_space<vmem>>, %arg25: memref<1x32xf32, #tpu.memory_space<vmem>>, %arg26: memref<1x72xf32, #tpu.memory_space<vmem>>) attributes {dimension_semantics = [], scalar_prefetch = 0 : i64, scratch_operands = 0 : i64, tpu.core_type = #tpu.core_type<tc>} {
    %c0 = arith.constant 0 : index
    %c0_0 = arith.constant 0 : index
    %0 = vector.load %arg1[%c0, %c0_0] : memref<8x512xf32, #tpu.memory_space<vmem>>, vector<8x512xf32>
    %c0_1 = arith.constant 0 : index
    %c0_2 = arith.constant 0 : index
    %1 = vector.load %arg2[%c0_1, %c0_2] : memref<9x512xf32, #tpu.memory_space<vmem>>, vector<9x512xf32>
    %c0_3 = arith.constant 0 : index
    %c0_4 = arith.constant 0 : index
    %2 = vector.load %arg3[%c0_3, %c0_4] : memref<16x72xf32, #tpu.memory_space<vmem>>, vector<16x72xf32>
    %c0_5 = arith.constant 0 : index
    %c0_6 = arith.constant 0 : index
    %3 = vector.load %arg4[%c0_5, %c0_6] : memref<16x1xf32, #tpu.memory_space<vmem>>, vector<16x1xf32>
    %c11_i32 = arith.constant 11 : i32
    %4 = tpu.dynamic_rotate %0 by %c11_i32 dim 1 : vector<8x512xf32>, i32 -> vector<8x512xf32>
    %5 = vector.extract_strided_slice %1 {offsets = [0, 0], sizes = [1, 512], strides = [1, 1]} : vector<9x512xf32> to vector<1x512xf32>
    %6 = vector.broadcast %5 : vector<1x512xf32> to vector<8x512xf32>
    %7 = arith.mulf %4, %6 : vector<8x512xf32>
    %c10_i32 = arith.constant 10 : i32
    %8 = tpu.dynamic_rotate %0 by %c10_i32 dim 1 : vector<8x512xf32>, i32 -> vector<8x512xf32>
    %9 = vector.extract_strided_slice %1 {offsets = [1, 0], sizes = [1, 512], strides = [1, 1]} : vector<9x512xf32> to vector<1x512xf32>
    %10 = vector.broadcast %9 : vector<1x512xf32> to vector<8x512xf32>
    %11 = arith.mulf %8, %10 : vector<8x512xf32>
    %c9_i32 = arith.constant 9 : i32
    %12 = tpu.dynamic_rotate %0 by %c9_i32 dim 1 : vector<8x512xf32>, i32 -> vector<8x512xf32>
    %13 = vector.extract_strided_slice %1 {offsets = [2, 0], sizes = [1, 512], strides = [1, 1]} : vector<9x512xf32> to vector<1x512xf32>
    %14 = vector.broadcast %13 : vector<1x512xf32> to vector<8x512xf32>
    %15 = arith.mulf %12, %14 : vector<8x512xf32>
    %c1_i32 = arith.constant 1 : i32
    %16 = tpu.dynamic_rotate %0 by %c1_i32 dim 1 : vector<8x512xf32>, i32 -> vector<8x512xf32>
    %17 = vector.extract_strided_slice %1 {offsets = [3, 0], sizes = [1, 512], strides = [1, 1]} : vector<9x512xf32> to vector<1x512xf32>
    %18 = vector.broadcast %17 : vector<1x512xf32> to vector<8x512xf32>
    %19 = arith.mulf %16, %18 : vector<8x512xf32>
    %20 = vector.extract_strided_slice %1 {offsets = [4, 0], sizes = [1, 512], strides = [1, 1]} : vector<9x512xf32> to vector<1x512xf32>
    %21 = vector.broadcast %20 : vector<1x512xf32> to vector<8x512xf32>
    %22 = arith.mulf %0, %21 : vector<8x512xf32>
    %c511_i32 = arith.constant 511 : i32
    %23 = tpu.dynamic_rotate %0 by %c511_i32 dim 1 : vector<8x512xf32>, i32 -> vector<8x512xf32>
    %24 = vector.extract_strided_slice %1 {offsets = [5, 0], sizes = [1, 512], strides = [1, 1]} : vector<9x512xf32> to vector<1x512xf32>
    %25 = vector.broadcast %24 : vector<1x512xf32> to vector<8x512xf32>
    %26 = arith.mulf %23, %25 : vector<8x512xf32>
    %c503_i32 = arith.constant 503 : i32
    %27 = tpu.dynamic_rotate %0 by %c503_i32 dim 1 : vector<8x512xf32>, i32 -> vector<8x512xf32>
    %28 = vector.extract_strided_slice %1 {offsets = [6, 0], sizes = [1, 512], strides = [1, 1]} : vector<9x512xf32> to vector<1x512xf32>
    %29 = vector.broadcast %28 : vector<1x512xf32> to vector<8x512xf32>
    %30 = arith.mulf %27, %29 : vector<8x512xf32>
    %c502_i32 = arith.constant 502 : i32
    %31 = tpu.dynamic_rotate %0 by %c502_i32 dim 1 : vector<8x512xf32>, i32 -> vector<8x512xf32>
    %32 = vector.extract_strided_slice %1 {offsets = [7, 0], sizes = [1, 512], strides = [1, 1]} : vector<9x512xf32> to vector<1x512xf32>
    %33 = vector.broadcast %32 : vector<1x512xf32> to vector<8x512xf32>
    %34 = arith.mulf %31, %33 : vector<8x512xf32>
    %c501_i32 = arith.constant 501 : i32
    %35 = tpu.dynamic_rotate %0 by %c501_i32 dim 1 : vector<8x512xf32>, i32 -> vector<8x512xf32>
    %36 = vector.extract_strided_slice %1 {offsets = [8, 0], sizes = [1, 512], strides = [1, 1]} : vector<9x512xf32> to vector<1x512xf32>
    %37 = vector.broadcast %36 : vector<1x512xf32> to vector<8x512xf32>
    %38 = arith.mulf %35, %37 : vector<8x512xf32>
    %39 = tpu.concatenate %7, %11, %15, %19, %22, %26, %30, %34, %38 in 0 : vector<8x512xf32>, vector<8x512xf32>, vector<8x512xf32>, vector<8x512xf32>, vector<8x512xf32>, vector<8x512xf32>, vector<8x512xf32>, vector<8x512xf32>, vector<8x512xf32> -> vector<72x512xf32>
    %cst = arith.constant dense<0.000000e+00> : vector<16x512xf32>
    %40 = tpu.matmul %2, %39, %cst {dimension_numbers = #tpu.dot_dimension_numbers<[1], [0], [0], [1], [0, 0, 1, 1], [], []>} : vector<16x72xf32>, vector<72x512xf32>, vector<16x512xf32> -> vector<16x512xf32>
    %41 = vector.broadcast %3 : vector<16x1xf32> to vector<16x512xf32>
    %42 = arith.addf %40, %41 : vector<16x512xf32>
    %cst_7 = arith.constant 0.000000e+00 : f32
    %43 = vector.broadcast %cst_7 : f32 to vector<16x512xf32>
    %44 = arith.maximumf %42, %43 : vector<16x512xf32>
    %c0_8 = arith.constant 0 : index
    %c0_9 = arith.constant 0 : index
    %c0_10 = arith.constant 0 : index
    %45 = vector.load %arg5[%c0_8, %c0_9, %c0_10] : memref<3x16x144xf32, #tpu.memory_space<vmem>>, vector<1x16x144xf32>
    %46 = vector.shape_cast %45 : vector<1x16x144xf32> to vector<16x144xf32>
    %c0_11 = arith.constant 0 : index
    %c0_12 = arith.constant 0 : index
    %c0_13 = arith.constant 0 : index
    %47 = vector.load %arg6[%c0_11, %c0_12, %c0_13] : memref<3x16x1xf32, #tpu.memory_space<vmem>>, vector<1x16x1xf32>
    %48 = vector.shape_cast %47 : vector<1x16x1xf32> to vector<16x1xf32>
    %c11_i32_14 = arith.constant 11 : i32
    %49 = tpu.dynamic_rotate %44 by %c11_i32_14 dim 1 : vector<16x512xf32>, i32 -> vector<16x512xf32>
    %50 = vector.extract_strided_slice %1 {offsets = [0, 0], sizes = [1, 512], strides = [1, 1]} : vector<9x512xf32> to vector<1x512xf32>
    %51 = vector.broadcast %50 : vector<1x512xf32> to vector<16x512xf32>
    %52 = arith.mulf %49, %51 : vector<16x512xf32>
    %c10_i32_15 = arith.constant 10 : i32
    %53 = tpu.dynamic_rotate %44 by %c10_i32_15 dim 1 : vector<16x512xf32>, i32 -> vector<16x512xf32>
    %54 = vector.extract_strided_slice %1 {offsets = [1, 0], sizes = [1, 512], strides = [1, 1]} : vector<9x512xf32> to vector<1x512xf32>
    %55 = vector.broadcast %54 : vector<1x512xf32> to vector<16x512xf32>
    %56 = arith.mulf %53, %55 : vector<16x512xf32>
    %c9_i32_16 = arith.constant 9 : i32
    %57 = tpu.dynamic_rotate %44 by %c9_i32_16 dim 1 : vector<16x512xf32>, i32 -> vector<16x512xf32>
    %58 = vector.extract_strided_slice %1 {offsets = [2, 0], sizes = [1, 512], strides = [1, 1]} : vector<9x512xf32> to vector<1x512xf32>
    %59 = vector.broadcast %58 : vector<1x512xf32> to vector<16x512xf32>
    %60 = arith.mulf %57, %59 : vector<16x512xf32>
    %c1_i32_17 = arith.constant 1 : i32
    %61 = tpu.dynamic_rotate %44 by %c1_i32_17 dim 1 : vector<16x512xf32>, i32 -> vector<16x512xf32>
    %62 = vector.extract_strided_slice %1 {offsets = [3, 0], sizes = [1, 512], strides = [1, 1]} : vector<9x512xf32> to vector<1x512xf32>
    %63 = vector.broadcast %62 : vector<1x512xf32> to vector<16x512xf32>
    %64 = arith.mulf %61, %63 : vector<16x512xf32>
    %65 = vector.extract_strided_slice %1 {offsets = [4, 0], sizes = [1, 512], strides = [1, 1]} : vector<9x512xf32> to vector<1x512xf32>
    %66 = vector.broadcast %65 : vector<1x512xf32> to vector<16x512xf32>
    %67 = arith.mulf %44, %66 : vector<16x512xf32>
    %c511_i32_18 = arith.constant 511 : i32
    %68 = tpu.dynamic_rotate %44 by %c511_i32_18 dim 1 : vector<16x512xf32>, i32 -> vector<16x512xf32>
    %69 = vector.extract_strided_slice %1 {offsets = [5, 0], sizes = [1, 512], strides = [1, 1]} : vector<9x512xf32> to vector<1x512xf32>
    %70 = vector.broadcast %69 : vector<1x512xf32> to vector<16x512xf32>
    %71 = arith.mulf %68, %70 : vector<16x512xf32>
    %c503_i32_19 = arith.constant 503 : i32
    %72 = tpu.dynamic_rotate %44 by %c503_i32_19 dim 1 : vector<16x512xf32>, i32 -> vector<16x512xf32>
    %73 = vector.extract_strided_slice %1 {offsets = [6, 0], sizes = [1, 512], strides = [1, 1]} : vector<9x512xf32> to vector<1x512xf32>
    %74 = vector.broadcast %73 : vector<1x512xf32> to vector<16x512xf32>
    %75 = arith.mulf %72, %74 : vector<16x512xf32>
    %c502_i32_20 = arith.constant 502 : i32
    %76 = tpu.dynamic_rotate %44 by %c502_i32_20 dim 1 : vector<16x512xf32>, i32 -> vector<16x512xf32>
    %77 = vector.extract_strided_slice %1 {offsets = [7, 0], sizes = [1, 512], strides = [1, 1]} : vector<9x512xf32> to vector<1x512xf32>
    %78 = vector.broadcast %77 : vector<1x512xf32> to vector<16x512xf32>
    %79 = arith.mulf %76, %78 : vector<16x512xf32>
    %c501_i32_21 = arith.constant 501 : i32
    %80 = tpu.dynamic_rotate %44 by %c501_i32_21 dim 1 : vector<16x512xf32>, i32 -> vector<16x512xf32>
    %81 = vector.extract_strided_slice %1 {offsets = [8, 0], sizes = [1, 512], strides = [1, 1]} : vector<9x512xf32> to vector<1x512xf32>
    %82 = vector.broadcast %81 : vector<1x512xf32> to vector<16x512xf32>
    %83 = arith.mulf %80, %82 : vector<16x512xf32>
    %84 = tpu.concatenate %52, %56, %60, %64, %67, %71, %75, %79, %83 in 0 : vector<16x512xf32>, vector<16x512xf32>, vector<16x512xf32>, vector<16x512xf32>, vector<16x512xf32>, vector<16x512xf32>, vector<16x512xf32>, vector<16x512xf32>, vector<16x512xf32> -> vector<144x512xf32>
    %cst_22 = arith.constant dense<0.000000e+00> : vector<16x512xf32>
    %85 = tpu.matmul %46, %84, %cst_22 {dimension_numbers = #tpu.dot_dimension_numbers<[1], [0], [0], [1], [0, 0, 1, 1], [], []>} : vector<16x144xf32>, vector<144x512xf32>, vector<16x512xf32> -> vector<16x512xf32>
    %86 = vector.broadcast %48 : vector<16x1xf32> to vector<16x512xf32>
    %87 = arith.addf %85, %86 : vector<16x512xf32>
    %88 = arith.addf %87, %44 : vector<16x512xf32>
    %cst_23 = arith.constant 0.000000e+00 : f32
    %89 = vector.broadcast %cst_23 : f32 to vector<16x512xf32>
    %90 = arith.maximumf %88, %89 : vector<16x512xf32>
    %c1 = arith.constant 1 : index
    %c0_24 = arith.constant 0 : index
    %c0_25 = arith.constant 0 : index
    %91 = vector.load %arg5[%c1, %c0_24, %c0_25] : memref<3x16x144xf32, #tpu.memory_space<vmem>>, vector<1x16x144xf32>
    %92 = vector.shape_cast %91 : vector<1x16x144xf32> to vector<16x144xf32>
    %c1_26 = arith.constant 1 : index
    %c0_27 = arith.constant 0 : index
    %c0_28 = arith.constant 0 : index
    %93 = vector.load %arg6[%c1_26, %c0_27, %c0_28] : memref<3x16x1xf32, #tpu.memory_space<vmem>>, vector<1x16x1xf32>
    %94 = vector.shape_cast %93 : vector<1x16x1xf32> to vector<16x1xf32>
    %c11_i32_29 = arith.constant 11 : i32
    %95 = tpu.dynamic_rotate %90 by %c11_i32_29 dim 1 : vector<16x512xf32>, i32 -> vector<16x512xf32>
    %96 = vector.extract_strided_slice %1 {offsets = [0, 0], sizes = [1, 512], strides = [1, 1]} : vector<9x512xf32> to vector<1x512xf32>
    %97 = vector.broadcast %96 : vector<1x512xf32> to vector<16x512xf32>
    %98 = arith.mulf %95, %97 : vector<16x512xf32>
    %c10_i32_30 = arith.constant 10 : i32
    %99 = tpu.dynamic_rotate %90 by %c10_i32_30 dim 1 : vector<16x512xf32>, i32 -> vector<16x512xf32>
    %100 = vector.extract_strided_slice %1 {offsets = [1, 0], sizes = [1, 512], strides = [1, 1]} : vector<9x512xf32> to vector<1x512xf32>
    %101 = vector.broadcast %100 : vector<1x512xf32> to vector<16x512xf32>
    %102 = arith.mulf %99, %101 : vector<16x512xf32>
    %c9_i32_31 = arith.constant 9 : i32
    %103 = tpu.dynamic_rotate %90 by %c9_i32_31 dim 1 : vector<16x512xf32>, i32 -> vector<16x512xf32>
    %104 = vector.extract_strided_slice %1 {offsets = [2, 0], sizes = [1, 512], strides = [1, 1]} : vector<9x512xf32> to vector<1x512xf32>
    %105 = vector.broadcast %104 : vector<1x512xf32> to vector<16x512xf32>
    %106 = arith.mulf %103, %105 : vector<16x512xf32>
    %c1_i32_32 = arith.constant 1 : i32
    %107 = tpu.dynamic_rotate %90 by %c1_i32_32 dim 1 : vector<16x512xf32>, i32 -> vector<16x512xf32>
    %108 = vector.extract_strided_slice %1 {offsets = [3, 0], sizes = [1, 512], strides = [1, 1]} : vector<9x512xf32> to vector<1x512xf32>
    %109 = vector.broadcast %108 : vector<1x512xf32> to vector<16x512xf32>
    %110 = arith.mulf %107, %109 : vector<16x512xf32>
    %111 = vector.extract_strided_slice %1 {offsets = [4, 0], sizes = [1, 512], strides = [1, 1]} : vector<9x512xf32> to vector<1x512xf32>
    %112 = vector.broadcast %111 : vector<1x512xf32> to vector<16x512xf32>
    %113 = arith.mulf %90, %112 : vector<16x512xf32>
    %c511_i32_33 = arith.constant 511 : i32
    %114 = tpu.dynamic_rotate %90 by %c511_i32_33 dim 1 : vector<16x512xf32>, i32 -> vector<16x512xf32>
    %115 = vector.extract_strided_slice %1 {offsets = [5, 0], sizes = [1, 512], strides = [1, 1]} : vector<9x512xf32> to vector<1x512xf32>
    %116 = vector.broadcast %115 : vector<1x512xf32> to vector<16x512xf32>
    %117 = arith.mulf %114, %116 : vector<16x512xf32>
    %c503_i32_34 = arith.constant 503 : i32
    %118 = tpu.dynamic_rotate %90 by %c503_i32_34 dim 1 : vector<16x512xf32>, i32 -> vector<16x512xf32>
    %119 = vector.extract_strided_slice %1 {offsets = [6, 0], sizes = [1, 512], strides = [1, 1]} : vector<9x512xf32> to vector<1x512xf32>
    %120 = vector.broadcast %119 : vector<1x512xf32> to vector<16x512xf32>
    %121 = arith.mulf %118, %120 : vector<16x512xf32>
    %c502_i32_35 = arith.constant 502 : i32
    %122 = tpu.dynamic_rotate %90 by %c502_i32_35 dim 1 : vector<16x512xf32>, i32 -> vector<16x512xf32>
    %123 = vector.extract_strided_slice %1 {offsets = [7, 0], sizes = [1, 512], strides = [1, 1]} : vector<9x512xf32> to vector<1x512xf32>
    %124 = vector.broadcast %123 : vector<1x512xf32> to vector<16x512xf32>
    %125 = arith.mulf %122, %124 : vector<16x512xf32>
    %c501_i32_36 = arith.constant 501 : i32
    %126 = tpu.dynamic_rotate %90 by %c501_i32_36 dim 1 : vector<16x512xf32>, i32 -> vector<16x512xf32>
    %127 = vector.extract_strided_slice %1 {offsets = [8, 0], sizes = [1, 512], strides = [1, 1]} : vector<9x512xf32> to vector<1x512xf32>
    %128 = vector.broadcast %127 : vector<1x512xf32> to vector<16x512xf32>
    %129 = arith.mulf %126, %128 : vector<16x512xf32>
    %130 = tpu.concatenate %98, %102, %106, %110, %113, %117, %121, %125, %129 in 0 : vector<16x512xf32>, vector<16x512xf32>, vector<16x512xf32>, vector<16x512xf32>, vector<16x512xf32>, vector<16x512xf32>, vector<16x512xf32>, vector<16x512xf32>, vector<16x512xf32> -> vector<144x512xf32>
    %cst_37 = arith.constant dense<0.000000e+00> : vector<16x512xf32>
    %131 = tpu.matmul %92, %130, %cst_37 {dimension_numbers = #tpu.dot_dimension_numbers<[1], [0], [0], [1], [0, 0, 1, 1], [], []>} : vector<16x144xf32>, vector<144x512xf32>, vector<16x512xf32> -> vector<16x512xf32>
    %132 = vector.broadcast %94 : vector<16x1xf32> to vector<16x512xf32>
    %133 = arith.addf %131, %132 : vector<16x512xf32>
    %134 = arith.addf %133, %90 : vector<16x512xf32>
    %cst_38 = arith.constant 0.000000e+00 : f32
    %135 = vector.broadcast %cst_38 : f32 to vector<16x512xf32>
    %136 = arith.maximumf %134, %135 : vector<16x512xf32>
    %c2 = arith.constant 2 : index
    %c0_39 = arith.constant 0 : index
    %c0_40 = arith.constant 0 : index
    %137 = vector.load %arg5[%c2, %c0_39, %c0_40] : memref<3x16x144xf32, #tpu.memory_space<vmem>>, vector<1x16x144xf32>
    %138 = vector.shape_cast %137 : vector<1x16x144xf32> to vector<16x144xf32>
    %c2_41 = arith.constant 2 : index
    %c0_42 = arith.constant 0 : index
    %c0_43 = arith.constant 0 : index
    %139 = vector.load %arg6[%c2_41, %c0_42, %c0_43] : memref<3x16x1xf32, #tpu.memory_space<vmem>>, vector<1x16x1xf32>
    %140 = vector.shape_cast %139 : vector<1x16x1xf32> to vector<16x1xf32>
    %c11_i32_44 = arith.constant 11 : i32
    %141 = tpu.dynamic_rotate %136 by %c11_i32_44 dim 1 : vector<16x512xf32>, i32 -> vector<16x512xf32>
    %142 = vector.extract_strided_slice %1 {offsets = [0, 0], sizes = [1, 512], strides = [1, 1]} : vector<9x512xf32> to vector<1x512xf32>
    %143 = vector.broadcast %142 : vector<1x512xf32> to vector<16x512xf32>
    %144 = arith.mulf %141, %143 : vector<16x512xf32>
    %c10_i32_45 = arith.constant 10 : i32
    %145 = tpu.dynamic_rotate %136 by %c10_i32_45 dim 1 : vector<16x512xf32>, i32 -> vector<16x512xf32>
    %146 = vector.extract_strided_slice %1 {offsets = [1, 0], sizes = [1, 512], strides = [1, 1]} : vector<9x512xf32> to vector<1x512xf32>
    %147 = vector.broadcast %146 : vector<1x512xf32> to vector<16x512xf32>
    %148 = arith.mulf %145, %147 : vector<16x512xf32>
    %c9_i32_46 = arith.constant 9 : i32
    %149 = tpu.dynamic_rotate %136 by %c9_i32_46 dim 1 : vector<16x512xf32>, i32 -> vector<16x512xf32>
    %150 = vector.extract_strided_slice %1 {offsets = [2, 0], sizes = [1, 512], strides = [1, 1]} : vector<9x512xf32> to vector<1x512xf32>
    %151 = vector.broadcast %150 : vector<1x512xf32> to vector<16x512xf32>
    %152 = arith.mulf %149, %151 : vector<16x512xf32>
    %c1_i32_47 = arith.constant 1 : i32
    %153 = tpu.dynamic_rotate %136 by %c1_i32_47 dim 1 : vector<16x512xf32>, i32 -> vector<16x512xf32>
    %154 = vector.extract_strided_slice %1 {offsets = [3, 0], sizes = [1, 512], strides = [1, 1]} : vector<9x512xf32> to vector<1x512xf32>
    %155 = vector.broadcast %154 : vector<1x512xf32> to vector<16x512xf32>
    %156 = arith.mulf %153, %155 : vector<16x512xf32>
    %157 = vector.extract_strided_slice %1 {offsets = [4, 0], sizes = [1, 512], strides = [1, 1]} : vector<9x512xf32> to vector<1x512xf32>
    %158 = vector.broadcast %157 : vector<1x512xf32> to vector<16x512xf32>
    %159 = arith.mulf %136, %158 : vector<16x512xf32>
    %c511_i32_48 = arith.constant 511 : i32
    %160 = tpu.dynamic_rotate %136 by %c511_i32_48 dim 1 : vector<16x512xf32>, i32 -> vector<16x512xf32>
    %161 = vector.extract_strided_slice %1 {offsets = [5, 0], sizes = [1, 512], strides = [1, 1]} : vector<9x512xf32> to vector<1x512xf32>
    %162 = vector.broadcast %161 : vector<1x512xf32> to vector<16x512xf32>
    %163 = arith.mulf %160, %162 : vector<16x512xf32>
    %c503_i32_49 = arith.constant 503 : i32
    %164 = tpu.dynamic_rotate %136 by %c503_i32_49 dim 1 : vector<16x512xf32>, i32 -> vector<16x512xf32>
    %165 = vector.extract_strided_slice %1 {offsets = [6, 0], sizes = [1, 512], strides = [1, 1]} : vector<9x512xf32> to vector<1x512xf32>
    %166 = vector.broadcast %165 : vector<1x512xf32> to vector<16x512xf32>
    %167 = arith.mulf %164, %166 : vector<16x512xf32>
    %c502_i32_50 = arith.constant 502 : i32
    %168 = tpu.dynamic_rotate %136 by %c502_i32_50 dim 1 : vector<16x512xf32>, i32 -> vector<16x512xf32>
    %169 = vector.extract_strided_slice %1 {offsets = [7, 0], sizes = [1, 512], strides = [1, 1]} : vector<9x512xf32> to vector<1x512xf32>
    %170 = vector.broadcast %169 : vector<1x512xf32> to vector<16x512xf32>
    %171 = arith.mulf %168, %170 : vector<16x512xf32>
    %c501_i32_51 = arith.constant 501 : i32
    %172 = tpu.dynamic_rotate %136 by %c501_i32_51 dim 1 : vector<16x512xf32>, i32 -> vector<16x512xf32>
    %173 = vector.extract_strided_slice %1 {offsets = [8, 0], sizes = [1, 512], strides = [1, 1]} : vector<9x512xf32> to vector<1x512xf32>
    %174 = vector.broadcast %173 : vector<1x512xf32> to vector<16x512xf32>
    %175 = arith.mulf %172, %174 : vector<16x512xf32>
    %176 = tpu.concatenate %144, %148, %152, %156, %159, %163, %167, %171, %175 in 0 : vector<16x512xf32>, vector<16x512xf32>, vector<16x512xf32>, vector<16x512xf32>, vector<16x512xf32>, vector<16x512xf32>, vector<16x512xf32>, vector<16x512xf32>, vector<16x512xf32> -> vector<144x512xf32>
    %cst_52 = arith.constant dense<0.000000e+00> : vector<16x512xf32>
    %177 = tpu.matmul %138, %176, %cst_52 {dimension_numbers = #tpu.dot_dimension_numbers<[1], [0], [0], [1], [0, 0, 1, 1], [], []>} : vector<16x144xf32>, vector<144x512xf32>, vector<16x512xf32> -> vector<16x512xf32>
    %178 = vector.broadcast %140 : vector<16x1xf32> to vector<16x512xf32>
    %179 = arith.addf %177, %178 : vector<16x512xf32>
    %180 = arith.addf %179, %136 : vector<16x512xf32>
    %cst_53 = arith.constant 0.000000e+00 : f32
    %181 = vector.broadcast %cst_53 : f32 to vector<16x512xf32>
    %182 = arith.maximumf %180, %181 : vector<16x512xf32>
    %c0_54 = arith.constant 0 : index
    %c0_55 = arith.constant 0 : index
    %183 = vector.load %arg7[%c0_54, %c0_55] : memref<8x16xf32, #tpu.memory_space<vmem>>, vector<8x16xf32>
    %cst_56 = arith.constant dense<0.000000e+00> : vector<8x512xf32>
    %184 = tpu.matmul %183, %182, %cst_56 {dimension_numbers = #tpu.dot_dimension_numbers<[1], [0], [0], [1], [0, 0, 1, 1], [], []>} : vector<8x16xf32>, vector<16x512xf32>, vector<8x512xf32> -> vector<8x512xf32>
    %c0_57 = arith.constant 0 : index
    %c0_58 = arith.constant 0 : index
    %185 = vector.load %arg8[%c0_57, %c0_58] : memref<8x1xf32, #tpu.memory_space<vmem>>, vector<8x1xf32>
    %186 = vector.broadcast %185 : vector<8x1xf32> to vector<8x512xf32>
    %187 = arith.addf %184, %186 : vector<8x512xf32>
    %cst_59 = arith.constant 0.000000e+00 : f32
    %188 = vector.broadcast %cst_59 : f32 to vector<8x512xf32>
    %189 = arith.maximumf %187, %188 : vector<8x512xf32>
    %190 = vector.extract_strided_slice %1 {offsets = [4, 0], sizes = [1, 512], strides = [1, 1]} : vector<9x512xf32> to vector<1x512xf32>
    %191 = vector.broadcast %190 : vector<1x512xf32> to vector<8x512xf32>
    %192 = arith.mulf %189, %191 : vector<8x512xf32>
    %193 = vector.extract_strided_slice %192 {offsets = [0, 0], sizes = [1, 128], strides = [1, 1]} : vector<8x512xf32> to vector<1x128xf32>
    %194 = vector.extract_strided_slice %192 {offsets = [1, 0], sizes = [1, 128], strides = [1, 1]} : vector<8x512xf32> to vector<1x128xf32>
    %195 = vector.extract_strided_slice %192 {offsets = [2, 0], sizes = [1, 128], strides = [1, 1]} : vector<8x512xf32> to vector<1x128xf32>
    %196 = vector.extract_strided_slice %192 {offsets = [3, 0], sizes = [1, 128], strides = [1, 1]} : vector<8x512xf32> to vector<1x128xf32>
    %197 = vector.extract_strided_slice %192 {offsets = [4, 0], sizes = [1, 128], strides = [1, 1]} : vector<8x512xf32> to vector<1x128xf32>
    %198 = vector.extract_strided_slice %192 {offsets = [5, 0], sizes = [1, 128], strides = [1, 1]} : vector<8x512xf32> to vector<1x128xf32>
    %199 = vector.extract_strided_slice %192 {offsets = [6, 0], sizes = [1, 128], strides = [1, 1]} : vector<8x512xf32> to vector<1x128xf32>
    %200 = vector.extract_strided_slice %192 {offsets = [7, 0], sizes = [1, 128], strides = [1, 1]} : vector<8x512xf32> to vector<1x128xf32>
    %201 = tpu.concatenate %193, %194, %195, %196, %197, %198, %199, %200 in 1 : vector<1x128xf32>, vector<1x128xf32>, vector<1x128xf32>, vector<1x128xf32>, vector<1x128xf32>, vector<1x128xf32>, vector<1x128xf32>, vector<1x128xf32> -> vector<1x1024xf32>
    %c0_60 = arith.constant 0 : index
    %c0_61 = arith.constant 0 : index
    %202 = vector.load %arg9[%c0_60, %c0_61] : memref<1024x32xf32, #tpu.memory_space<vmem>>, vector<1024x32xf32>
    %cst_62 = arith.constant dense<0.000000e+00> : vector<1x32xf32>
    %203 = tpu.matmul %201, %202, %cst_62 {dimension_numbers = #tpu.dot_dimension_numbers<[1], [0], [0], [1], [0, 0, 1, 1], [], []>} : vector<1x1024xf32>, vector<1024x32xf32>, vector<1x32xf32> -> vector<1x32xf32>
    %c0_63 = arith.constant 0 : index
    %c0_64 = arith.constant 0 : index
    %204 = vector.load %arg10[%c0_63, %c0_64] : memref<1x32xf32, #tpu.memory_space<vmem>>, vector<1x32xf32>
    %205 = arith.addf %203, %204 : vector<1x32xf32>
    %206 = vector.extract_strided_slice %192 {offsets = [0, 128], sizes = [1, 128], strides = [1, 1]} : vector<8x512xf32> to vector<1x128xf32>
    %207 = vector.extract_strided_slice %192 {offsets = [1, 128], sizes = [1, 128], strides = [1, 1]} : vector<8x512xf32> to vector<1x128xf32>
    %208 = vector.extract_strided_slice %192 {offsets = [2, 128], sizes = [1, 128], strides = [1, 1]} : vector<8x512xf32> to vector<1x128xf32>
    %209 = vector.extract_strided_slice %192 {offsets = [3, 128], sizes = [1, 128], strides = [1, 1]} : vector<8x512xf32> to vector<1x128xf32>
    %210 = vector.extract_strided_slice %192 {offsets = [4, 128], sizes = [1, 128], strides = [1, 1]} : vector<8x512xf32> to vector<1x128xf32>
    %211 = vector.extract_strided_slice %192 {offsets = [5, 128], sizes = [1, 128], strides = [1, 1]} : vector<8x512xf32> to vector<1x128xf32>
    %212 = vector.extract_strided_slice %192 {offsets = [6, 128], sizes = [1, 128], strides = [1, 1]} : vector<8x512xf32> to vector<1x128xf32>
    %213 = vector.extract_strided_slice %192 {offsets = [7, 128], sizes = [1, 128], strides = [1, 1]} : vector<8x512xf32> to vector<1x128xf32>
    %214 = tpu.concatenate %206, %207, %208, %209, %210, %211, %212, %213 in 1 : vector<1x128xf32>, vector<1x128xf32>, vector<1x128xf32>, vector<1x128xf32>, vector<1x128xf32>, vector<1x128xf32>, vector<1x128xf32>, vector<1x128xf32> -> vector<1x1024xf32>
    %c0_65 = arith.constant 0 : index
    %c0_66 = arith.constant 0 : index
    %215 = vector.load %arg9[%c0_65, %c0_66] : memref<1024x32xf32, #tpu.memory_space<vmem>>, vector<1024x32xf32>
    %cst_67 = arith.constant dense<0.000000e+00> : vector<1x32xf32>
    %216 = tpu.matmul %214, %215, %cst_67 {dimension_numbers = #tpu.dot_dimension_numbers<[1], [0], [0], [1], [0, 0, 1, 1], [], []>} : vector<1x1024xf32>, vector<1024x32xf32>, vector<1x32xf32> -> vector<1x32xf32>
    %c0_68 = arith.constant 0 : index
    %c0_69 = arith.constant 0 : index
    %217 = vector.load %arg10[%c0_68, %c0_69] : memref<1x32xf32, #tpu.memory_space<vmem>>, vector<1x32xf32>
    %218 = arith.addf %216, %217 : vector<1x32xf32>
    %219 = vector.extract_strided_slice %192 {offsets = [0, 256], sizes = [1, 128], strides = [1, 1]} : vector<8x512xf32> to vector<1x128xf32>
    %220 = vector.extract_strided_slice %192 {offsets = [1, 256], sizes = [1, 128], strides = [1, 1]} : vector<8x512xf32> to vector<1x128xf32>
    %221 = vector.extract_strided_slice %192 {offsets = [2, 256], sizes = [1, 128], strides = [1, 1]} : vector<8x512xf32> to vector<1x128xf32>
    %222 = vector.extract_strided_slice %192 {offsets = [3, 256], sizes = [1, 128], strides = [1, 1]} : vector<8x512xf32> to vector<1x128xf32>
    %223 = vector.extract_strided_slice %192 {offsets = [4, 256], sizes = [1, 128], strides = [1, 1]} : vector<8x512xf32> to vector<1x128xf32>
    %224 = vector.extract_strided_slice %192 {offsets = [5, 256], sizes = [1, 128], strides = [1, 1]} : vector<8x512xf32> to vector<1x128xf32>
    %225 = vector.extract_strided_slice %192 {offsets = [6, 256], sizes = [1, 128], strides = [1, 1]} : vector<8x512xf32> to vector<1x128xf32>
    %226 = vector.extract_strided_slice %192 {offsets = [7, 256], sizes = [1, 128], strides = [1, 1]} : vector<8x512xf32> to vector<1x128xf32>
    %227 = tpu.concatenate %219, %220, %221, %222, %223, %224, %225, %226 in 1 : vector<1x128xf32>, vector<1x128xf32>, vector<1x128xf32>, vector<1x128xf32>, vector<1x128xf32>, vector<1x128xf32>, vector<1x128xf32>, vector<1x128xf32> -> vector<1x1024xf32>
    %c0_70 = arith.constant 0 : index
    %c0_71 = arith.constant 0 : index
    %228 = vector.load %arg9[%c0_70, %c0_71] : memref<1024x32xf32, #tpu.memory_space<vmem>>, vector<1024x32xf32>
    %cst_72 = arith.constant dense<0.000000e+00> : vector<1x32xf32>
    %229 = tpu.matmul %227, %228, %cst_72 {dimension_numbers = #tpu.dot_dimension_numbers<[1], [0], [0], [1], [0, 0, 1, 1], [], []>} : vector<1x1024xf32>, vector<1024x32xf32>, vector<1x32xf32> -> vector<1x32xf32>
    %c0_73 = arith.constant 0 : index
    %c0_74 = arith.constant 0 : index
    %230 = vector.load %arg10[%c0_73, %c0_74] : memref<1x32xf32, #tpu.memory_space<vmem>>, vector<1x32xf32>
    %231 = arith.addf %229, %230 : vector<1x32xf32>
    %232 = vector.extract_strided_slice %192 {offsets = [0, 384], sizes = [1, 128], strides = [1, 1]} : vector<8x512xf32> to vector<1x128xf32>
    %233 = vector.extract_strided_slice %192 {offsets = [1, 384], sizes = [1, 128], strides = [1, 1]} : vector<8x512xf32> to vector<1x128xf32>
    %234 = vector.extract_strided_slice %192 {offsets = [2, 384], sizes = [1, 128], strides = [1, 1]} : vector<8x512xf32> to vector<1x128xf32>
    %235 = vector.extract_strided_slice %192 {offsets = [3, 384], sizes = [1, 128], strides = [1, 1]} : vector<8x512xf32> to vector<1x128xf32>
    %236 = vector.extract_strided_slice %192 {offsets = [4, 384], sizes = [1, 128], strides = [1, 1]} : vector<8x512xf32> to vector<1x128xf32>
    %237 = vector.extract_strided_slice %192 {offsets = [5, 384], sizes = [1, 128], strides = [1, 1]} : vector<8x512xf32> to vector<1x128xf32>
    %238 = vector.extract_strided_slice %192 {offsets = [6, 384], sizes = [1, 128], strides = [1, 1]} : vector<8x512xf32> to vector<1x128xf32>
    %239 = vector.extract_strided_slice %192 {offsets = [7, 384], sizes = [1, 128], strides = [1, 1]} : vector<8x512xf32> to vector<1x128xf32>
    %240 = tpu.concatenate %232, %233, %234, %235, %236, %237, %238, %239 in 1 : vector<1x128xf32>, vector<1x128xf32>, vector<1x128xf32>, vector<1x128xf32>, vector<1x128xf32>, vector<1x128xf32>, vector<1x128xf32>, vector<1x128xf32> -> vector<1x1024xf32>
    %c0_75 = arith.constant 0 : index
    %c0_76 = arith.constant 0 : index
    %241 = vector.load %arg9[%c0_75, %c0_76] : memref<1024x32xf32, #tpu.memory_space<vmem>>, vector<1024x32xf32>
    %cst_77 = arith.constant dense<0.000000e+00> : vector<1x32xf32>
    %242 = tpu.matmul %240, %241, %cst_77 {dimension_numbers = #tpu.dot_dimension_numbers<[1], [0], [0], [1], [0, 0, 1, 1], [], []>} : vector<1x1024xf32>, vector<1024x32xf32>, vector<1x32xf32> -> vector<1x32xf32>
    %c0_78 = arith.constant 0 : index
    %c0_79 = arith.constant 0 : index
    %243 = vector.load %arg10[%c0_78, %c0_79] : memref<1x32xf32, #tpu.memory_space<vmem>>, vector<1x32xf32>
    %244 = arith.addf %242, %243 : vector<1x32xf32>
    %245 = tpu.iota {dimensions = array<i32: 1>} : vector<1x72xi32>
    %246 = arith.sitofp %245 : vector<1x72xi32> to vector<1x72xf32>
    %c0_80 = arith.constant 0 : index
    %c0_81 = arith.constant 0 : index
    %247 = vector.load %arg11[%c0_80, %c0_81] : memref<32x32xf32, #tpu.memory_space<vmem>>, vector<32x32xf32>
    %cst_82 = arith.constant dense<0.000000e+00> : vector<1x32xf32>
    %248 = tpu.matmul %205, %247, %cst_82 {dimension_numbers = #tpu.dot_dimension_numbers<[1], [0], [0], [1], [0, 0, 1, 1], [], []>} : vector<1x32xf32>, vector<32x32xf32>, vector<1x32xf32> -> vector<1x32xf32>
    %c0_83 = arith.constant 0 : index
    %c0_84 = arith.constant 0 : index
    %249 = vector.load %arg12[%c0_83, %c0_84] : memref<1x32xf32, #tpu.memory_space<vmem>>, vector<1x32xf32>
    %250 = arith.addf %248, %249 : vector<1x32xf32>
    %cst_85 = arith.constant 0.000000e+00 : f32
    %251 = vector.broadcast %cst_85 : f32 to vector<1x32xf32>
    %252 = arith.maximumf %250, %251 : vector<1x32xf32>
    %c0_86 = arith.constant 0 : index
    %c0_87 = arith.constant 0 : index
    %253 = vector.load %arg13[%c0_86, %c0_87] : memref<32x72xf32, #tpu.memory_space<vmem>>, vector<32x72xf32>
    %cst_88 = arith.constant dense<0.000000e+00> : vector<1x72xf32>
    %254 = tpu.matmul %252, %253, %cst_88 {dimension_numbers = #tpu.dot_dimension_numbers<[1], [0], [0], [1], [0, 0, 1, 1], [], []>} : vector<1x32xf32>, vector<32x72xf32>, vector<1x72xf32> -> vector<1x72xf32>
    %c0_89 = arith.constant 0 : index
    %c0_90 = arith.constant 0 : index
    %255 = vector.load %arg14[%c0_89, %c0_90] : memref<1x72xf32, #tpu.memory_space<vmem>>, vector<1x72xf32>
    %256 = arith.addf %254, %255 : vector<1x72xf32>
    %cst_91 = arith.constant dense<0xFF800000> : vector<1xf32>
    %257 = vector.multi_reduction <maximumf>, %256, %cst_91 [1] : vector<1x72xf32> to vector<1xf32>
    %258 = vector.shape_cast %257 : vector<1xf32> to vector<1x1xf32>
    %259 = vector.broadcast %258 : vector<1x1xf32> to vector<1x72xf32>
    %260 = arith.cmpf oge, %256, %259 : vector<1x72xf32>
    %cst_92 = arith.constant 7.200000e+01 : f32
    %261 = vector.broadcast %cst_92 : f32 to vector<1x72xf32>
    %262 = arith.select %260, %246, %261 : vector<1x72xi1>, vector<1x72xf32>
    %cst_93 = arith.constant dense<0x7F800000> : vector<1xf32>
    %263 = vector.multi_reduction <minimumf>, %262, %cst_93 [1] : vector<1x72xf32> to vector<1xf32>
    %264 = vector.shape_cast %263 : vector<1xf32> to vector<1x1xf32>
    %265 = vector.broadcast %264 : vector<1x1xf32> to vector<1x72xf32>
    %266 = arith.cmpf oeq, %246, %265 : vector<1x72xf32>
    %267 = arith.extui %266 : vector<1x72xi1> to vector<1x72xi32>
    %268 = arith.sitofp %267 : vector<1x72xi32> to vector<1x72xf32>
    %c0_94 = arith.constant 0 : index
    %269 = memref.load %arg0[%c0_94] : memref<3xf32, #tpu.memory_space<smem>>
    %c0_95 = arith.constant 0 : index
    %c0_96 = arith.constant 0 : index
    %270 = vector.load %arg19[%c0_95, %c0_96] : memref<32x32xf32, #tpu.memory_space<vmem>>, vector<32x32xf32>
    %cst_97 = arith.constant dense<0.000000e+00> : vector<1x32xf32>
    %271 = tpu.matmul %205, %270, %cst_97 {dimension_numbers = #tpu.dot_dimension_numbers<[1], [0], [0], [1], [0, 0, 1, 1], [], []>} : vector<1x32xf32>, vector<32x32xf32>, vector<1x32xf32> -> vector<1x32xf32>
    %c0_98 = arith.constant 0 : index
    %c0_99 = arith.constant 0 : index
    %272 = vector.load %arg20[%c0_98, %c0_99] : memref<32x32xf32, #tpu.memory_space<vmem>>, vector<32x32xf32>
    %cst_100 = arith.constant dense<0.000000e+00> : vector<1x32xf32>
    %273 = tpu.matmul %218, %272, %cst_100 {dimension_numbers = #tpu.dot_dimension_numbers<[1], [0], [0], [1], [0, 0, 1, 1], [], []>} : vector<1x32xf32>, vector<32x32xf32>, vector<1x32xf32> -> vector<1x32xf32>
    %274 = arith.addf %271, %273 : vector<1x32xf32>
    %c0_101 = arith.constant 0 : index
    %c0_102 = arith.constant 0 : index
    %275 = vector.load %arg22[%c0_101, %c0_102] : memref<72x32xf32, #tpu.memory_space<vmem>>, vector<72x32xf32>
    %cst_103 = arith.constant dense<0.000000e+00> : vector<1x32xf32>
    %276 = tpu.matmul %268, %275, %cst_103 {dimension_numbers = #tpu.dot_dimension_numbers<[1], [0], [0], [1], [0, 0, 1, 1], [], []>} : vector<1x72xf32>, vector<72x32xf32>, vector<1x32xf32> -> vector<1x32xf32>
    %277 = arith.addf %274, %276 : vector<1x32xf32>
    %c0_104 = arith.constant 0 : index
    %c0_105 = arith.constant 0 : index
    %278 = vector.load %arg21[%c0_104, %c0_105] : memref<1x32xf32, #tpu.memory_space<vmem>>, vector<1x32xf32>
    %279 = vector.broadcast %269 : f32 to vector<1x32xf32>
    %280 = arith.mulf %279, %278 : vector<1x32xf32>
    %281 = arith.addf %277, %280 : vector<1x32xf32>
    %c0_106 = arith.constant 0 : index
    %c0_107 = arith.constant 0 : index
    %282 = vector.load %arg23[%c0_106, %c0_107] : memref<1x32xf32, #tpu.memory_space<vmem>>, vector<1x32xf32>
    %283 = arith.addf %281, %282 : vector<1x32xf32>
    %cst_108 = arith.constant 0.000000e+00 : f32
    %284 = vector.broadcast %cst_108 : f32 to vector<1x32xf32>
    %285 = arith.maximumf %283, %284 : vector<1x32xf32>
    %c0_109 = arith.constant 0 : index
    %c0_110 = arith.constant 0 : index
    %286 = vector.load %arg24[%c0_109, %c0_110] : memref<32x32xf32, #tpu.memory_space<vmem>>, vector<32x32xf32>
    %cst_111 = arith.constant dense<0.000000e+00> : vector<1x32xf32>
    %287 = tpu.matmul %285, %286, %cst_111 {dimension_numbers = #tpu.dot_dimension_numbers<[1], [0], [0], [1], [0, 0, 1, 1], [], []>} : vector<1x32xf32>, vector<32x32xf32>, vector<1x32xf32> -> vector<1x32xf32>
    %c0_112 = arith.constant 0 : index
    %c0_113 = arith.constant 0 : index
    %288 = vector.load %arg25[%c0_112, %c0_113] : memref<1x32xf32, #tpu.memory_space<vmem>>, vector<1x32xf32>
    %289 = arith.addf %287, %288 : vector<1x32xf32>
    %290 = arith.addf %205, %289 : vector<1x32xf32>
    %c0_114 = arith.constant 0 : index
    %c0_115 = arith.constant 0 : index
    %291 = vector.load %arg11[%c0_114, %c0_115] : memref<32x32xf32, #tpu.memory_space<vmem>>, vector<32x32xf32>
    %cst_116 = arith.constant dense<0.000000e+00> : vector<1x32xf32>
    %292 = tpu.matmul %290, %291, %cst_116 {dimension_numbers = #tpu.dot_dimension_numbers<[1], [0], [0], [1], [0, 0, 1, 1], [], []>} : vector<1x32xf32>, vector<32x32xf32>, vector<1x32xf32> -> vector<1x32xf32>
    %c0_117 = arith.constant 0 : index
    %c0_118 = arith.constant 0 : index
    %293 = vector.load %arg12[%c0_117, %c0_118] : memref<1x32xf32, #tpu.memory_space<vmem>>, vector<1x32xf32>
    %294 = arith.addf %292, %293 : vector<1x32xf32>
    %cst_119 = arith.constant 0.000000e+00 : f32
    %295 = vector.broadcast %cst_119 : f32 to vector<1x32xf32>
    %296 = arith.maximumf %294, %295 : vector<1x32xf32>
    %c0_120 = arith.constant 0 : index
    %c0_121 = arith.constant 0 : index
    %297 = vector.load %arg13[%c0_120, %c0_121] : memref<32x72xf32, #tpu.memory_space<vmem>>, vector<32x72xf32>
    %cst_122 = arith.constant dense<0.000000e+00> : vector<1x72xf32>
    %298 = tpu.matmul %296, %297, %cst_122 {dimension_numbers = #tpu.dot_dimension_numbers<[1], [0], [0], [1], [0, 0, 1, 1], [], []>} : vector<1x32xf32>, vector<32x72xf32>, vector<1x72xf32> -> vector<1x72xf32>
    %c0_123 = arith.constant 0 : index
    %c0_124 = arith.constant 0 : index
    %299 = vector.load %arg14[%c0_123, %c0_124] : memref<1x72xf32, #tpu.memory_space<vmem>>, vector<1x72xf32>
    %300 = arith.addf %298, %299 : vector<1x72xf32>
    %cst_125 = arith.constant dense<0xFF800000> : vector<1xf32>
    %301 = vector.multi_reduction <maximumf>, %300, %cst_125 [1] : vector<1x72xf32> to vector<1xf32>
    %302 = vector.shape_cast %301 : vector<1xf32> to vector<1x1xf32>
    %303 = vector.broadcast %302 : vector<1x1xf32> to vector<1x72xf32>
    %304 = arith.cmpf oge, %300, %303 : vector<1x72xf32>
    %cst_126 = arith.constant 7.200000e+01 : f32
    %305 = vector.broadcast %cst_126 : f32 to vector<1x72xf32>
    %306 = arith.select %304, %246, %305 : vector<1x72xi1>, vector<1x72xf32>
    %cst_127 = arith.constant dense<0x7F800000> : vector<1xf32>
    %307 = vector.multi_reduction <minimumf>, %306, %cst_127 [1] : vector<1x72xf32> to vector<1xf32>
    %308 = vector.shape_cast %307 : vector<1xf32> to vector<1x1xf32>
    %309 = vector.broadcast %308 : vector<1x1xf32> to vector<1x72xf32>
    %310 = arith.cmpf oeq, %246, %309 : vector<1x72xf32>
    %311 = arith.extui %310 : vector<1x72xi1> to vector<1x72xi32>
    %312 = arith.sitofp %311 : vector<1x72xi32> to vector<1x72xf32>
    %c1_128 = arith.constant 1 : index
    %313 = memref.load %arg0[%c1_128] : memref<3xf32, #tpu.memory_space<smem>>
    %c0_129 = arith.constant 0 : index
    %c0_130 = arith.constant 0 : index
    %314 = vector.load %arg19[%c0_129, %c0_130] : memref<32x32xf32, #tpu.memory_space<vmem>>, vector<32x32xf32>
    %cst_131 = arith.constant dense<0.000000e+00> : vector<1x32xf32>
    %315 = tpu.matmul %290, %314, %cst_131 {dimension_numbers = #tpu.dot_dimension_numbers<[1], [0], [0], [1], [0, 0, 1, 1], [], []>} : vector<1x32xf32>, vector<32x32xf32>, vector<1x32xf32> -> vector<1x32xf32>
    %c0_132 = arith.constant 0 : index
    %c0_133 = arith.constant 0 : index
    %316 = vector.load %arg20[%c0_132, %c0_133] : memref<32x32xf32, #tpu.memory_space<vmem>>, vector<32x32xf32>
    %cst_134 = arith.constant dense<0.000000e+00> : vector<1x32xf32>
    %317 = tpu.matmul %231, %316, %cst_134 {dimension_numbers = #tpu.dot_dimension_numbers<[1], [0], [0], [1], [0, 0, 1, 1], [], []>} : vector<1x32xf32>, vector<32x32xf32>, vector<1x32xf32> -> vector<1x32xf32>
    %318 = arith.addf %315, %317 : vector<1x32xf32>
    %c0_135 = arith.constant 0 : index
    %c0_136 = arith.constant 0 : index
    %319 = vector.load %arg22[%c0_135, %c0_136] : memref<72x32xf32, #tpu.memory_space<vmem>>, vector<72x32xf32>
    %cst_137 = arith.constant dense<0.000000e+00> : vector<1x32xf32>
    %320 = tpu.matmul %312, %319, %cst_137 {dimension_numbers = #tpu.dot_dimension_numbers<[1], [0], [0], [1], [0, 0, 1, 1], [], []>} : vector<1x72xf32>, vector<72x32xf32>, vector<1x32xf32> -> vector<1x32xf32>
    %321 = arith.addf %318, %320 : vector<1x32xf32>
    %c0_138 = arith.constant 0 : index
    %c0_139 = arith.constant 0 : index
    %322 = vector.load %arg21[%c0_138, %c0_139] : memref<1x32xf32, #tpu.memory_space<vmem>>, vector<1x32xf32>
    %323 = vector.broadcast %313 : f32 to vector<1x32xf32>
    %324 = arith.mulf %323, %322 : vector<1x32xf32>
    %325 = arith.addf %321, %324 : vector<1x32xf32>
    %c0_140 = arith.constant 0 : index
    %c0_141 = arith.constant 0 : index
    %326 = vector.load %arg23[%c0_140, %c0_141] : memref<1x32xf32, #tpu.memory_space<vmem>>, vector<1x32xf32>
    %327 = arith.addf %325, %326 : vector<1x32xf32>
    %cst_142 = arith.constant 0.000000e+00 : f32
    %328 = vector.broadcast %cst_142 : f32 to vector<1x32xf32>
    %329 = arith.maximumf %327, %328 : vector<1x32xf32>
    %c0_143 = arith.constant 0 : index
    %c0_144 = arith.constant 0 : index
    %330 = vector.load %arg24[%c0_143, %c0_144] : memref<32x32xf32, #tpu.memory_space<vmem>>, vector<32x32xf32>
    %cst_145 = arith.constant dense<0.000000e+00> : vector<1x32xf32>
    %331 = tpu.matmul %329, %330, %cst_145 {dimension_numbers = #tpu.dot_dimension_numbers<[1], [0], [0], [1], [0, 0, 1, 1], [], []>} : vector<1x32xf32>, vector<32x32xf32>, vector<1x32xf32> -> vector<1x32xf32>
    %c0_146 = arith.constant 0 : index
    %c0_147 = arith.constant 0 : index
    %332 = vector.load %arg25[%c0_146, %c0_147] : memref<1x32xf32, #tpu.memory_space<vmem>>, vector<1x32xf32>
    %333 = arith.addf %331, %332 : vector<1x32xf32>
    %334 = arith.addf %290, %333 : vector<1x32xf32>
    %c0_148 = arith.constant 0 : index
    %c0_149 = arith.constant 0 : index
    %335 = vector.load %arg11[%c0_148, %c0_149] : memref<32x32xf32, #tpu.memory_space<vmem>>, vector<32x32xf32>
    %cst_150 = arith.constant dense<0.000000e+00> : vector<1x32xf32>
    %336 = tpu.matmul %334, %335, %cst_150 {dimension_numbers = #tpu.dot_dimension_numbers<[1], [0], [0], [1], [0, 0, 1, 1], [], []>} : vector<1x32xf32>, vector<32x32xf32>, vector<1x32xf32> -> vector<1x32xf32>
    %c0_151 = arith.constant 0 : index
    %c0_152 = arith.constant 0 : index
    %337 = vector.load %arg12[%c0_151, %c0_152] : memref<1x32xf32, #tpu.memory_space<vmem>>, vector<1x32xf32>
    %338 = arith.addf %336, %337 : vector<1x32xf32>
    %cst_153 = arith.constant 0.000000e+00 : f32
    %339 = vector.broadcast %cst_153 : f32 to vector<1x32xf32>
    %340 = arith.maximumf %338, %339 : vector<1x32xf32>
    %c0_154 = arith.constant 0 : index
    %c0_155 = arith.constant 0 : index
    %341 = vector.load %arg13[%c0_154, %c0_155] : memref<32x72xf32, #tpu.memory_space<vmem>>, vector<32x72xf32>
    %cst_156 = arith.constant dense<0.000000e+00> : vector<1x72xf32>
    %342 = tpu.matmul %340, %341, %cst_156 {dimension_numbers = #tpu.dot_dimension_numbers<[1], [0], [0], [1], [0, 0, 1, 1], [], []>} : vector<1x32xf32>, vector<32x72xf32>, vector<1x72xf32> -> vector<1x72xf32>
    %c0_157 = arith.constant 0 : index
    %c0_158 = arith.constant 0 : index
    %343 = vector.load %arg14[%c0_157, %c0_158] : memref<1x72xf32, #tpu.memory_space<vmem>>, vector<1x72xf32>
    %344 = arith.addf %342, %343 : vector<1x72xf32>
    %cst_159 = arith.constant dense<0xFF800000> : vector<1xf32>
    %345 = vector.multi_reduction <maximumf>, %344, %cst_159 [1] : vector<1x72xf32> to vector<1xf32>
    %346 = vector.shape_cast %345 : vector<1xf32> to vector<1x1xf32>
    %347 = vector.broadcast %346 : vector<1x1xf32> to vector<1x72xf32>
    %348 = arith.cmpf oge, %344, %347 : vector<1x72xf32>
    %cst_160 = arith.constant 7.200000e+01 : f32
    %349 = vector.broadcast %cst_160 : f32 to vector<1x72xf32>
    %350 = arith.select %348, %246, %349 : vector<1x72xi1>, vector<1x72xf32>
    %cst_161 = arith.constant dense<0x7F800000> : vector<1xf32>
    %351 = vector.multi_reduction <minimumf>, %350, %cst_161 [1] : vector<1x72xf32> to vector<1xf32>
    %352 = vector.shape_cast %351 : vector<1xf32> to vector<1x1xf32>
    %353 = vector.broadcast %352 : vector<1x1xf32> to vector<1x72xf32>
    %354 = arith.cmpf oeq, %246, %353 : vector<1x72xf32>
    %355 = arith.extui %354 : vector<1x72xi1> to vector<1x72xi32>
    %356 = arith.sitofp %355 : vector<1x72xi32> to vector<1x72xf32>
    %c2_162 = arith.constant 2 : index
    %357 = memref.load %arg0[%c2_162] : memref<3xf32, #tpu.memory_space<smem>>
    %c0_163 = arith.constant 0 : index
    %c0_164 = arith.constant 0 : index
    %358 = vector.load %arg19[%c0_163, %c0_164] : memref<32x32xf32, #tpu.memory_space<vmem>>, vector<32x32xf32>
    %cst_165 = arith.constant dense<0.000000e+00> : vector<1x32xf32>
    %359 = tpu.matmul %334, %358, %cst_165 {dimension_numbers = #tpu.dot_dimension_numbers<[1], [0], [0], [1], [0, 0, 1, 1], [], []>} : vector<1x32xf32>, vector<32x32xf32>, vector<1x32xf32> -> vector<1x32xf32>
    %c0_166 = arith.constant 0 : index
    %c0_167 = arith.constant 0 : index
    %360 = vector.load %arg20[%c0_166, %c0_167] : memref<32x32xf32, #tpu.memory_space<vmem>>, vector<32x32xf32>
    %cst_168 = arith.constant dense<0.000000e+00> : vector<1x32xf32>
    %361 = tpu.matmul %244, %360, %cst_168 {dimension_numbers = #tpu.dot_dimension_numbers<[1], [0], [0], [1], [0, 0, 1, 1], [], []>} : vector<1x32xf32>, vector<32x32xf32>, vector<1x32xf32> -> vector<1x32xf32>
    %362 = arith.addf %359, %361 : vector<1x32xf32>
    %c0_169 = arith.constant 0 : index
    %c0_170 = arith.constant 0 : index
    %363 = vector.load %arg22[%c0_169, %c0_170] : memref<72x32xf32, #tpu.memory_space<vmem>>, vector<72x32xf32>
    %cst_171 = arith.constant dense<0.000000e+00> : vector<1x32xf32>
    %364 = tpu.matmul %356, %363, %cst_171 {dimension_numbers = #tpu.dot_dimension_numbers<[1], [0], [0], [1], [0, 0, 1, 1], [], []>} : vector<1x72xf32>, vector<72x32xf32>, vector<1x32xf32> -> vector<1x32xf32>
    %365 = arith.addf %362, %364 : vector<1x32xf32>
    %c0_172 = arith.constant 0 : index
    %c0_173 = arith.constant 0 : index
    %366 = vector.load %arg21[%c0_172, %c0_173] : memref<1x32xf32, #tpu.memory_space<vmem>>, vector<1x32xf32>
    %367 = vector.broadcast %357 : f32 to vector<1x32xf32>
    %368 = arith.mulf %367, %366 : vector<1x32xf32>
    %369 = arith.addf %365, %368 : vector<1x32xf32>
    %c0_174 = arith.constant 0 : index
    %c0_175 = arith.constant 0 : index
    %370 = vector.load %arg23[%c0_174, %c0_175] : memref<1x32xf32, #tpu.memory_space<vmem>>, vector<1x32xf32>
    %371 = arith.addf %369, %370 : vector<1x32xf32>
    %cst_176 = arith.constant 0.000000e+00 : f32
    %372 = vector.broadcast %cst_176 : f32 to vector<1x32xf32>
    %373 = arith.maximumf %371, %372 : vector<1x32xf32>
    %c0_177 = arith.constant 0 : index
    %c0_178 = arith.constant 0 : index
    %374 = vector.load %arg24[%c0_177, %c0_178] : memref<32x32xf32, #tpu.memory_space<vmem>>, vector<32x32xf32>
    %cst_179 = arith.constant dense<0.000000e+00> : vector<1x32xf32>
    %375 = tpu.matmul %373, %374, %cst_179 {dimension_numbers = #tpu.dot_dimension_numbers<[1], [0], [0], [1], [0, 0, 1, 1], [], []>} : vector<1x32xf32>, vector<32x32xf32>, vector<1x32xf32> -> vector<1x32xf32>
    %c0_180 = arith.constant 0 : index
    %c0_181 = arith.constant 0 : index
    %376 = vector.load %arg25[%c0_180, %c0_181] : memref<1x32xf32, #tpu.memory_space<vmem>>, vector<1x32xf32>
    %377 = arith.addf %375, %376 : vector<1x32xf32>
    %378 = arith.addf %334, %377 : vector<1x32xf32>
    %c0_182 = arith.constant 0 : index
    %c0_183 = arith.constant 0 : index
    %379 = vector.load %arg15[%c0_182, %c0_183] : memref<32x32xf32, #tpu.memory_space<vmem>>, vector<32x32xf32>
    %cst_184 = arith.constant dense<0.000000e+00> : vector<1x32xf32>
    %380 = tpu.matmul %378, %379, %cst_184 {dimension_numbers = #tpu.dot_dimension_numbers<[1], [0], [0], [1], [0, 0, 1, 1], [], []>} : vector<1x32xf32>, vector<32x32xf32>, vector<1x32xf32> -> vector<1x32xf32>
    %c0_185 = arith.constant 0 : index
    %c0_186 = arith.constant 0 : index
    %381 = vector.load %arg16[%c0_185, %c0_186] : memref<1x32xf32, #tpu.memory_space<vmem>>, vector<1x32xf32>
    %382 = arith.addf %380, %381 : vector<1x32xf32>
    %cst_187 = arith.constant 0.000000e+00 : f32
    %383 = vector.broadcast %cst_187 : f32 to vector<1x32xf32>
    %384 = arith.maximumf %382, %383 : vector<1x32xf32>
    %c0_188 = arith.constant 0 : index
    %c0_189 = arith.constant 0 : index
    %385 = vector.load %arg17[%c0_188, %c0_189] : memref<32x72xf32, #tpu.memory_space<vmem>>, vector<32x72xf32>
    %cst_190 = arith.constant dense<0.000000e+00> : vector<1x72xf32>
    %386 = tpu.matmul %384, %385, %cst_190 {dimension_numbers = #tpu.dot_dimension_numbers<[1], [0], [0], [1], [0, 0, 1, 1], [], []>} : vector<1x32xf32>, vector<32x72xf32>, vector<1x72xf32> -> vector<1x72xf32>
    %c0_191 = arith.constant 0 : index
    %c0_192 = arith.constant 0 : index
    %387 = vector.load %arg18[%c0_191, %c0_192] : memref<1x72xf32, #tpu.memory_space<vmem>>, vector<1x72xf32>
    %388 = arith.addf %386, %387 : vector<1x72xf32>
    %cst_193 = arith.constant dense<0xFF800000> : vector<1xf32>
    %389 = vector.multi_reduction <maximumf>, %388, %cst_193 [1] : vector<1x72xf32> to vector<1xf32>
    %390 = vector.shape_cast %389 : vector<1xf32> to vector<1x1xf32>
    %391 = vector.broadcast %390 : vector<1x1xf32> to vector<1x72xf32>
    %392 = arith.subf %388, %391 : vector<1x72xf32>
    %393 = math.exp %392 : vector<1x72xf32>
    %cst_194 = arith.constant dense<0.000000e+00> : vector<1xf32>
    %394 = vector.multi_reduction <add>, %393, %cst_194 [1] : vector<1x72xf32> to vector<1xf32>
    %395 = vector.shape_cast %394 : vector<1xf32> to vector<1x1xf32>
    %396 = vector.broadcast %395 : vector<1x1xf32> to vector<1x72xf32>
    %397 = arith.divf %393, %396 : vector<1x72xf32>
    %c0_195 = arith.constant 0 : index
    %c0_196 = arith.constant 0 : index
    %398 = vector.load %arg26[%c0_195, %c0_196] : memref<1x72xf32, #tpu.memory_space<vmem>>, vector<1x72xf32>
    tpu.vector_store %arg26[%c0_195, %c0_196], %397 {strides = array<i32>} : memref<1x72xf32, #tpu.memory_space<vmem>>, vector<1x72xf32>,
    return
  }
}

</mosaic_0001>

<llo_original>
// kernel: _forward_impl.1
$region0: #{_forward_impl.1}
  #allocation0 [shape = 'u32[]', space=smem, size = 0x4, offset = 0x4, fixed_abs, tag = 'smem constant byte address 0x4 - core index']
  #allocation1 [shape = 'u32[144,128]{1,0:T(1,128)}', space=vmem, size = 0x12000, scoped, tag = 'internal scratch']
  %s0 = inlined_call_operand.vmem [shape: f32[3], index: 0, kind: input, shape index: {}]
  %s1 = inlined_call_operand.vmem [shape: f32[8,512], index: 1, kind: input, shape index: {}]
  %s2 = inlined_call_operand.vmem [shape: f32[9,512], index: 2, kind: input, shape index: {}]
  %s3 = inlined_call_operand.vmem [shape: f32[16,72], index: 3, kind: input, shape index: {}]
  %s4 = inlined_call_operand.vmem [shape: f32[16,1], index: 4, kind: input, shape index: {}]
  %s5 = inlined_call_operand.vmem [shape: f32[3,16,144], index: 5, kind: input, shape index: {}]
  %s6 = inlined_call_operand.vmem [shape: f32[3,16,1], index: 6, kind: input, shape index: {}]
  %s7 = inlined_call_operand.vmem [shape: f32[8,16], index: 7, kind: input, shape index: {}]
  %s8 = inlined_call_operand.vmem [shape: f32[8,1], index: 8, kind: input, shape index: {}]
  %s9 = inlined_call_operand.vmem [shape: f32[1024,32], index: 9, kind: input, shape index: {}]
  %s10 = inlined_call_operand.vmem [shape: f32[1,32], index: 10, kind: input, shape index: {}]
  %s11 = inlined_call_operand.vmem [shape: f32[32,32], index: 11, kind: input, shape index: {}]
  %s12 = inlined_call_operand.vmem [shape: f32[1,32], index: 12, kind: input, shape index: {}]
  %s13 = inlined_call_operand.vmem [shape: f32[32,72], index: 13, kind: input, shape index: {}]
  %s14 = inlined_call_operand.vmem [shape: f32[1,72], index: 14, kind: input, shape index: {}]
  %s15 = inlined_call_operand.vmem [shape: f32[32,32], index: 15, kind: input, shape index: {}]
  %s16 = inlined_call_operand.vmem [shape: f32[1,32], index: 16, kind: input, shape index: {}]
  %s17 = inlined_call_operand.vmem [shape: f32[32,72], index: 17, kind: input, shape index: {}]
  %s18 = inlined_call_operand.vmem [shape: f32[1,72], index: 18, kind: input, shape index: {}]
  %s19 = inlined_call_operand.vmem [shape: f32[32,32], index: 19, kind: input, shape index: {}]
  %s20 = inlined_call_operand.vmem [shape: f32[32,32], index: 20, kind: input, shape index: {}]
  %s21 = inlined_call_operand.vmem [shape: f32[1,32], index: 21, kind: input, shape index: {}]
  %s22 = inlined_call_operand.vmem [shape: f32[72,32], index: 22, kind: input, shape index: {}]
  %s23 = inlined_call_operand.vmem [shape: f32[1,32], index: 23, kind: input, shape index: {}]
  %s24 = inlined_call_operand.vmem [shape: f32[32,32], index: 24, kind: input, shape index: {}]
  %s25 = inlined_call_operand.vmem [shape: f32[1,32], index: 25, kind: input, shape index: {}]
  %s26 = inlined_call_operand.hbm [shape: f32[1,72], index: 26, kind: output, shape index: {}]
  %s27 = sld [smem:[#allocation0]]
  $region118: #{_forward_impl.1} parent=0
    _
  %s29 = ssub.s32 1, %s27
  %s30 = scalar_select 0, %s29, %s27
  $region1: #{_forward_impl.1} parent=0
    #allocation2 [shape = 'u8[512]{0}', space=smem, size = 0x200, scoped, tag = 'input window, operand 0, single buffered']
    #allocation3 [shape = 's32[1]{0}', space=sflag, size = 0x4, scoped, tag = 'scoped memory for _forward_impl.1']
    #allocation4 [shape = 's32[1]{0}', space=sflag, size = 0x4, scoped, tag = 'scoped memory for _forward_impl.1']
    #allocation5 [shape = 'u8[512]{0}', space=vmem, size = 0x400, scoped, tag = 'output window, operand 0, single buffered']
    %31 = vsyncpa [#allocation4], 0
    %32 = vsyncpa [#allocation3], 0
    // Predicated region
    $region2: #{_forward_impl.1} parent=1 // pred_check
      _
    $region3: #{_forward_impl.1} parent=1 // pred_check_branch
      %34 = sbr.rel (0) target = $region5
    $region4: #{_forward_impl.1} parent=1 // pred_region
      %s36 = ssub.s32 16, 16
      %37 = vsyncadd [#allocation4], %s36
      %s39 = sshll.u32 %s0, 4
      %s40 = int_to_ptr.vmem [resolvable:$true] %s39
      %42 = dma.vmem_to_smem %s40, 16, [#allocation2], [#allocation4]
    $region5: #{_forward_impl.1} parent=1 // pred_fallthru
      _
    // Predicated region
    $region6: #{_forward_impl.1} parent=1 // pred_check
      _
    $region7: #{_forward_impl.1} parent=1 // pred_check_branch
      %44 = sbr.rel (0) target = $region9
    $region8: #{_forward_impl.1} parent=1 // pred_region
      _
    $region9: #{_forward_impl.1} parent=1 // pred_fallthru
      _
    // Predicated region
    $region10: #{_forward_impl.1} parent=1 // pred_check
      _
    $region11: #{_forward_impl.1} parent=1 // pred_check_branch
      %46 = sbr.rel (0) target = $region13
    $region12: #{_forward_impl.1} parent=1 // pred_region
      _
    $region13: #{_forward_impl.1} parent=1 // pred_fallthru
      _
    // Predicated region
    $region14: #{_forward_impl.1} parent=1 // pred_check
      _
    $region15: #{_forward_impl.1} parent=1 // pred_check_branch
      %48 = sbr.rel (0) target = $region17
    $region16: #{_forward_impl.1} parent=1 // pred_region
      _
    $region17: #{_forward_impl.1} parent=1 // pred_fallthru
      _
    // Predicated region
    $region18: #{_forward_impl.1} parent=1 // pred_check
      _
    $region19: #{_forward_impl.1} parent=1 // pred_check_branch
      %50 = sbr.rel (0) target = $region21
    $region20: #{_forward_impl.1} parent=1 // pred_region
      _
    $region21: #{_forward_impl.1} parent=1 // pred_fallthru
      _
    // Predicated region
    $region22: #{_forward_impl.1} parent=1 // pred_check
      _
    $region23: #{_forward_impl.1} parent=1 // pred_check_branch
      %52 = sbr.rel (0) target = $region25
    $region24: #{_forward_impl.1} parent=1 // pred_region
      _
    $region25: #{_forward_impl.1} parent=1 // pred_fallthru
      _
    // Predicated region
    $region26: #{_forward_impl.1} parent=1 // pred_check
      _
    $region27: #{_forward_impl.1} parent=1 // pred_check_branch
      %54 = sbr.rel (0) target = $region29
    $region28: #{_forward_impl.1} parent=1 // pred_region
      _
    $region29: #{_forward_impl.1} parent=1 // pred_fallthru
      _
    // Predicated region
    $region30: #{_forward_impl.1} parent=1 // pred_check
      _
    $region31: #{_forward_impl.1} parent=1 // pred_check_branch
      %56 = sbr.rel (0) target = $region33
    $region32: #{_forward_impl.1} parent=1 // pred_region
      _
    $region33: #{_forward_impl.1} parent=1 // pred_fallthru
      _
    // Predicated region
    $region34: #{_forward_impl.1} parent=1 // pred_check
      _
    $region35: #{_forward_impl.1} parent=1 // pred_check_branch
      %58 = sbr.rel (0) target = $region37
    $region36: #{_forward_impl.1} parent=1 // pred_region
      _
    $region37: #{_forward_impl.1} parent=1 // pred_fallthru
      _
    // Predicated region
    $region38: #{_forward_impl.1} parent=1 // pred_check
      _
    $region39: #{_forward_impl.1} parent=1 // pred_check_branch
      %60 = sbr.rel (0) target = $region41
    $region40: #{_forward_impl.1} parent=1 // pred_region
      _
    $region41: #{_forward_impl.1} parent=1 // pred_fallthru
      _
    // Predicated region
    $region42: #{_forward_impl.1} parent=1 // pred_check
      _
    $region43: #{_forward_impl.1} parent=1 // pred_check_branch
      %62 = sbr.rel (0) target = $region45
    $region44: #{_forward_impl.1} parent=1 // pred_region
      _
    $region45: #{_forward_impl.1} parent=1 // pred_fallthru
      _
    // Predicated region
    $region46: #{_forward_impl.1} parent=1 // pred_check
      _
    $region47: #{_forward_impl.1} parent=1 // pred_check_branch
      %64 = sbr.rel (0) target = $region49
    $region48: #{_forward_impl.1} parent=1 // pred_region
      _
    $region49: #{_forward_impl.1} parent=1 // pred_fallthru
      _
    // Predicated region
    $region50: #{_forward_impl.1} parent=1 // pred_check
      _
    $region51: #{_forward_impl.1} parent=1 // pred_check_branch
      %66 = sbr.rel (0) target = $region53
    $region52: #{_forward_impl.1} parent=1 // pred_region
      _
    $region53: #{_forward_impl.1} parent=1 // pred_fallthru
      _
    // Predicated region
    $region54: #{_forward_impl.1} parent=1 // pred_check
      _
    $region55: #{_forward_impl.1} parent=1 // pred_check_branch
      %68 = sbr.rel (0) target = $region57
    $region56: #{_forward_impl.1} parent=1 // pred_region
      _
    $region57: #{_forward_impl.1} parent=1 // pred_fallthru
      _
    // Predicated region
    $region58: #{_forward_impl.1} parent=1 // pred_check
      _
    $region59: #{_forward_impl.1} parent=1 // pred_check_branch
      %70 = sbr.rel (0) target = $region61
    $region60: #{_forward_impl.1} parent=1 // pred_region
      _
    $region61: #{_forward_impl.1} parent=1 // pred_fallthru
      _
    // Predicated region
    $region62: #{_forward_impl.1} parent=1 // pred_check
      _
    $region63: #{_forward_impl.1} parent=1 // pred_check_branch
      %72 = sbr.rel (0) target = $region65
    $region64: #{_forward_impl.1} parent=1 // pred_region
      _
    $region65: #{_forward_impl.1} parent=1 // pred_fallthru
      _
    // Predicated region
    $region66: #{_forward_impl.1} parent=1 // pred_check
      _
    $region67: #{_forward_impl.1} parent=1 // pred_check_branch
      %74 = sbr.rel (0) target = $region69
    $region68: #{_forward_impl.1} parent=1 // pred_region
      _
    $region69: #{_forward_impl.1} parent=1 // pred_fallthru
      _
    // Predicated region
    $region70: #{_forward_impl.1} parent=1 // pred_check
      _
    $region71: #{_forward_impl.1} parent=1 // pred_check_branch
      %76 = sbr.rel (0) target = $region73
    $region72: #{_forward_impl.1} parent=1 // pred_region
      _
    $region73: #{_forward_impl.1} parent=1 // pred_fallthru
      _
    // Predicated region
    $region74: #{_forward_impl.1} parent=1 // pred_check
      _
    $region75: #{_forward_impl.1} parent=1 // pred_check_branch
      %78 = sbr.rel (0) target = $region77
    $region76: #{_forward_impl.1} parent=1 // pred_region
      _
    $region77: #{_forward_impl.1} parent=1 // pred_fallthru
      _
    // Predicated region
    $region78: #{_forward_impl.1} parent=1 // pred_check
      _
    $region79: #{_forward_impl.1} parent=1 // pred_check_branch
      %80 = sbr.rel (0) target = $region81
    $region80: #{_forward_impl.1} parent=1 // pred_region
      _
    $region81: #{_forward_impl.1} parent=1 // pred_fallthru
      _
    // Predicated region
    $region82: #{_forward_impl.1} parent=1 // pred_check
      _
    $region83: #{_forward_impl.1} parent=1 // pred_check_branch
      %82 = sbr.rel (0) target = $region85
    $region84: #{_forward_impl.1} parent=1 // pred_region
      _
    $region85: #{_forward_impl.1} parent=1 // pred_fallthru
      _
    // Predicated region
    $region86: #{_forward_impl.1} parent=1 // pred_check
      _
    $region87: #{_forward_impl.1} parent=1 // pred_check_branch
      %84 = sbr.rel (0) target = $region89
    $region88: #{_forward_impl.1} parent=1 // pred_region
      _
    $region89: #{_forward_impl.1} parent=1 // pred_fallthru
      _
    // Predicated region
    $region90: #{_forward_impl.1} parent=1 // pred_check
      _
    $region91: #{_forward_impl.1} parent=1 // pred_check_branch
      %86 = sbr.rel (0) target = $region93
    $region92: #{_forward_impl.1} parent=1 // pred_region
      _
    $region93: #{_forward_impl.1} parent=1 // pred_fallthru
      _
    // Predicated region
    $region94: #{_forward_impl.1} parent=1 // pred_check
      _
    $region95: #{_forward_impl.1} parent=1 // pred_check_branch
      %88 = sbr.rel (0) target = $region97
    $region96: #{_forward_impl.1} parent=1 // pred_region
      _
    $region97: #{_forward_impl.1} parent=1 // pred_fallthru
      _
    // Predicated region
    $region98: #{_forward_impl.1} parent=1 // pred_check
      _
    $region99: #{_forward_impl.1} parent=1 // pred_check_branch
      %90 = sbr.rel (0) target = $region101
    $region100: #{_forward_impl.1} parent=1 // pred_region
      _
    $region101: #{_forward_impl.1} parent=1 // pred_fallthru
      _
    // Predicated region
    $region102: #{_forward_impl.1} parent=1 // pred_check
      _
    $region103: #{_forward_impl.1} parent=1 // pred_check_branch
      %92 = sbr.rel (0) target = $region105
    $region104: #{_forward_impl.1} parent=1 // pred_region
      _
    $region105: #{_forward_impl.1} parent=1 // pred_fallthru
      _
    // Predicated region
    $region106: #{_forward_impl.1} parent=1 // pred_check
      _
    $region107: #{_forward_impl.1} parent=1 // pred_check_branch
      %94 = sbr.rel (0) target = $region109
    $region108: #{_forward_impl.1} parent=1 // pred_region
      %95 = dma.done [#allocation4], 16
    $region109: #{_forward_impl.1} parent=1 // pred_fallthru
      _
    %96 = sfence
    %v97 = vld [vmem:[%s1] sm:$0xff]
    %v98 = vld [vmem:[%s1 + $0x8] sm:$0xff]
    %v99 = vld [vmem:[%s1 + $0x10] sm:$0xff]
    %v100 = vld [vmem:[%s1 + $0x18] sm:$0xff]
    %v101 = vld [vmem:[%s2] sm:$0xff]
    %v102 = vld [vmem:[%s2 + $0x8] sm:$0xff]
    %v103 = vld [vmem:[%s2 + $0x10] sm:$0xff]
    %v104 = vld [vmem:[%s2 + $0x18] sm:$0xff]
    %v105 = vld [vmem:[%s2 + $0x20] sm:$0x1]
    %v106 = vld [vmem:[%s2 + $0x28] sm:$0x1]
    %v107 = vld [vmem:[%s2 + $0x30] sm:$0x1]
    %v108 = vld [vmem:[%s2 + $0x38] sm:$0x1]
    %v109 = vld [vmem:[%s3] sm:$0xff]
    %v110 = vld [vmem:[%s3 + $0x8] sm:$0xff]
    %v111 = vld [vmem:[%s4] sm:$0xff]
    %v112 = vld [vmem:[%s4 + $0x8] sm:$0xff]
    %113 = vrot.lane.b32.xlu0 %v97, 11
    %v114 = vpop.permute.xlu0 %113
    %115 = vrot.lane.b32.xlu0 %v98, 11
    %v116 = vpop.permute.xlu0 %115
    %117 = vrot.lane.b32.xlu0 %v99, 11
    %v118 = vpop.permute.xlu0 %117
    %119 = vrot.lane.b32.xlu0 %v100, 11
    %v120 = vpop.permute.xlu0 %119
    %v121 = vlaneseq
    %v122 = vand.u32 %v121, 127
    %vm123 = vcmp.lt.s32.totalorder %v122, 11
    %v124 = vsel %vm123, %v118, %v120
    %v125 = vsel %vm123, %v116, %v118
    %v126 = vsel %vm123, %v114, %v116
    %v127 = vsel %vm123, %v120, %v114
    %v128 = vlaneseq
    %v129 = vshrl.u32 %v128, 7
    %v130 = vsub.s32 0, %v129
    %v131 = vrot.slane %v101, %v130
    %v132 = vlaneseq
    %v133 = vshrl.u32 %v132, 7
    %v134 = vsub.s32 0, %v133
    %v135 = vrot.slane %v102, %v134
    %v136 = vlaneseq
    %v137 = vshrl.u32 %v136, 7
    %v138 = vsub.s32 0, %v137
    %v139 = vrot.slane %v103, %v138
    %v140 = vlaneseq
    %v141 = vshrl.u32 %v140, 7
    %v142 = vsub.s32 0, %v141
    %v143 = vrot.slane %v104, %v142
    %v144 = vmul.f32 %v127, %v131
    %v145 = vmul.f32 %v126, %v135
    %v146 = vmul.f32 %v125, %v139
    %v147 = vmul.f32 %v124, %v143
    %148 = vrot.lane.b32.xlu0 %v97, 10
    %v149 = vpop.permute.xlu0 %148
    %150 = vrot.lane.b32.xlu0 %v98, 10
    %v151 = vpop.permute.xlu0 %150
    %152 = vrot.lane.b32.xlu0 %v99, 10
    %v153 = vpop.permute.xlu0 %152
    %154 = vrot.lane.b32.xlu0 %v100, 10
    %v155 = vpop.permute.xlu0 %154
    %vm156 = vcmp.lt.s32.totalorder %v122, 10
    %v157 = vsel %vm156, %v153, %v155
    %v158 = vsel %vm156, %v151, %v153
    %v159 = vsel %vm156, %v149, %v151
    %v160 = vsel %vm156, %v155, %v149
    %v161 = vlaneseq
    %v162 = vshrl.u32 %v161, 7
    %v163 = vsub.s32 1, %v162
    %v164 = vrot.slane %v101, %v163
    %v165 = vlaneseq
    %v166 = vshrl.u32 %v165, 7
    %v167 = vsub.s32 1, %v166
    %v168 = vrot.slane %v102, %v167
    %v169 = vlaneseq
    %v170 = vshrl.u32 %v169, 7
    %v171 = vsub.s32 1, %v170
    %v172 = vrot.slane %v103, %v171
    %v173 = vlaneseq
    %v174 = vshrl.u32 %v173, 7
    %v175 = vsub.s32 1, %v174
    %v176 = vrot.slane %v104, %v175
    %v177 = vmul.f32 %v160, %v164
    %v178 = vmul.f32 %v159, %v168
    %v179 = vmul.f32 %v158, %v172
    %v180 = vmul.f32 %v157, %v176
    %181 = vrot.lane.b32.xlu0 %v97, 9
    %v182 = vpop.permute.xlu0 %181
    %183 = vrot.lane.b32.xlu0 %v98, 9
    %v184 = vpop.permute.xlu0 %183
    %185 = vrot.lane.b32.xlu0 %v99, 9
    %v186 = vpop.permute.xlu0 %185
    %187 = vrot.lane.b32.xlu0 %v100, 9
    %v188 = vpop.permute.xlu0 %187
    %vm189 = vcmp.lt.s32.totalorder %v122, 9
    %v190 = vsel %vm189, %v186, %v188
    %v191 = vsel %vm189, %v184, %v186
    %v192 = vsel %vm189, %v182, %v184
    %v193 = vsel %vm189, %v188, %v182
    %v194 = vlaneseq
    %v195 = vshrl.u32 %v194, 7
    %v196 = vsub.s32 2, %v195
    %v197 = vrot.slane %v101, %v196
    %v198 = vlaneseq
    %v199 = vshrl.u32 %v198, 7
    %v200 = vsub.s32 2, %v199
    %v201 = vrot.slane %v102, %v200
    %v202 = vlaneseq
    %v203 = vshrl.u32 %v202, 7
    %v204 = vsub.s32 2, %v203
    %v205 = vrot.slane %v103, %v204
    %v206 = vlaneseq
    %v207 = vshrl.u32 %v206, 7
    %v208 = vsub.s32 2, %v207
    %v209 = vrot.slane %v104, %v208
    %v210 = vmul.f32 %v193, %v197
    %v211 = vmul.f32 %v192, %v201
    %v212 = vmul.f32 %v191, %v205
    %v213 = vmul.f32 %v190, %v209
    %214 = vrot.lane.b32.xlu0 %v97, 1
    %v215 = vpop.permute.xlu0 %214
    %216 = vrot.lane.b32.xlu0 %v98, 1
    %v217 = vpop.permute.xlu0 %216
    %218 = vrot.lane.b32.xlu0 %v99, 1
    %v219 = vpop.permute.xlu0 %218
    %220 = vrot.lane.b32.xlu0 %v100, 1
    %v221 = vpop.permute.xlu0 %220
    %vm222 = vcmp.lt.s32.totalorder %v122, 1
    %v223 = vsel %vm222, %v219, %v221
    %v224 = vsel %vm222, %v217, %v219
    %v225 = vsel %vm222, %v215, %v217
    %v226 = vsel %vm222, %v221, %v215
    %v227 = vlaneseq
    %v228 = vshrl.u32 %v227, 7
    %v229 = vsub.s32 3, %v228
    %v230 = vrot.slane %v101, %v229
    %v231 = vlaneseq
    %v232 = vshrl.u32 %v231, 7
    %v233 = vsub.s32 3, %v232
    %v234 = vrot.slane %v102, %v233
    %v235 = vlaneseq
    %v236 = vshrl.u32 %v235, 7
    %v237 = vsub.s32 3, %v236
    %v238 = vrot.slane %v103, %v237
    %v239 = vlaneseq
    %v240 = vshrl.u32 %v239, 7
    %v241 = vsub.s32 3, %v240
    %v242 = vrot.slane %v104, %v241
    %v243 = vmul.f32 %v226, %v230
    %v244 = vmul.f32 %v225, %v234
    %v245 = vmul.f32 %v224, %v238
    %v246 = vmul.f32 %v223, %v242
    %v247 = vlaneseq
    %v248 = vshrl.u32 %v247, 7
    %v249 = vsub.s32 4, %v248
    %v250 = vrot.slane %v101, %v249
    %v251 = vlaneseq
    %v252 = vshrl.u32 %v251, 7
    %v253 = vsub.s32 4, %v252
    %v254 = vrot.slane %v102, %v253
    %v255 = vlaneseq
    %v256 = vshrl.u32 %v255, 7
    %v257 = vsub.s32 4, %v256
    %v258 = vrot.slane %v103, %v257
    %v259 = vlaneseq
    %v260 = vshrl.u32 %v259, 7
    %v261 = vsub.s32 4, %v260
    %v262 = vrot.slane %v104, %v261
    %v263 = vmul.f32 %v97, %v250
    %v264 = vmul.f32 %v98, %v254
    %v265 = vmul.f32 %v99, %v258
    %v266 = vmul.f32 %v100, %v262
    %267 = vrot.lane.b32.xlu0 %v97, 127
    %v268 = vpop.permute.xlu0 %267
    %269 = vrot.lane.b32.xlu0 %v98, 127
    %v270 = vpop.permute.xlu0 %269
    %271 = vrot.lane.b32.xlu0 %v99, 127
    %v272 = vpop.permute.xlu0 %271
    %273 = vrot.lane.b32.xlu0 %v100, 127
    %v274 = vpop.permute.xlu0 %273
    %vm275 = vcmp.lt.s32.totalorder %v122, 127
    %v276 = vsel %vm275, %v272, %v274
    %v277 = vsel %vm275, %v270, %v272
    %v278 = vsel %vm275, %v268, %v270
    %v279 = vsel %vm275, %v274, %v268
    %v280 = vlaneseq
    %v281 = vshrl.u32 %v280, 7
    %v282 = vsub.s32 5, %v281
    %v283 = vrot.slane %v101, %v282
    %v284 = vlaneseq
    %v285 = vshrl.u32 %v284, 7
    %v286 = vsub.s32 5, %v285
    %v287 = vrot.slane %v102, %v286
    %v288 = vlaneseq
    %v289 = vshrl.u32 %v288, 7
    %v290 = vsub.s32 5, %v289
    %v291 = vrot.slane %v103, %v290
    %v292 = vlaneseq
    %v293 = vshrl.u32 %v292, 7
    %v294 = vsub.s32 5, %v293
    %v295 = vrot.slane %v104, %v294
    %v296 = vmul.f32 %v278, %v283
    %v297 = vmul.f32 %v277, %v287
    %v298 = vmul.f32 %v276, %v291
    %v299 = vmul.f32 %v279, %v295
    %300 = vrot.lane.b32.xlu0 %v97, 119
    %v301 = vpop.permute.xlu0 %300
    %302 = vrot.lane.b32.xlu0 %v98, 119
    %v303 = vpop.permute.xlu0 %302
    %304 = vrot.lane.b32.xlu0 %v99, 119
    %v305 = vpop.permute.xlu0 %304
    %306 = vrot.lane.b32.xlu0 %v100, 119
    %v307 = vpop.permute.xlu0 %306
    %vm308 = vcmp.lt.s32.totalorder %v122, 119
    %v309 = vsel %vm308, %v305, %v307
    %v310 = vsel %vm308, %v303, %v305
    %v311 = vsel %vm308, %v301, %v303
    %v312 = vsel %vm308, %v307, %v301
    %v313 = vlaneseq
    %v314 = vshrl.u32 %v313, 7
    %v315 = vsub.s32 6, %v314
    %v316 = vrot.slane %v101, %v315
    %v317 = vlaneseq
    %v318 = vshrl.u32 %v317, 7
    %v319 = vsub.s32 6, %v318
    %v320 = vrot.slane %v102, %v319
    %v321 = vlaneseq
    %v322 = vshrl.u32 %v321, 7
    %v323 = vsub.s32 6, %v322
    %v324 = vrot.slane %v103, %v323
    %v325 = vlaneseq
    %v326 = vshrl.u32 %v325, 7
    %v327 = vsub.s32 6, %v326
    %v328 = vrot.slane %v104, %v327
    %v329 = vmul.f32 %v311, %v316
    %v330 = vmul.f32 %v310, %v320
    %v331 = vmul.f32 %v309, %v324
    %v332 = vmul.f32 %v312, %v328
    %333 = vrot.lane.b32.xlu0 %v97, 118
    %v334 = vpop.permute.xlu0 %333
    %335 = vrot.lane.b32.xlu0 %v98, 118
    %v336 = vpop.permute.xlu0 %335
    %337 = vrot.lane.b32.xlu0 %v99, 118
    %v338 = vpop.permute.xlu0 %337
    %339 = vrot.lane.b32.xlu0 %v100, 118
    %v340 = vpop.permute.xlu0 %339
    %vm341 = vcmp.lt.s32.totalorder %v122, 118
    %v342 = vsel %vm341, %v338, %v340
    %v343 = vsel %vm341, %v336, %v338
    %v344 = vsel %vm341, %v334, %v336
    %v345 = vsel %vm341, %v340, %v334
    %v346 = vlaneseq
    %v347 = vshrl.u32 %v346, 7
    %v348 = vsub.s32 7, %v347
    %v349 = vrot.slane %v101, %v348
    %v350 = vlaneseq
    %v351 = vshrl.u32 %v350, 7
    %v352 = vsub.s32 7, %v351
    %v353 = vrot.slane %v102, %v352
    %v354 = vlaneseq
    %v355 = vshrl.u32 %v354, 7
    %v356 = vsub.s32 7, %v355
    %v357 = vrot.slane %v103, %v356
    %v358 = vlaneseq
    %v359 = vshrl.u32 %v358, 7
    %v360 = vsub.s32 7, %v359
    %v361 = vrot.slane %v104, %v360
    %v362 = vmul.f32 %v344, %v349
    %v363 = vmul.f32 %v343, %v353
    %v364 = vmul.f32 %v342, %v357
    %v365 = vmul.f32 %v345, %v361
    %366 = vrot.lane.b32.xlu0 %v97, 117
    %v367 = vpop.permute.xlu0 %366
    %368 = vrot.lane.b32.xlu0 %v98, 117
    %v369 = vpop.permute.xlu0 %368
    %370 = vrot.lane.b32.xlu0 %v99, 117
    %v371 = vpop.permute.xlu0 %370
    %372 = vrot.lane.b32.xlu0 %v100, 117
    %v373 = vpop.permute.xlu0 %372
    %vm374 = vcmp.lt.s32.totalorder %v122, 117
    %v375 = vsel %vm374, %v371, %v373
    %v376 = vsel %vm374, %v369, %v371
    %v377 = vsel %vm374, %v367, %v369
    %v378 = vsel %vm374, %v373, %v367
    %v379 = vlaneseq
    %v380 = vshrl.u32 %v379, 7
    %v381 = vsub.s32 0, %v380
    %v382 = vrot.slane %v105, %v381
    %v383 = vlaneseq
    %v384 = vshrl.u32 %v383, 7
    %v385 = vsub.s32 0, %v384
    %v386 = vrot.slane %v106, %v385
    %v387 = vlaneseq
    %v388 = vshrl.u32 %v387, 7
    %v389 = vsub.s32 0, %v388
    %v390 = vrot.slane %v107, %v389
    %v391 = vlaneseq
    %v392 = vshrl.u32 %v391, 7
    %v393 = vsub.s32 0, %v392
    %v394 = vrot.slane %v108, %v393
    %v395 = vmul.f32 %v377, %v382
    %v396 = vmul.f32 %v376, %v386
    %v397 = vmul.f32 %v375, %v390
    %v398 = vmul.f32 %v378, %v394
    %400 = vset.pattern.permute.xlu0 0
    %401 = vperm.xlu0 %400, %v111
    %v402 = vpop.permute.xlu0 %401
    %405 = vset.pattern.permute.xlu0 0
    %406 = vperm.xlu0 %405, %v112
    %v407 = vpop.permute.xlu0 %406
    %vm409 = vcmask 588800
    %v411 = vsel %vm409, %v109, 0
    %v414 = vsel %vm409, %v110, 0
    %416 = vmatprep.subr.mxu0 %v145
    %417 = vmatpush1.msra.mxu0 %v144
    %418 = vmatprep.subr.mxu0 %v178
    %419 = vmatpush1.msra.mxu0 %v177
    %420 = vmatprep.subr.mxu0 %v211
    %421 = vmatpush1.msra.mxu0 %v210
    %422 = vmatprep.subr.mxu0 %v244
    %423 = vmatpush1.msra.mxu0 %v243
    %424 = vmatprep.subr.mxu0 %v264
    %425 = vmatpush1.msra.mxu0 %v263
    %426 = vmatprep.subr.mxu0 %v297
    %427 = vmatpush1.msra.mxu0 %v296
    %428 = vmatprep.subr.mxu0 %v330
    %429 = vmatpush1.msra.mxu0 %v329
    %430 = vmatprep.subr.mxu0 %v363
    %431 = vmatpush1.msra.mxu0 %v362
    %432 = vmatprep.subr.mxu0 %v396
    %433 = vmatpush1.msra.mxu0 %v395
    %434 = vmatprep.subr.mxu0 0.0
    %435 = vmatpush1.msra.mxu0 0.0
    %436 = vmatprep.subr.mxu0 0.0
    %437 = vmatpush1.msra.mxu0 0.0
    %438 = vmatprep.subr.mxu0 0.0
    %439 = vmatpush1.msra.mxu0 0.0
    %440 = vmatprep.subr.mxu0 0.0
    %441 = vmatpush1.msra.mxu0 0.0
    %442 = vmatprep.subr.mxu0 0.0
    %443 = vmatpush1.msra.mxu0 0.0
    %444 = vmatprep.subr.mxu0 0.0
    %445 = vmatpush1.msra.mxu0 0.0
    %446 = vmatprep.subr.mxu0 0.0
    %447 = vmatpush1.msra.mxu0 0.0
    %448 = vmatprep.subr.mxu0 0.0
    %449 = vmatpush1.msra.mxu0 0.0
    %450 = vmatprep.subr.mxu0 0.0
    %451 = vmatpush1.msra.mxu0 0.0
    %452 = vmatprep.subr.mxu0 0.0
    %453 = vmatpush1.msra.mxu0 0.0
    %454 = vmatprep.subr.mxu0 0.0
    %455 = vmatpush1.msra.mxu0 0.0
    %456 = vmatprep.subr.mxu0 0.0
    %457 = vmatpush1.msra.mxu0 0.0
    %458 = vmatprep.subr.mxu0 0.0
    %459 = vmatpush1.msra.mxu0 0.0
    %460 = vmatprep.subr.mxu0 0.0
    %461 = vmatpush1.msra.mxu0 0.0
    %462 = vmatprep.subr.mxu0 0.0
    %463 = vmatpush1.msra.mxu0 0.0
    %464 = vmatprep.subr.mxu0 0.0
    %465 = vmatpush1.msra.mxu0 0.0
    %466 = vmatprep.subr.mxu0 0.0
    %467 = vmatpush1.msra.mxu0 0.0
    %468 = vmatprep.subr.mxu0 0.0
    %469 = vmatpush1.msra.mxu0 0.0
    %470 = vmatprep.subr.mxu0 0.0
    %471 = vmatpush1.msra.mxu0 0.0
    %472 = vmatprep.subr.mxu0 0.0
    %473 = vmatpush1.msra.mxu0 0.0
    %474 = vmatprep.subr.mxu0 0.0
    %475 = vmatpush1.msra.mxu0 0.0
    %476 = vmatprep.subr.mxu0 0.0
    %477 = vmatpush1.msra.mxu0 0.0
    %478 = vmatprep.subr.mxu0 0.0
    %479 = vmatpush1.msra.mxu0 0.0
    %480 = vmatprep.mubr.f32.mxu0 0.0
    %481 = vmatmul.mubr.f32.gmra.mrb[0].mxu0 %v411
    %v482 = vpop.f32.mrb[0].mxu0
    %v483 = vadd.f32 %v402, %v482
    %v484 = vpop.f32.mrb[0].mxu0
    %v485 = vadd.f32 %v402, %v484
    %486 = vmatprep.mubr.f32.mxu0 0.0
    %487 = vmatmul.mubr.f32.gmra.mrb[0].mxu0 %v414
    %v488 = vpop.f32.mrb[0].mxu0
    %v489 = vadd.f32 %v407, %v488
    %v490 = vpop.f32.mrb[0].mxu0
    %v491 = vadd.f32 %v407, %v490
    %492 = vdwg.mxu0
    %493 = vmatprep.subr.mxu0 %v147
    %494 = vmatpush1.msra.mxu0 %v146
    %495 = vmatprep.subr.mxu0 %v180
    %496 = vmatpush1.msra.mxu0 %v179
    %497 = vmatprep.subr.mxu0 %v213
    %498 = vmatpush1.msra.mxu0 %v212
    %499 = vmatprep.subr.mxu0 %v246
    %500 = vmatpush1.msra.mxu0 %v245
    %501 = vmatprep.subr.mxu0 %v266
    %502 = vmatpush1.msra.mxu0 %v265
    %503 = vmatprep.subr.mxu0 %v299
    %504 = vmatpush1.msra.mxu0 %v298
    %505 = vmatprep.subr.mxu0 %v332
    %506 = vmatpush1.msra.mxu0 %v331
    %507 = vmatprep.subr.mxu0 %v365
    %508 = vmatpush1.msra.mxu0 %v364
    %509 = vmatprep.subr.mxu0 %v398
    %510 = vmatpush1.msra.mxu0 %v397
    %511 = vmatprep.subr.mxu0 0.0
    %512 = vmatpush1.msra.mxu0 0.0
    %513 = vmatprep.subr.mxu0 0.0
    %514 = vmatpush1.msra.mxu0 0.0
    %515 = vmatprep.subr.mxu0 0.0
    %516 = vmatpush1.msra.mxu0 0.0
    %517 = vmatprep.subr.mxu0 0.0
    %518 = vmatpush1.msra.mxu0 0.0
    %519 = vmatprep.subr.mxu0 0.0
    %520 = vmatpush1.msra.mxu0 0.0
    %521 = vmatprep.subr.mxu0 0.0
    %522 = vmatpush1.msra.mxu0 0.0
    %523 = vmatprep.subr.mxu0 0.0
    %524 = vmatpush1.msra.mxu0 0.0
    %525 = vmatprep.subr.mxu0 0.0
    %526 = vmatpush1.msra.mxu0 0.0
    %527 = vmatprep.subr.mxu0 0.0
    %528 = vmatpush1.msra.mxu0 0.0
    %529 = vmatprep.subr.mxu0 0.0
    %530 = vmatpush1.msra.mxu0 0.0
    %531 = vmatprep.subr.mxu0 0.0
    %532 = vmatpush1.msra.mxu0 0.0
    %533 = vmatprep.subr.mxu0 0.0
    %534 = vmatpush1.msra.mxu0 0.0
    %535 = vmatprep.subr.mxu0 0.0
    %536 = vmatpush1.msra.mxu0 0.0
    %537 = vmatprep.subr.mxu0 0.0
    %538 = vmatpush1.msra.mxu0 0.0
    %539 = vmatprep.subr.mxu0 0.0
    %540 = vmatpush1.msra.mxu0 0.0
    %541 = vmatprep.subr.mxu0 0.0
    %542 = vmatpush1.msra.mxu0 0.0
    %543 = vmatprep.subr.mxu0 0.0
    %544 = vmatpush1.msra.mxu0 0.0
    %545 = vmatprep.subr.mxu0 0.0
    %546 = vmatpush1.msra.mxu0 0.0
    %547 = vmatprep.subr.mxu0 0.0
    %548 = vmatpush1.msra.mxu0 0.0
    %549 = vmatprep.subr.mxu0 0.0
    %550 = vmatpush1.msra.mxu0 0.0
    %551 = vmatprep.subr.mxu0 0.0
    %552 = vmatpush1.msra.mxu0 0.0
    %553 = vmatprep.subr.mxu0 0.0
    %554 = vmatpush1.msra.mxu0 0.0
    %555 = vmatprep.subr.mxu0 0.0
    %556 = vmatpush1.msra.mxu0 0.0
    %557 = vmatprep.mubr.f32.mxu0 0.0
    %558 = vmatmul.mubr.f32.gmra.mrb[0].mxu0 %v411
    %v559 = vpop.f32.mrb[0].mxu0
    %v560 = vadd.f32 %v402, %v559
    %v561 = vpop.f32.mrb[0].mxu0
    %v562 = vadd.f32 %v402, %v561
    %563 = vmatprep.mubr.f32.mxu0 0.0
    %564 = vmatmul.mubr.f32.gmra.mrb[0].mxu0 %v414
    %v565 = vpop.f32.mrb[0].mxu0
    %v566 = vadd.f32 %v407, %v565
    %v567 = vpop.f32.mrb[0].mxu0
    %v568 = vadd.f32 %v407, %v567
    %569 = vdwg.mxu0
    %v570 = vmax.f32 %v483, 0.0
    %v571 = vmax.f32 %v485, 0.0
    %v572 = vmax.f32 %v560, 0.0
    %v573 = vmax.f32 %v562, 0.0
    %v574 = vmax.f32 %v489, 0.0
    %v575 = vmax.f32 %v491, 0.0
    %v576 = vmax.f32 %v566, 0.0
    %v577 = vmax.f32 %v568, 0.0
    %v578 = vld [vmem:[%s5] sm:$0xff]
    %v579 = vld [vmem:[%s5 + $0x8] sm:$0xff]
    %v580 = vld [vmem:[%s5 + $0x10] sm:$0xff]
    %v581 = vld [vmem:[%s5 + $0x18] sm:$0xff]
    %v582 = vld [vmem:[%s6] sm:$0xff]
    %v583 = vld [vmem:[%s6 + $0x8] sm:$0xff]
    %584 = vrot.lane.b32.xlu0 %v570, 11
    %v585 = vpop.permute.xlu0 %584
    %586 = vrot.lane.b32.xlu0 %v574, 11
    %v587 = vpop.permute.xlu0 %586
    %588 = vrot.lane.b32.xlu0 %v571, 11
    %v589 = vpop.permute.xlu0 %588
    %590 = vrot.lane.b32.xlu0 %v575, 11
    %v591 = vpop.permute.xlu0 %590
    %592 = vrot.lane.b32.xlu0 %v572, 11
    %v593 = vpop.permute.xlu0 %592
    %594 = vrot.lane.b32.xlu0 %v576, 11
    %v595 = vpop.permute.xlu0 %594
    %596 = vrot.lane.b32.xlu0 %v573, 11
    %v597 = vpop.permute.xlu0 %596
    %598 = vrot.lane.b32.xlu0 %v577, 11
    %v599 = vpop.permute.xlu0 %598
    %v600 = vsel %vm123, %v593, %v597
    %v601 = vsel %vm123, %v595, %v599
    %v602 = vsel %vm123, %v589, %v593
    %v603 = vsel %vm123, %v591, %v595
    %v604 = vsel %vm123, %v585, %v589
    %v605 = vsel %vm123, %v587, %v591
    %v606 = vsel %vm123, %v597, %v585
    %v607 = vsel %vm123, %v599, %v587
    %v608 = vmul.f32 %v606, %v131
    %v609 = vmul.f32 %v604, %v135
    %v610 = vmul.f32 %v602, %v139
    %v611 = vmul.f32 %v600, %v143
    %v612 = vmul.f32 %v607, %v131
    %v613 = vmul.f32 %v605, %v135
    %v614 = vmul.f32 %v603, %v139
    %v615 = vmul.f32 %v601, %v143
    %616 = vrot.lane.b32.xlu0 %v570, 10
    %v617 = vpop.permute.xlu0 %616
    %618 = vrot.lane.b32.xlu0 %v574, 10
    %v619 = vpop.permute.xlu0 %618
    %620 = vrot.lane.b32.xlu0 %v571, 10
    %v621 = vpop.permute.xlu0 %620
    %622 = vrot.lane.b32.xlu0 %v575, 10
    %v623 = vpop.permute.xlu0 %622
    %624 = vrot.lane.b32.xlu0 %v572, 10
    %v625 = vpop.permute.xlu0 %624
    %626 = vrot.lane.b32.xlu0 %v576, 10
    %v627 = vpop.permute.xlu0 %626
    %628 = vrot.lane.b32.xlu0 %v573, 10
    %v629 = vpop.permute.xlu0 %628
    %630 = vrot.lane.b32.xlu0 %v577, 10
    %v631 = vpop.permute.xlu0 %630
    %v632 = vsel %vm156, %v625, %v629
    %v633 = vsel %vm156, %v627, %v631
    %v634 = vsel %vm156, %v621, %v625
    %v635 = vsel %vm156, %v623, %v627
    %v636 = vsel %vm156, %v617, %v621
    %v637 = vsel %vm156, %v619, %v623
    %v638 = vsel %vm156, %v629, %v617
    %v639 = vsel %vm156, %v631, %v619
    %v640 = vmul.f32 %v638, %v164
    %v641 = vmul.f32 %v636, %v168
    %v642 = vmul.f32 %v634, %v172
    %v643 = vmul.f32 %v632, %v176
    %v644 = vmul.f32 %v639, %v164
    %v645 = vmul.f32 %v637, %v168
    %v646 = vmul.f32 %v635, %v172
    %v647 = vmul.f32 %v633, %v176
    %648 = vrot.lane.b32.xlu0 %v570, 9
    %v649 = vpop.permute.xlu0 %648
    %650 = vrot.lane.b32.xlu0 %v574, 9
    %v651 = vpop.permute.xlu0 %650
    %652 = vrot.lane.b32.xlu0 %v571, 9
    %v653 = vpop.permute.xlu0 %652
    %654 = vrot.lane.b32.xlu0 %v575, 9
    %v655 = vpop.permute.xlu0 %654
    %656 = vrot.lane.b32.xlu0 %v572, 9
    %v657 = vpop.permute.xlu0 %656
    %658 = vrot.lane.b32.xlu0 %v576, 9
    %v659 = vpop.permute.xlu0 %658
    %660 = vrot.lane.b32.xlu0 %v573, 9
    %v661 = vpop.permute.xlu0 %660
    %662 = vrot.lane.b32.xlu0 %v577, 9
    %v663 = vpop.permute.xlu0 %662
    %v664 = vsel %vm189, %v657, %v661
    %v665 = vsel %vm189, %v659, %v663
    %v666 = vsel %vm189, %v653, %v657
    %v667 = vsel %vm189, %v655, %v659
    %v668 = vsel %vm189, %v649, %v653
    %v669 = vsel %vm189, %v651, %v655
    %v670 = vsel %vm189, %v661, %v649
    %v671 = vsel %vm189, %v663, %v651
    %v672 = vmul.f32 %v670, %v197
    %v673 = vmul.f32 %v668, %v201
    %v674 = vmul.f32 %v666, %v205
    %v675 = vmul.f32 %v664, %v209
    %v676 = vmul.f32 %v671, %v197
    %v677 = vmul.f32 %v669, %v201
    %v678 = vmul.f32 %v667, %v205
    %v679 = vmul.f32 %v665, %v209
    %680 = vrot.lane.b32.xlu0 %v570, 1
    %v681 = vpop.permute.xlu0 %680
    %682 = vrot.lane.b32.xlu0 %v574, 1
    %v683 = vpop.permute.xlu0 %682
    %684 = vrot.lane.b32.xlu0 %v571, 1
    %v685 = vpop.permute.xlu0 %684
    %686 = vrot.lane.b32.xlu0 %v575, 1
    %v687 = vpop.permute.xlu0 %686
    %688 = vrot.lane.b32.xlu0 %v572, 1
    %v689 = vpop.permute.xlu0 %688
    %690 = vrot.lane.b32.xlu0 %v576, 1
    %v691 = vpop.permute.xlu0 %690
    %692 = vrot.lane.b32.xlu0 %v573, 1
    %v693 = vpop.permute.xlu0 %692
    %694 = vrot.lane.b32.xlu0 %v577, 1
    %v695 = vpop.permute.xlu0 %694
    %v696 = vsel %vm222, %v689, %v693
    %v697 = vsel %vm222, %v691, %v695
    %v698 = vsel %vm222, %v685, %v689
    %v699 = vsel %vm222, %v687, %v691
    %v700 = vsel %vm222, %v681, %v685
    %v701 = vsel %vm222, %v683, %v687
    %v702 = vsel %vm222, %v693, %v681
    %v703 = vsel %vm222, %v695, %v683
    %v704 = vmul.f32 %v702, %v230
    %v705 = vmul.f32 %v700, %v234
    %v706 = vmul.f32 %v698, %v238
    %v707 = vmul.f32 %v696, %v242
    %v708 = vmul.f32 %v703, %v230
    %v709 = vmul.f32 %v701, %v234
    %v710 = vmul.f32 %v699, %v238
    %v711 = vmul.f32 %v697, %v242
    %v712 = vmul.f32 %v570, %v250
    %v713 = vmul.f32 %v571, %v254
    %v714 = vmul.f32 %v572, %v258
    %v715 = vmul.f32 %v573, %v262
    %v716 = vmul.f32 %v574, %v250
    %v717 = vmul.f32 %v575, %v254
    %v718 = vmul.f32 %v576, %v258
    %v719 = vmul.f32 %v577, %v262
    %720 = vrot.lane.b32.xlu0 %v570, 127
    %v721 = vpop.permute.xlu0 %720
    %722 = vrot.lane.b32.xlu0 %v574, 127
    %v723 = vpop.permute.xlu0 %722
    %724 = vrot.lane.b32.xlu0 %v571, 127
    %v725 = vpop.permute.xlu0 %724
    %726 = vrot.lane.b32.xlu0 %v575, 127
    %v727 = vpop.permute.xlu0 %726
    %728 = vrot.lane.b32.xlu0 %v572, 127
    %v729 = vpop.permute.xlu0 %728
    %730 = vrot.lane.b32.xlu0 %v576, 127
    %v731 = vpop.permute.xlu0 %730
    %732 = vrot.lane.b32.xlu0 %v573, 127
    %v733 = vpop.permute.xlu0 %732
    %734 = vrot.lane.b32.xlu0 %v577, 127
    %v735 = vpop.permute.xlu0 %734
    %v736 = vsel %vm275, %v729, %v733
    %v737 = vsel %vm275, %v731, %v735
    %v738 = vsel %vm275, %v725, %v729
    %v739 = vsel %vm275, %v727, %v731
    %v740 = vsel %vm275, %v721, %v725
    %v741 = vsel %vm275, %v723, %v727
    %v742 = vsel %vm275, %v733, %v721
    %v743 = vsel %vm275, %v735, %v723
    %v744 = vmul.f32 %v740, %v283
    %v745 = vmul.f32 %v738, %v287
    %v746 = vmul.f32 %v736, %v291
    %v747 = vmul.f32 %v742, %v295
    %v748 = vmul.f32 %v741, %v283
    %v749 = vmul.f32 %v739, %v287
    %v750 = vmul.f32 %v737, %v291
    %v751 = vmul.f32 %v743, %v295
    %752 = vrot.lane.b32.xlu0 %v570, 119
    %v753 = vpop.permute.xlu0 %752
    %754 = vrot.lane.b32.xlu0 %v574, 119
    %v755 = vpop.permute.xlu0 %754
    %756 = vrot.lane.b32.xlu0 %v571, 119
    %v757 = vpop.permute.xlu0 %756
    %758 = vrot.lane.b32.xlu0 %v575, 119
    %v759 = vpop.permute.xlu0 %758
    %760 = vrot.lane.b32.xlu0 %v572, 119
    %v761 = vpop.permute.xlu0 %760
    %762 = vrot.lane.b32.xlu0 %v576, 119
    %v763 = vpop.permute.xlu0 %762
    %764 = vrot.lane.b32.xlu0 %v573, 119
    %v765 = vpop.permute.xlu0 %764
    %766 = vrot.lane.b32.xlu0 %v577, 119
    %v767 = vpop.permute.xlu0 %766
    %v768 = vsel %vm308, %v761, %v765
    %v769 = vsel %vm308, %v763, %v767
    %v770 = vsel %vm308, %v757, %v761
    %v771 = vsel %vm308, %v759, %v763
    %v772 = vsel %vm308, %v753, %v757
    %v773 = vsel %vm308, %v755, %v759
    %v774 = vsel %vm308, %v765, %v753
    %v775 = vsel %vm308, %v767, %v755
    %v776 = vmul.f32 %v772, %v316
    %v777 = vmul.f32 %v770, %v320
    %v778 = vmul.f32 %v768, %v324
    %v779 = vmul.f32 %v774, %v328
    %v780 = vmul.f32 %v773, %v316
    %v781 = vmul.f32 %v771, %v320
    %v782 = vmul.f32 %v769, %v324
    %v783 = vmul.f32 %v775, %v328
    %784 = vrot.lane.b32.xlu0 %v570, 118
    %v785 = vpop.permute.xlu0 %784
    %786 = vrot.lane.b32.xlu0 %v574, 118
    %v787 = vpop.permute.xlu0 %786
    %788 = vrot.lane.b32.xlu0 %v571, 118
    %v789 = vpop.permute.xlu0 %788
    %790 = vrot.lane.b32.xlu0 %v575, 118
    %v791 = vpop.permute.xlu0 %790
    %792 = vrot.lane.b32.xlu0 %v572, 118
    %v793 = vpop.permute.xlu0 %792
    %794 = vrot.lane.b32.xlu0 %v576, 118
    %v795 = vpop.permute.xlu0 %794
    %796 = vrot.lane.b32.xlu0 %v573, 118
    %v797 = vpop.permute.xlu0 %796
    %798 = vrot.lane.b32.xlu0 %v577, 118
    %v799 = vpop.permute.xlu0 %798
    %v800 = vsel %vm341, %v793, %v797
    %v801 = vsel %vm341, %v795, %v799
    %v802 = vsel %vm341, %v789, %v793
    %v803 = vsel %vm341, %v791, %v795
    %v804 = vsel %vm341, %v785, %v789
    %v805 = vsel %vm341, %v787, %v791
    %v806 = vsel %vm341, %v797, %v785
    %v807 = vsel %vm341, %v799, %v787
    %v808 = vmul.f32 %v804, %v349
    %v809 = vmul.f32 %v802, %v353
    %v810 = vmul.f32 %v800, %v357
    %v811 = vmul.f32 %v806, %v361
    %v812 = vmul.f32 %v805, %v349
    %v813 = vmul.f32 %v803, %v353
    %v814 = vmul.f32 %v801, %v357
    %v815 = vmul.f32 %v807, %v361
    %816 = vrot.lane.b32.xlu0 %v570, 117
    %v817 = vpop.permute.xlu0 %816
    %818 = vrot.lane.b32.xlu0 %v574, 117
    %v819 = vpop.permute.xlu0 %818
    %820 = vrot.lane.b32.xlu0 %v571, 117
    %v821 = vpop.permute.xlu0 %820
    %822 = vrot.lane.b32.xlu0 %v575, 117
    %v823 = vpop.permute.xlu0 %822
    %824 = vrot.lane.b32.xlu0 %v572, 117
    %v825 = vpop.permute.xlu0 %824
    %826 = vrot.lane.b32.xlu0 %v576, 117
    %v827 = vpop.permute.xlu0 %826
    %828 = vrot.lane.b32.xlu0 %v573, 117
    %v829 = vpop.permute.xlu0 %828
    %830 = vrot.lane.b32.xlu0 %v577, 117
    %v831 = vpop.permute.xlu0 %830
    %v832 = vsel %vm374, %v825, %v829
    %v833 = vsel %vm374, %v827, %v831
    %v834 = vsel %vm374, %v821, %v825
    %v835 = vsel %vm374, %v823, %v827
    %v836 = vsel %vm374, %v817, %v821
    %v837 = vsel %vm374, %v819, %v823
    %v838 = vsel %vm374, %v829, %v817
    %v839 = vsel %vm374, %v831, %v819
    %v840 = vmul.f32 %v836, %v382
    %v841 = vmul.f32 %v834, %v386
    %v842 = vmul.f32 %v832, %v390
    %v843 = vmul.f32 %v838, %v394
    %v844 = vmul.f32 %v837, %v382
    %v845 = vmul.f32 %v835, %v386
    %v846 = vmul.f32 %v833, %v390
    %v847 = vmul.f32 %v839, %v394
    %849 = vset.pattern.permute.xlu0 0
    %850 = vperm.xlu0 %849, %v582
    %v851 = vpop.permute.xlu0 %850
    %854 = vset.pattern.permute.xlu0 0
    %855 = vperm.xlu0 %854, %v583
    %v856 = vpop.permute.xlu0 %855
    %vm858 = vcmask 130048
    %v860 = vsel %vm858, %v579, 0
    %v863 = vsel %vm858, %v581, 0
    %865 = vmatprep.subr.mxu0 %v609
    %866 = vmatpush1.msra.mxu0 %v608
    %867 = vmatprep.subr.mxu0 %v613
    %868 = vmatpush1.msra.mxu0 %v612
    %869 = vmatprep.subr.mxu0 %v641
    %870 = vmatpush1.msra.mxu0 %v640
    %871 = vmatprep.subr.mxu0 %v645
    %872 = vmatpush1.msra.mxu0 %v644
    %873 = vmatprep.subr.mxu0 %v673
    %874 = vmatpush1.msra.mxu0 %v672
    %875 = vmatprep.subr.mxu0 %v677
    %876 = vmatpush1.msra.mxu0 %v676
    %877 = vmatprep.subr.mxu0 %v705
    %878 = vmatpush1.msra.mxu0 %v704
    %879 = vmatprep.subr.mxu0 %v709
    %880 = vmatpush1.msra.mxu0 %v708
    %881 = vmatprep.subr.mxu0 %v713
    %882 = vmatpush1.msra.mxu0 %v712
    %883 = vmatprep.subr.mxu0 %v717
    %884 = vmatpush1.msra.mxu0 %v716
    %885 = vmatprep.subr.mxu0 %v745
    %886 = vmatpush1.msra.mxu0 %v744
    %887 = vmatprep.subr.mxu0 %v749
    %888 = vmatpush1.msra.mxu0 %v748
    %889 = vmatprep.subr.mxu0 %v777
    %890 = vmatpush1.msra.mxu0 %v776
    %891 = vmatprep.subr.mxu0 %v781
    %892 = vmatpush1.msra.mxu0 %v780
    %893 = vmatprep.subr.mxu0 %v809
    %894 = vmatpush1.msra.mxu0 %v808
    %895 = vmatprep.subr.mxu0 %v813
    %896 = vmatpush1.msra.mxu0 %v812
    %897 = vmatprep.subr.mxu0 %v841
    %898 = vmatpush1.msra.mxu0 %v840
    %899 = vmatprep.subr.mxu0 %v845
    %900 = vmatpush1.msra.mxu0 %v844
    %901 = vmatprep.subr.mxu0 0.0
    %902 = vmatpush1.msra.mxu0 0.0
    %903 = vmatprep.subr.mxu0 0.0
    %904 = vmatpush1.msra.mxu0 0.0
    %905 = vmatprep.subr.mxu0 0.0
    %906 = vmatpush1.msra.mxu0 0.0
    %907 = vmatprep.subr.mxu0 0.0
    %908 = vmatpush1.msra.mxu0 0.0
    %909 = vmatprep.subr.mxu0 0.0
    %910 = vmatpush1.msra.mxu0 0.0
    %911 = vmatprep.subr.mxu0 0.0
    %912 = vmatpush1.msra.mxu0 0.0
    %913 = vmatprep.subr.mxu0 0.0
    %914 = vmatpush1.msra.mxu0 0.0
    %915 = vmatprep.subr.mxu0 0.0
    %916 = vmatpush1.msra.mxu0 0.0
    %917 = vmatprep.subr.mxu0 0.0
    %918 = vmatpush1.msra.mxu0 0.0
    %919 = vmatprep.subr.mxu0 0.0
    %920 = vmatpush1.msra.mxu0 0.0
    %921 = vmatprep.subr.mxu0 0.0
    %922 = vmatpush1.msra.mxu0 0.0
    %923 = vmatprep.subr.mxu0 0.0
    %924 = vmatpush1.msra.mxu0 0.0
    %925 = vmatprep.subr.mxu0 0.0
    %926 = vmatpush1.msra.mxu0 0.0
    %927 = vmatprep.subr.mxu0 0.0
    %928 = vmatpush1.msra.mxu0 0.0
    %929 = vmatprep.mubr.f32.mxu0 %v860
    %930 = vmatmul.mubr.f32.gmra.mrb[0].mxu0 %v578
    %v931 = vpop.f32.mrb[0].mxu0
    %v932 = vadd.f32 %v851, %v931
    %v933 = vpop.f32.mrb[0].mxu0
    %v934 = vadd.f32 %v851, %v933
    %935 = vmatprep.mubr.f32.mxu0 %v863
    %936 = vmatmul.mubr.f32.gmra.mrb[0].mxu0 %v580
    %v937 = vpop.f32.mrb[0].mxu0
    %v938 = vadd.f32 %v856, %v937
    %v939 = vpop.f32.mrb[0].mxu0
    %v940 = vadd.f32 %v856, %v939
    %941 = vdwg.mxu0
    %942 = vmatprep.subr.mxu0 %v611
    %943 = vmatpush1.msra.mxu0 %v610
    %944 = vmatprep.subr.mxu0 %v615
    %945 = vmatpush1.msra.mxu0 %v614
    %946 = vmatprep.subr.mxu0 %v643
    %947 = vmatpush1.msra.mxu0 %v642
    %948 = vmatprep.subr.mxu0 %v647
    %949 = vmatpush1.msra.mxu0 %v646
    %950 = vmatprep.subr.mxu0 %v675
    %951 = vmatpush1.msra.mxu0 %v674
    %952 = vmatprep.subr.mxu0 %v679
    %953 = vmatpush1.msra.mxu0 %v678
    %954 = vmatprep.subr.mxu0 %v707
    %955 = vmatpush1.msra.mxu0 %v706
    %956 = vmatprep.subr.mxu0 %v711
    %957 = vmatpush1.msra.mxu0 %v710
    %958 = vmatprep.subr.mxu0 %v715
    %959 = vmatpush1.msra.mxu0 %v714
    %960 = vmatprep.subr.mxu0 %v719
    %961 = vmatpush1.msra.mxu0 %v718
    %962 = vmatprep.subr.mxu0 %v747
    %963 = vmatpush1.msra.mxu0 %v746
    %964 = vmatprep.subr.mxu0 %v751
    %965 = vmatpush1.msra.mxu0 %v750
    %966 = vmatprep.subr.mxu0 %v779
    %967 = vmatpush1.msra.mxu0 %v778
    %968 = vmatprep.subr.mxu0 %v783
    %969 = vmatpush1.msra.mxu0 %v782
    %970 = vmatprep.subr.mxu0 %v811
    %971 = vmatpush1.msra.mxu0 %v810
    %972 = vmatprep.subr.mxu0 %v815
    %973 = vmatpush1.msra.mxu0 %v814
    %974 = vmatprep.subr.mxu0 %v843
    %975 = vmatpush1.msra.mxu0 %v842
    %976 = vmatprep.subr.mxu0 %v847
    %977 = vmatpush1.msra.mxu0 %v846
    %978 = vmatprep.subr.mxu0 0.0
    %979 = vmatpush1.msra.mxu0 0.0
    %980 = vmatprep.subr.mxu0 0.0
    %981 = vmatpush1.msra.mxu0 0.0
    %982 = vmatprep.subr.mxu0 0.0
    %983 = vmatpush1.msra.mxu0 0.0
    %984 = vmatprep.subr.mxu0 0.0
    %985 = vmatpush1.msra.mxu0 0.0
    %986 = vmatprep.subr.mxu0 0.0
    %987 = vmatpush1.msra.mxu0 0.0
    %988 = vmatprep.subr.mxu0 0.0
    %989 = vmatpush1.msra.mxu0 0.0
    %990 = vmatprep.subr.mxu0 0.0
    %991 = vmatpush1.msra.mxu0 0.0
    %992 = vmatprep.subr.mxu0 0.0
    %993 = vmatpush1.msra.mxu0 0.0
    %994 = vmatprep.subr.mxu0 0.0
    %995 = vmatpush1.msra.mxu0 0.0
    %996 = vmatprep.subr.mxu0 0.0
    %997 = vmatpush1.msra.mxu0 0.0
    %998 = vmatprep.subr.mxu0 0.0
    %999 = vmatpush1.msra.mxu0 0.0
    %1000 = vmatprep.subr.mxu0 0.0
    %1001 = vmatpush1.msra.mxu0 0.0
    %1002 = vmatprep.subr.mxu0 0.0
    %1003 = vmatpush1.msra.mxu0 0.0
    %1004 = vmatprep.subr.mxu0 0.0
    %1005 = vmatpush1.msra.mxu0 0.0
    %1006 = vmatprep.mubr.f32.mxu0 %v860
    %1007 = vmatmul.mubr.f32.gmra.mrb[0].mxu0 %v578
    %v1008 = vpop.f32.mrb[0].mxu0
    %v1009 = vadd.f32 %v851, %v1008
    %v1010 = vpop.f32.mrb[0].mxu0
    %v1011 = vadd.f32 %v851, %v1010
    %1012 = vmatprep.mubr.f32.mxu0 %v863
    %1013 = vmatmul.mubr.f32.gmra.mrb[0].mxu0 %v580
    %v1014 = vpop.f32.mrb[0].mxu0
    %v1015 = vadd.f32 %v856, %v1014
    %v1016 = vpop.f32.mrb[0].mxu0
    %v1017 = vadd.f32 %v856, %v1016
    %1018 = vdwg.mxu0
    %v1019 = vadd.f32 %v932, %v570
    %v1020 = vadd.f32 %v934, %v571
    %v1021 = vadd.f32 %v1009, %v572
    %v1022 = vadd.f32 %v1011, %v573
    %v1023 = vadd.f32 %v938, %v574
    %v1024 = vadd.f32 %v940, %v575
    %v1025 = vadd.f32 %v1015, %v576
    %v1026 = vadd.f32 %v1017, %v577
    %v1027 = vmax.f32 %v1019, 0.0
    %v1028 = vmax.f32 %v1020, 0.0
    %v1029 = vmax.f32 %v1021, 0.0
    %v1030 = vmax.f32 %v1022, 0.0
    %v1031 = vmax.f32 %v1023, 0.0
    %v1032 = vmax.f32 %v1024, 0.0
    %v1033 = vmax.f32 %v1025, 0.0
    %v1034 = vmax.f32 %v1026, 0.0
    %s1035 = scalar_lea.vmem %s5, 32
    %v1036 = vld [vmem:[%s1035] sm:$0xff]
    %v1037 = vld [vmem:[%s1035 + $0x8] sm:$0xff]
    %v1038 = vld [vmem:[%s1035 + $0x10] sm:$0xff]
    %v1039 = vld [vmem:[%s1035 + $0x18] sm:$0xff]
    %s1040 = scalar_lea.vmem %s6, 16
    %v1041 = vld [vmem:[%s1040] sm:$0xff]
    %v1042 = vld [vmem:[%s1040 + $0x8] sm:$0xff]
    %1043 = vrot.lane.b32.xlu0 %v1027, 11
    %v1044 = vpop.permute.xlu0 %1043
    %1045 = vrot.lane.b32.xlu0 %v1031, 11
    %v1046 = vpop.permute.xlu0 %1045
    %1047 = vrot.lane.b32.xlu0 %v1028, 11
    %v1048 = vpop.permute.xlu0 %1047
    %1049 = vrot.lane.b32.xlu0 %v1032, 11
    %v1050 = vpop.permute.xlu0 %1049
    %1051 = vrot.lane.b32.xlu0 %v1029, 11
    %v1052 = vpop.permute.xlu0 %1051
    %1053 = vrot.lane.b32.xlu0 %v1033, 11
    %v1054 = vpop.permute.xlu0 %1053
    %1055 = vrot.lane.b32.xlu0 %v1030, 11
    %v1056 = vpop.permute.xlu0 %1055
    %1057 = vrot.lane.b32.xlu0 %v1034, 11
    %v1058 = vpop.permute.xlu0 %1057
    %v1059 = vsel %vm123, %v1052, %v1056
    %v1060 = vsel %vm123, %v1054, %v1058
    %v1061 = vsel %vm123, %v1048, %v1052
    %v1062 = vsel %vm123, %v1050, %v1054
    %v1063 = vsel %vm123, %v1044, %v1048
    %v1064 = vsel %vm123, %v1046, %v1050
    %v1065 = vsel %vm123, %v1056, %v1044
    %v1066 = vsel %vm123, %v1058, %v1046
    %v1067 = vmul.f32 %v1065, %v131
    %v1068 = vmul.f32 %v1063, %v135
    %v1069 = vmul.f32 %v1061, %v139
    %v1070 = vmul.f32 %v1059, %v143
    %v1071 = vmul.f32 %v1066, %v131
    %v1072 = vmul.f32 %v1064, %v135
    %v1073 = vmul.f32 %v1062, %v139
    %v1074 = vmul.f32 %v1060, %v143
    %1075 = vrot.lane.b32.xlu0 %v1027, 10
    %v1076 = vpop.permute.xlu0 %1075
    %1077 = vrot.lane.b32.xlu0 %v1031, 10
    %v1078 = vpop.permute.xlu0 %1077
    %1079 = vrot.lane.b32.xlu0 %v1028, 10
    %v1080 = vpop.permute.xlu0 %1079
    %1081 = vrot.lane.b32.xlu0 %v1032, 10
    %v1082 = vpop.permute.xlu0 %1081
    %1083 = vrot.lane.b32.xlu0 %v1029, 10
    %v1084 = vpop.permute.xlu0 %1083
    %1085 = vrot.lane.b32.xlu0 %v1033, 10
    %v1086 = vpop.permute.xlu0 %1085
    %1087 = vrot.lane.b32.xlu0 %v1030, 10
    %v1088 = vpop.permute.xlu0 %1087
    %1089 = vrot.lane.b32.xlu0 %v1034, 10
    %v1090 = vpop.permute.xlu0 %1089
    %v1091 = vsel %vm156, %v1084, %v1088
    %v1092 = vsel %vm156, %v1086, %v1090
    %v1093 = vsel %vm156, %v1080, %v1084
    %v1094 = vsel %vm156, %v1082, %v1086
    %v1095 = vsel %vm156, %v1076, %v1080
    %v1096 = vsel %vm156, %v1078, %v1082
    %v1097 = vsel %vm156, %v1088, %v1076
    %v1098 = vsel %vm156, %v1090, %v1078
    %v1099 = vmul.f32 %v1097, %v164
    %v1100 = vmul.f32 %v1095, %v168
    %v1101 = vmul.f32 %v1093, %v172
    %v1102 = vmul.f32 %v1091, %v176
    %v1103 = vmul.f32 %v1098, %v164
    %v1104 = vmul.f32 %v1096, %v168
    %v1105 = vmul.f32 %v1094, %v172
    %v1106 = vmul.f32 %v1092, %v176
    %1107 = vrot.lane.b32.xlu0 %v1027, 9
    %v1108 = vpop.permute.xlu0 %1107
    %1109 = vrot.lane.b32.xlu0 %v1031, 9
    %v1110 = vpop.permute.xlu0 %1109
    %1111 = vrot.lane.b32.xlu0 %v1028, 9
    %v1112 = vpop.permute.xlu0 %1111
    %1113 = vrot.lane.b32.xlu0 %v1032, 9
    %v1114 = vpop.permute.xlu0 %1113
    %1115 = vrot.lane.b32.xlu0 %v1029, 9
    %v1116 = vpop.permute.xlu0 %1115
    %1117 = vrot.lane.b32.xlu0 %v1033, 9
    %v1118 = vpop.permute.xlu0 %1117
    %1119 = vrot.lane.b32.xlu0 %v1030, 9
    %v1120 = vpop.permute.xlu0 %1119
    %1121 = vrot.lane.b32.xlu0 %v1034, 9
    %v1122 = vpop.permute.xlu0 %1121
    %v1123 = vsel %vm189, %v1116, %v1120
    %v1124 = vsel %vm189, %v1118, %v1122
    %v1125 = vsel %vm189, %v1112, %v1116
    %v1126 = vsel %vm189, %v1114, %v1118
    %v1127 = vsel %vm189, %v1108, %v1112
    %v1128 = vsel %vm189, %v1110, %v1114
    %v1129 = vsel %vm189, %v1120, %v1108
    %v1130 = vsel %vm189, %v1122, %v1110
    %v1131 = vmul.f32 %v1129, %v197
    %v1132 = vmul.f32 %v1127, %v201
    %v1133 = vmul.f32 %v1125, %v205
    %v1134 = vmul.f32 %v1123, %v209
    %v1135 = vmul.f32 %v1130, %v197
    %v1136 = vmul.f32 %v1128, %v201
    %v1137 = vmul.f32 %v1126, %v205
    %v1138 = vmul.f32 %v1124, %v209
    %1139 = vrot.lane.b32.xlu0 %v1027, 1
    %v1140 = vpop.permute.xlu0 %1139
    %1141 = vrot.lane.b32.xlu0 %v1031, 1
    %v1142 = vpop.permute.xlu0 %1141
    %1143 = vrot.lane.b32.xlu0 %v1028, 1
    %v1144 = vpop.permute.xlu0 %1143
    %1145 = vrot.lane.b32.xlu0 %v1032, 1
    %v1146 = vpop.permute.xlu0 %1145
    %1147 = vrot.lane.b32.xlu0 %v1029, 1
    %v1148 = vpop.permute.xlu0 %1147
    %1149 = vrot.lane.b32.xlu0 %v1033, 1
    %v1150 = vpop.permute.xlu0 %1149
    %1151 = vrot.lane.b32.xlu0 %v1030, 1
    %v1152 = vpop.permute.xlu0 %1151
    %1153 = vrot.lane.b32.xlu0 %v1034, 1
    %v1154 = vpop.permute.xlu0 %1153
    %v1155 = vsel %vm222, %v1148, %v1152
    %v1156 = vsel %vm222, %v1150, %v1154
    %v1157 = vsel %vm222, %v1144, %v1148
    %v1158 = vsel %vm222, %v1146, %v1150
    %v1159 = vsel %vm222, %v1140, %v1144
    %v1160 = vsel %vm222, %v1142, %v1146
    %v1161 = vsel %vm222, %v1152, %v1140
    %v1162 = vsel %vm222, %v1154, %v1142
    %v1163 = vmul.f32 %v1161, %v230
    %v1164 = vmul.f32 %v1159, %v234
    %v1165 = vmul.f32 %v1157, %v238
    %v1166 = vmul.f32 %v1155, %v242
    %v1167 = vmul.f32 %v1162, %v230
    %v1168 = vmul.f32 %v1160, %v234
    %v1169 = vmul.f32 %v1158, %v238
    %v1170 = vmul.f32 %v1156, %v242
    %v1171 = vmul.f32 %v1027, %v250
    %v1172 = vmul.f32 %v1028, %v254
    %v1173 = vmul.f32 %v1029, %v258
    %v1174 = vmul.f32 %v1030, %v262
    %v1175 = vmul.f32 %v1031, %v250
    %v1176 = vmul.f32 %v1032, %v254
    %v1177 = vmul.f32 %v1033, %v258
    %v1178 = vmul.f32 %v1034, %v262
    %1179 = vrot.lane.b32.xlu0 %v1027, 127
    %v1180 = vpop.permute.xlu0 %1179
    %1181 = vrot.lane.b32.xlu0 %v1031, 127
    %v1182 = vpop.permute.xlu0 %1181
    %1183 = vrot.lane.b32.xlu0 %v1028, 127
    %v1184 = vpop.permute.xlu0 %1183
    %1185 = vrot.lane.b32.xlu0 %v1032, 127
    %v1186 = vpop.permute.xlu0 %1185
    %1187 = vrot.lane.b32.xlu0 %v1029, 127
    %v1188 = vpop.permute.xlu0 %1187
    %1189 = vrot.lane.b32.xlu0 %v1033, 127
    %v1190 = vpop.permute.xlu0 %1189
    %1191 = vrot.lane.b32.xlu0 %v1030, 127
    %v1192 = vpop.permute.xlu0 %1191
    %1193 = vrot.lane.b32.xlu0 %v1034, 127
    %v1194 = vpop.permute.xlu0 %1193
    %v1195 = vsel %vm275, %v1188, %v1192
    %v1196 = vsel %vm275, %v1190, %v1194
    %v1197 = vsel %vm275, %v1184, %v1188
    %v1198 = vsel %vm275, %v1186, %v1190
    %v1199 = vsel %vm275, %v1180, %v1184
    %v1200 = vsel %vm275, %v1182, %v1186
    %v1201 = vsel %vm275, %v1192, %v1180
    %v1202 = vsel %vm275, %v1194, %v1182
    %v1203 = vmul.f32 %v1199, %v283
    %v1204 = vmul.f32 %v1197, %v287
    %v1205 = vmul.f32 %v1195, %v291
    %v1206 = vmul.f32 %v1201, %v295
    %v1207 = vmul.f32 %v1200, %v283
    %v1208 = vmul.f32 %v1198, %v287
    %v1209 = vmul.f32 %v1196, %v291
    %v1210 = vmul.f32 %v1202, %v295
    %1211 = vrot.lane.b32.xlu0 %v1027, 119
    %v1212 = vpop.permute.xlu0 %1211
    %1213 = vrot.lane.b32.xlu0 %v1031, 119
    %v1214 = vpop.permute.xlu0 %1213
    %1215 = vrot.lane.b32.xlu0 %v1028, 119
    %v1216 = vpop.permute.xlu0 %1215
    %1217 = vrot.lane.b32.xlu0 %v1032, 119
    %v1218 = vpop.permute.xlu0 %1217
    %1219 = vrot.lane.b32.xlu0 %v1029, 119
    %v1220 = vpop.permute.xlu0 %1219
    %1221 = vrot.lane.b32.xlu0 %v1033, 119
    %v1222 = vpop.permute.xlu0 %1221
    %1223 = vrot.lane.b32.xlu0 %v1030, 119
    %v1224 = vpop.permute.xlu0 %1223
    %1225 = vrot.lane.b32.xlu0 %v1034, 119
    %v1226 = vpop.permute.xlu0 %1225
    %v1227 = vsel %vm308, %v1220, %v1224
    %v1228 = vsel %vm308, %v1222, %v1226
    %v1229 = vsel %vm308, %v1216, %v1220
    %v1230 = vsel %vm308, %v1218, %v1222
    %v1231 = vsel %vm308, %v1212, %v1216
    %v1232 = vsel %vm308, %v1214, %v1218
    %v1233 = vsel %vm308, %v1224, %v1212
    %v1234 = vsel %vm308, %v1226, %v1214
    %v1235 = vmul.f32 %v1231, %v316
    %v1236 = vmul.f32 %v1229, %v320
    %v1237 = vmul.f32 %v1227, %v324
    %v1238 = vmul.f32 %v1233, %v328
    %v1239 = vmul.f32 %v1232, %v316
    %v1240 = vmul.f32 %v1230, %v320
    %v1241 = vmul.f32 %v1228, %v324
    %v1242 = vmul.f32 %v1234, %v328
    %1243 = vrot.lane.b32.xlu0 %v1027, 118
    %v1244 = vpop.permute.xlu0 %1243
    %1245 = vrot.lane.b32.xlu0 %v1031, 118
    %v1246 = vpop.permute.xlu0 %1245
    %1247 = vrot.lane.b32.xlu0 %v1028, 118
    %v1248 = vpop.permute.xlu0 %1247
    %1249 = vrot.lane.b32.xlu0 %v1032, 118
    %v1250 = vpop.permute.xlu0 %1249
    %1251 = vrot.lane.b32.xlu0 %v1029, 118
    %v1252 = vpop.permute.xlu0 %1251
    %1253 = vrot.lane.b32.xlu0 %v1033, 118
    %v1254 = vpop.permute.xlu0 %1253
    %1255 = vrot.lane.b32.xlu0 %v1030, 118
    %v1256 = vpop.permute.xlu0 %1255
    %1257 = vrot.lane.b32.xlu0 %v1034, 118
    %v1258 = vpop.permute.xlu0 %1257
    %v1259 = vsel %vm341, %v1252, %v1256
    %v1260 = vsel %vm341, %v1254, %v1258
    %v1261 = vsel %vm341, %v1248, %v1252
    %v1262 = vsel %vm341, %v1250, %v1254
    %v1263 = vsel %vm341, %v1244, %v1248
    %v1264 = vsel %vm341, %v1246, %v1250
    %v1265 = vsel %vm341, %v1256, %v1244
    %v1266 = vsel %vm341, %v1258, %v1246
    %v1267 = vmul.f32 %v1263, %v349
    %v1268 = vmul.f32 %v1261, %v353
    %v1269 = vmul.f32 %v1259, %v357
    %v1270 = vmul.f32 %v1265, %v361
    %v1271 = vmul.f32 %v1264, %v349
    %v1272 = vmul.f32 %v1262, %v353
    %v1273 = vmul.f32 %v1260, %v357
    %v1274 = vmul.f32 %v1266, %v361
    %1275 = vrot.lane.b32.xlu0 %v1027, 117
    %v1276 = vpop.permute.xlu0 %1275
    %1277 = vrot.lane.b32.xlu0 %v1031, 117
    %v1278 = vpop.permute.xlu0 %1277
    %1279 = vrot.lane.b32.xlu0 %v1028, 117
    %v1280 = vpop.permute.xlu0 %1279
    %1281 = vrot.lane.b32.xlu0 %v1032, 117
    %v1282 = vpop.permute.xlu0 %1281
    %1283 = vrot.lane.b32.xlu0 %v1029, 117
    %v1284 = vpop.permute.xlu0 %1283
    %1285 = vrot.lane.b32.xlu0 %v1033, 117
    %v1286 = vpop.permute.xlu0 %1285
    %1287 = vrot.lane.b32.xlu0 %v1030, 117
    %v1288 = vpop.permute.xlu0 %1287
    %1289 = vrot.lane.b32.xlu0 %v1034, 117
    %v1290 = vpop.permute.xlu0 %1289
    %v1291 = vsel %vm374, %v1284, %v1288
    %v1292 = vsel %vm374, %v1286, %v1290
    %v1293 = vsel %vm374, %v1280, %v1284
    %v1294 = vsel %vm374, %v1282, %v1286
    %v1295 = vsel %vm374, %v1276, %v1280
    %v1296 = vsel %vm374, %v1278, %v1282
    %v1297 = vsel %vm374, %v1288, %v1276
    %v1298 = vsel %vm374, %v1290, %v1278
    %v1299 = vmul.f32 %v1295, %v382
    %v1300 = vmul.f32 %v1293, %v386
    %v1301 = vmul.f32 %v1291, %v390
    %v1302 = vmul.f32 %v1297, %v394
    %v1303 = vmul.f32 %v1296, %v382
    %v1304 = vmul.f32 %v1294, %v386
    %v1305 = vmul.f32 %v1292, %v390
    %v1306 = vmul.f32 %v1298, %v394
    %1308 = vset.pattern.permute.xlu0 0
    %1309 = vperm.xlu0 %1308, %v1041
    %v1310 = vpop.permute.xlu0 %1309
    %1313 = vset.pattern.permute.xlu0 0
    %1314 = vperm.xlu0 %1313, %v1042
    %v1315 = vpop.permute.xlu0 %1314
    %v1318 = vsel %vm858, %v1037, 0
    %v1321 = vsel %vm858, %v1039, 0
    %1323 = vmatprep.subr.mxu0 %v1068
    %1324 = vmatpush1.msra.mxu0 %v1067
    %1325 = vmatprep.subr.mxu0 %v1072
    %1326 = vmatpush1.msra.mxu0 %v1071
    %1327 = vmatprep.subr.mxu0 %v1100
    %1328 = vmatpush1.msra.mxu0 %v1099
    %1329 = vmatprep.subr.mxu0 %v1104
    %1330 = vmatpush1.msra.mxu0 %v1103
    %1331 = vmatprep.subr.mxu0 %v1132
    %1332 = vmatpush1.msra.mxu0 %v1131
    %1333 = vmatprep.subr.mxu0 %v1136
    %1334 = vmatpush1.msra.mxu0 %v1135
    %1335 = vmatprep.subr.mxu0 %v1164
    %1336 = vmatpush1.msra.mxu0 %v1163
    %1337 = vmatprep.subr.mxu0 %v1168
    %1338 = vmatpush1.msra.mxu0 %v1167
    %1339 = vmatprep.subr.mxu0 %v1172
    %1340 = vmatpush1.msra.mxu0 %v1171
    %1341 = vmatprep.subr.mxu0 %v1176
    %1342 = vmatpush1.msra.mxu0 %v1175
    %1343 = vmatprep.subr.mxu0 %v1204
    %1344 = vmatpush1.msra.mxu0 %v1203
    %1345 = vmatprep.subr.mxu0 %v1208
    %1346 = vmatpush1.msra.mxu0 %v1207
    %1347 = vmatprep.subr.mxu0 %v1236
    %1348 = vmatpush1.msra.mxu0 %v1235
    %1349 = vmatprep.subr.mxu0 %v1240
    %1350 = vmatpush1.msra.mxu0 %v1239
    %1351 = vmatprep.subr.mxu0 %v1268
    %1352 = vmatpush1.msra.mxu0 %v1267
    %1353 = vmatprep.subr.mxu0 %v1272
    %1354 = vmatpush1.msra.mxu0 %v1271
    %1355 = vmatprep.subr.mxu0 %v1300
    %1356 = vmatpush1.msra.mxu0 %v1299
    %1357 = vmatprep.subr.mxu0 %v1304
    %1358 = vmatpush1.msra.mxu0 %v1303
    %1359 = vmatprep.subr.mxu0 0.0
    %1360 = vmatpush1.msra.mxu0 0.0
    %1361 = vmatprep.subr.mxu0 0.0
    %1362 = vmatpush1.msra.mxu0 0.0
    %1363 = vmatprep.subr.mxu0 0.0
    %1364 = vmatpush1.msra.mxu0 0.0
    %1365 = vmatprep.subr.mxu0 0.0
    %1366 = vmatpush1.msra.mxu0 0.0
    %1367 = vmatprep.subr.mxu0 0.0
    %1368 = vmatpush1.msra.mxu0 0.0
    %1369 = vmatprep.subr.mxu0 0.0
    %1370 = vmatpush1.msra.mxu0 0.0
    %1371 = vmatprep.subr.mxu0 0.0
    %1372 = vmatpush1.msra.mxu0 0.0
    %1373 = vmatprep.subr.mxu0 0.0
    %1374 = vmatpush1.msra.mxu0 0.0
    %1375 = vmatprep.subr.mxu0 0.0
    %1376 = vmatpush1.msra.mxu0 0.0
    %1377 = vmatprep.subr.mxu0 0.0
    %1378 = vmatpush1.msra.mxu0 0.0
    %1379 = vmatprep.subr.mxu0 0.0
    %1380 = vmatpush1.msra.mxu0 0.0
    %1381 = vmatprep.subr.mxu0 0.0
    %1382 = vmatpush1.msra.mxu0 0.0
    %1383 = vmatprep.subr.mxu0 0.0
    %1384 = vmatpush1.msra.mxu0 0.0
    %1385 = vmatprep.subr.mxu0 0.0
    %1386 = vmatpush1.msra.mxu0 0.0
    %1387 = vmatprep.mubr.f32.mxu0 %v1318
    %1388 = vmatmul.mubr.f32.gmra.mrb[0].mxu0 %v1036
    %v1389 = vpop.f32.mrb[0].mxu0
    %v1390 = vadd.f32 %v1310, %v1389
    %v1391 = vpop.f32.mrb[0].mxu0
    %v1392 = vadd.f32 %v1310, %v1391
    %1393 = vmatprep.mubr.f32.mxu0 %v1321
    %1394 = vmatmul.mubr.f32.gmra.mrb[0].mxu0 %v1038
    %v1395 = vpop.f32.mrb[0].mxu0
    %v1396 = vadd.f32 %v1315, %v1395
    %v1397 = vpop.f32.mrb[0].mxu0
    %v1398 = vadd.f32 %v1315, %v1397
    %1399 = vdwg.mxu0
    %1400 = vmatprep.subr.mxu0 %v1070
    %1401 = vmatpush1.msra.mxu0 %v1069
    %1402 = vmatprep.subr.mxu0 %v1074
    %1403 = vmatpush1.msra.mxu0 %v1073
    %1404 = vmatprep.subr.mxu0 %v1102
    %1405 = vmatpush1.msra.mxu0 %v1101
    %1406 = vmatprep.subr.mxu0 %v1106
    %1407 = vmatpush1.msra.mxu0 %v1105
    %1408 = vmatprep.subr.mxu0 %v1134
    %1409 = vmatpush1.msra.mxu0 %v1133
    %1410 = vmatprep.subr.mxu0 %v1138
    %1411 = vmatpush1.msra.mxu0 %v1137
    %1412 = vmatprep.subr.mxu0 %v1166
    %1413 = vmatpush1.msra.mxu0 %v1165
    %1414 = vmatprep.subr.mxu0 %v1170
    %1415 = vmatpush1.msra.mxu0 %v1169
    %1416 = vmatprep.subr.mxu0 %v1174
    %1417 = vmatpush1.msra.mxu0 %v1173
    %1418 = vmatprep.subr.mxu0 %v1178
    %1419 = vmatpush1.msra.mxu0 %v1177
    %1420 = vmatprep.subr.mxu0 %v1206
    %1421 = vmatpush1.msra.mxu0 %v1205
    %1422 = vmatprep.subr.mxu0 %v1210
    %1423 = vmatpush1.msra.mxu0 %v1209
    %1424 = vmatprep.subr.mxu0 %v1238
    %1425 = vmatpush1.msra.mxu0 %v1237
    %1426 = vmatprep.subr.mxu0 %v1242
    %1427 = vmatpush1.msra.mxu0 %v1241
    %1428 = vmatprep.subr.mxu0 %v1270
    %1429 = vmatpush1.msra.mxu0 %v1269
    %1430 = vmatprep.subr.mxu0 %v1274
    %1431 = vmatpush1.msra.mxu0 %v1273
    %1432 = vmatprep.subr.mxu0 %v1302
    %1433 = vmatpush1.msra.mxu0 %v1301
    %1434 = vmatprep.subr.mxu0 %v1306
    %1435 = vmatpush1.msra.mxu0 %v1305
    %1436 = vmatprep.subr.mxu0 0.0
    %1437 = vmatpush1.msra.mxu0 0.0
    %1438 = vmatprep.subr.mxu0 0.0
    %1439 = vmatpush1.msra.mxu0 0.0
    %1440 = vmatprep.subr.mxu0 0.0
    %1441 = vmatpush1.msra.mxu0 0.0
    %1442 = vmatprep.subr.mxu0 0.0
    %1443 = vmatpush1.msra.mxu0 0.0
    %1444 = vmatprep.subr.mxu0 0.0
    %1445 = vmatpush1.msra.mxu0 0.0
    %1446 = vmatprep.subr.mxu0 0.0
    %1447 = vmatpush1.msra.mxu0 0.0
    %1448 = vmatprep.subr.mxu0 0.0
    %1449 = vmatpush1.msra.mxu0 0.0
    %1450 = vmatprep.subr.mxu0 0.0
    %1451 = vmatpush1.msra.mxu0 0.0
    %1452 = vmatprep.subr.mxu0 0.0
    %1453 = vmatpush1.msra.mxu0 0.0
    %1454 = vmatprep.subr.mxu0 0.0
    %1455 = vmatpush1.msra.mxu0 0.0
    %1456 = vmatprep.subr.mxu0 0.0
    %1457 = vmatpush1.msra.mxu0 0.0
    %1458 = vmatprep.subr.mxu0 0.0
    %1459 = vmatpush1.msra.mxu0 0.0
    %1460 = vmatprep.subr.mxu0 0.0
    %1461 = vmatpush1.msra.mxu0 0.0
    %1462 = vmatprep.subr.mxu0 0.0
    %1463 = vmatpush1.msra.mxu0 0.0
    %1464 = vmatprep.mubr.f32.mxu0 %v1318
    %1465 = vmatmul.mubr.f32.gmra.mrb[0].mxu0 %v1036
    %v1466 = vpop.f32.mrb[0].mxu0
    %v1467 = vadd.f32 %v1310, %v1466
    %v1468 = vpop.f32.mrb[0].mxu0
    %v1469 = vadd.f32 %v1310, %v1468
    %1470 = vmatprep.mubr.f32.mxu0 %v1321
    %1471 = vmatmul.mubr.f32.gmra.mrb[0].mxu0 %v1038
    %v1472 = vpop.f32.mrb[0].mxu0
    %v1473 = vadd.f32 %v1315, %v1472
    %v1474 = vpop.f32.mrb[0].mxu0
    %v1475 = vadd.f32 %v1315, %v1474
    %1476 = vdwg.mxu0
    %v1477 = vadd.f32 %v1390, %v1027
    %v1478 = vadd.f32 %v1392, %v1028
    %v1479 = vadd.f32 %v1467, %v1029
    %v1480 = vadd.f32 %v1469, %v1030
    %v1481 = vadd.f32 %v1396, %v1031
    %v1482 = vadd.f32 %v1398, %v1032
    %v1483 = vadd.f32 %v1473, %v1033
    %v1484 = vadd.f32 %v1475, %v1034
    %v1485 = vmax.f32 %v1477, 0.0
    %v1486 = vmax.f32 %v1478, 0.0
    %v1487 = vmax.f32 %v1479, 0.0
    %v1488 = vmax.f32 %v1480, 0.0
    %v1489 = vmax.f32 %v1481, 0.0
    %v1490 = vmax.f32 %v1482, 0.0
    %v1491 = vmax.f32 %v1483, 0.0
    %v1492 = vmax.f32 %v1484, 0.0
    %s1493 = scalar_lea.vmem %s5, 64
    %v1494 = vld [vmem:[%s1493] sm:$0xff]
    %v1495 = vld [vmem:[%s1493 + $0x8] sm:$0xff]
    %v1496 = vld [vmem:[%s1493 + $0x10] sm:$0xff]
    %v1497 = vld [vmem:[%s1493 + $0x18] sm:$0xff]
    %s1498 = scalar_lea.vmem %s6, 32
    %v1499 = vld [vmem:[%s1498] sm:$0xff]
    %v1500 = vld [vmem:[%s1498 + $0x8] sm:$0xff]
    %1501 = vrot.lane.b32.xlu0 %v1485, 11
    %v1502 = vpop.permute.xlu0 %1501
    %1503 = vrot.lane.b32.xlu0 %v1489, 11
    %v1504 = vpop.permute.xlu0 %1503
    %1505 = vrot.lane.b32.xlu0 %v1486, 11
    %v1506 = vpop.permute.xlu0 %1505
    %1507 = vrot.lane.b32.xlu0 %v1490, 11
    %v1508 = vpop.permute.xlu0 %1507
    %1509 = vrot.lane.b32.xlu0 %v1487, 11
    %v1510 = vpop.permute.xlu0 %1509
    %1511 = vrot.lane.b32.xlu0 %v1491, 11
    %v1512 = vpop.permute.xlu0 %1511
    %1513 = vrot.lane.b32.xlu0 %v1488, 11
    %v1514 = vpop.permute.xlu0 %1513
    %1515 = vrot.lane.b32.xlu0 %v1492, 11
    %v1516 = vpop.permute.xlu0 %1515
    %v1517 = vsel %vm123, %v1510, %v1514
    %v1518 = vsel %vm123, %v1512, %v1516
    %v1519 = vsel %vm123, %v1506, %v1510
    %v1520 = vsel %vm123, %v1508, %v1512
    %v1521 = vsel %vm123, %v1502, %v1506
    %v1522 = vsel %vm123, %v1504, %v1508
    %v1523 = vsel %vm123, %v1514, %v1502
    %v1524 = vsel %vm123, %v1516, %v1504
    %v1525 = vmul.f32 %v1523, %v131
    %v1526 = vmul.f32 %v1521, %v135
    %v1527 = vmul.f32 %v1519, %v139
    %v1528 = vmul.f32 %v1517, %v143
    %v1529 = vmul.f32 %v1524, %v131
    %v1530 = vmul.f32 %v1522, %v135
    %v1531 = vmul.f32 %v1520, %v139
    %v1532 = vmul.f32 %v1518, %v143
    %1533 = vrot.lane.b32.xlu0 %v1485, 10
    %v1534 = vpop.permute.xlu0 %1533
    %1535 = vrot.lane.b32.xlu0 %v1489, 10
    %v1536 = vpop.permute.xlu0 %1535
    %1537 = vrot.lane.b32.xlu0 %v1486, 10
    %v1538 = vpop.permute.xlu0 %1537
    %1539 = vrot.lane.b32.xlu0 %v1490, 10
    %v1540 = vpop.permute.xlu0 %1539
    %1541 = vrot.lane.b32.xlu0 %v1487, 10
    %v1542 = vpop.permute.xlu0 %1541
    %1543 = vrot.lane.b32.xlu0 %v1491, 10
    %v1544 = vpop.permute.xlu0 %1543
    %1545 = vrot.lane.b32.xlu0 %v1488, 10
    %v1546 = vpop.permute.xlu0 %1545
    %1547 = vrot.lane.b32.xlu0 %v1492, 10
    %v1548 = vpop.permute.xlu0 %1547
    %v1549 = vsel %vm156, %v1542, %v1546
    %v1550 = vsel %vm156, %v1544, %v1548
    %v1551 = vsel %vm156, %v1538, %v1542
    %v1552 = vsel %vm156, %v1540, %v1544
    %v1553 = vsel %vm156, %v1534, %v1538
    %v1554 = vsel %vm156, %v1536, %v1540
    %v1555 = vsel %vm156, %v1546, %v1534
    %v1556 = vsel %vm156, %v1548, %v1536
    %v1557 = vmul.f32 %v1555, %v164
    %v1558 = vmul.f32 %v1553, %v168
    %v1559 = vmul.f32 %v1551, %v172
    %v1560 = vmul.f32 %v1549, %v176
    %v1561 = vmul.f32 %v1556, %v164
    %v1562 = vmul.f32 %v1554, %v168
    %v1563 = vmul.f32 %v1552, %v172
    %v1564 = vmul.f32 %v1550, %v176
    %1565 = vrot.lane.b32.xlu0 %v1485, 9
    %v1566 = vpop.permute.xlu0 %1565
    %1567 = vrot.lane.b32.xlu0 %v1489, 9
    %v1568 = vpop.permute.xlu0 %1567
    %1569 = vrot.lane.b32.xlu0 %v1486, 9
    %v1570 = vpop.permute.xlu0 %1569
    %1571 = vrot.lane.b32.xlu0 %v1490, 9
    %v1572 = vpop.permute.xlu0 %1571
    %1573 = vrot.lane.b32.xlu0 %v1487, 9
    %v1574 = vpop.permute.xlu0 %1573
    %1575 = vrot.lane.b32.xlu0 %v1491, 9
    %v1576 = vpop.permute.xlu0 %1575
    %1577 = vrot.lane.b32.xlu0 %v1488, 9
    %v1578 = vpop.permute.xlu0 %1577
    %1579 = vrot.lane.b32.xlu0 %v1492, 9
    %v1580 = vpop.permute.xlu0 %1579
    %v1581 = vsel %vm189, %v1574, %v1578
    %v1582 = vsel %vm189, %v1576, %v1580
    %v1583 = vsel %vm189, %v1570, %v1574
    %v1584 = vsel %vm189, %v1572, %v1576
    %v1585 = vsel %vm189, %v1566, %v1570
    %v1586 = vsel %vm189, %v1568, %v1572
    %v1587 = vsel %vm189, %v1578, %v1566
    %v1588 = vsel %vm189, %v1580, %v1568
    %v1589 = vmul.f32 %v1587, %v197
    %v1590 = vmul.f32 %v1585, %v201
    %v1591 = vmul.f32 %v1583, %v205
    %v1592 = vmul.f32 %v1581, %v209
    %v1593 = vmul.f32 %v1588, %v197
    %v1594 = vmul.f32 %v1586, %v201
    %v1595 = vmul.f32 %v1584, %v205
    %v1596 = vmul.f32 %v1582, %v209
    %1597 = vrot.lane.b32.xlu0 %v1485, 1
    %v1598 = vpop.permute.xlu0 %1597
    %1599 = vrot.lane.b32.xlu0 %v1489, 1
    %v1600 = vpop.permute.xlu0 %1599
    %1601 = vrot.lane.b32.xlu0 %v1486, 1
    %v1602 = vpop.permute.xlu0 %1601
    %1603 = vrot.lane.b32.xlu0 %v1490, 1
    %v1604 = vpop.permute.xlu0 %1603
    %1605 = vrot.lane.b32.xlu0 %v1487, 1
    %v1606 = vpop.permute.xlu0 %1605
    %1607 = vrot.lane.b32.xlu0 %v1491, 1
    %v1608 = vpop.permute.xlu0 %1607
    %1609 = vrot.lane.b32.xlu0 %v1488, 1
    %v1610 = vpop.permute.xlu0 %1609
    %1611 = vrot.lane.b32.xlu0 %v1492, 1
    %v1612 = vpop.permute.xlu0 %1611
    %v1613 = vsel %vm222, %v1606, %v1610
    %v1614 = vsel %vm222, %v1608, %v1612
    %v1615 = vsel %vm222, %v1602, %v1606
    %v1616 = vsel %vm222, %v1604, %v1608
    %v1617 = vsel %vm222, %v1598, %v1602
    %v1618 = vsel %vm222, %v1600, %v1604
    %v1619 = vsel %vm222, %v1610, %v1598
    %v1620 = vsel %vm222, %v1612, %v1600
    %v1621 = vmul.f32 %v1619, %v230
    %v1622 = vmul.f32 %v1617, %v234
    %v1623 = vmul.f32 %v1615, %v238
    %v1624 = vmul.f32 %v1613, %v242
    %v1625 = vmul.f32 %v1620, %v230
    %v1626 = vmul.f32 %v1618, %v234
    %v1627 = vmul.f32 %v1616, %v238
    %v1628 = vmul.f32 %v1614, %v242
    %v1629 = vmul.f32 %v1485, %v250
    %v1630 = vmul.f32 %v1486, %v254
    %v1631 = vmul.f32 %v1487, %v258
    %v1632 = vmul.f32 %v1488, %v262
    %v1633 = vmul.f32 %v1489, %v250
    %v1634 = vmul.f32 %v1490, %v254
    %v1635 = vmul.f32 %v1491, %v258
    %v1636 = vmul.f32 %v1492, %v262
    %1637 = vrot.lane.b32.xlu0 %v1485, 127
    %v1638 = vpop.permute.xlu0 %1637
    %1639 = vrot.lane.b32.xlu0 %v1489, 127
    %v1640 = vpop.permute.xlu0 %1639
    %1641 = vrot.lane.b32.xlu0 %v1486, 127
    %v1642 = vpop.permute.xlu0 %1641
    %1643 = vrot.lane.b32.xlu0 %v1490, 127
    %v1644 = vpop.permute.xlu0 %1643
    %1645 = vrot.lane.b32.xlu0 %v1487, 127
    %v1646 = vpop.permute.xlu0 %1645
    %1647 = vrot.lane.b32.xlu0 %v1491, 127
    %v1648 = vpop.permute.xlu0 %1647
    %1649 = vrot.lane.b32.xlu0 %v1488, 127
    %v1650 = vpop.permute.xlu0 %1649
    %1651 = vrot.lane.b32.xlu0 %v1492, 127
    %v1652 = vpop.permute.xlu0 %1651
    %v1653 = vsel %vm275, %v1646, %v1650
    %v1654 = vsel %vm275, %v1648, %v1652
    %v1655 = vsel %vm275, %v1642, %v1646
    %v1656 = vsel %vm275, %v1644, %v1648
    %v1657 = vsel %vm275, %v1638, %v1642
    %v1658 = vsel %vm275, %v1640, %v1644
    %v1659 = vsel %vm275, %v1650, %v1638
    %v1660 = vsel %vm275, %v1652, %v1640
    %v1661 = vmul.f32 %v1657, %v283
    %v1662 = vmul.f32 %v1655, %v287
    %v1663 = vmul.f32 %v1653, %v291
    %v1664 = vmul.f32 %v1659, %v295
    %v1665 = vmul.f32 %v1658, %v283
    %v1666 = vmul.f32 %v1656, %v287
    %v1667 = vmul.f32 %v1654, %v291
    %v1668 = vmul.f32 %v1660, %v295
    %1669 = vrot.lane.b32.xlu0 %v1485, 119
    %v1670 = vpop.permute.xlu0 %1669
    %1671 = vrot.lane.b32.xlu0 %v1489, 119
    %v1672 = vpop.permute.xlu0 %1671
    %1673 = vrot.lane.b32.xlu0 %v1486, 119
    %v1674 = vpop.permute.xlu0 %1673
    %1675 = vrot.lane.b32.xlu0 %v1490, 119
    %v1676 = vpop.permute.xlu0 %1675
    %1677 = vrot.lane.b32.xlu0 %v1487, 119
    %v1678 = vpop.permute.xlu0 %1677
    %1679 = vrot.lane.b32.xlu0 %v1491, 119
    %v1680 = vpop.permute.xlu0 %1679
    %1681 = vrot.lane.b32.xlu0 %v1488, 119
    %v1682 = vpop.permute.xlu0 %1681
    %1683 = vrot.lane.b32.xlu0 %v1492, 119
    %v1684 = vpop.permute.xlu0 %1683
    %v1685 = vsel %vm308, %v1678, %v1682
    %v1686 = vsel %vm308, %v1680, %v1684
    %v1687 = vsel %vm308, %v1674, %v1678
    %v1688 = vsel %vm308, %v1676, %v1680
    %v1689 = vsel %vm308, %v1670, %v1674
    %v1690 = vsel %vm308, %v1672, %v1676
    %v1691 = vsel %vm308, %v1682, %v1670
    %v1692 = vsel %vm308, %v1684, %v1672
    %v1693 = vmul.f32 %v1689, %v316
    %v1694 = vmul.f32 %v1687, %v320
    %v1695 = vmul.f32 %v1685, %v324
    %v1696 = vmul.f32 %v1691, %v328
    %v1697 = vmul.f32 %v1690, %v316
    %v1698 = vmul.f32 %v1688, %v320
    %v1699 = vmul.f32 %v1686, %v324
    %v1700 = vmul.f32 %v1692, %v328
    %1701 = vrot.lane.b32.xlu0 %v1485, 118
    %v1702 = vpop.permute.xlu0 %1701
    %1703 = vrot.lane.b32.xlu0 %v1489, 118
    %v1704 = vpop.permute.xlu0 %1703
    %1705 = vrot.lane.b32.xlu0 %v1486, 118
    %v1706 = vpop.permute.xlu0 %1705
    %1707 = vrot.lane.b32.xlu0 %v1490, 118
    %v1708 = vpop.permute.xlu0 %1707
    %1709 = vrot.lane.b32.xlu0 %v1487, 118
    %v1710 = vpop.permute.xlu0 %1709
    %1711 = vrot.lane.b32.xlu0 %v1491, 118
    %v1712 = vpop.permute.xlu0 %1711
    %1713 = vrot.lane.b32.xlu0 %v1488, 118
    %v1714 = vpop.permute.xlu0 %1713
    %1715 = vrot.lane.b32.xlu0 %v1492, 118
    %v1716 = vpop.permute.xlu0 %1715
    %v1717 = vsel %vm341, %v1710, %v1714
    %v1718 = vsel %vm341, %v1712, %v1716
    %v1719 = vsel %vm341, %v1706, %v1710
    %v1720 = vsel %vm341, %v1708, %v1712
    %v1721 = vsel %vm341, %v1702, %v1706
    %v1722 = vsel %vm341, %v1704, %v1708
    %v1723 = vsel %vm341, %v1714, %v1702
    %v1724 = vsel %vm341, %v1716, %v1704
    %v1725 = vmul.f32 %v1721, %v349
    %v1726 = vmul.f32 %v1719, %v353
    %v1727 = vmul.f32 %v1717, %v357
    %v1728 = vmul.f32 %v1723, %v361
    %v1729 = vmul.f32 %v1722, %v349
    %v1730 = vmul.f32 %v1720, %v353
    %v1731 = vmul.f32 %v1718, %v357
    %v1732 = vmul.f32 %v1724, %v361
    %1733 = vrot.lane.b32.xlu0 %v1485, 117
    %v1734 = vpop.permute.xlu0 %1733
    %1735 = vrot.lane.b32.xlu0 %v1489, 117
    %v1736 = vpop.permute.xlu0 %1735
    %1737 = vrot.lane.b32.xlu0 %v1486, 117
    %v1738 = vpop.permute.xlu0 %1737
    %1739 = vrot.lane.b32.xlu0 %v1490, 117
    %v1740 = vpop.permute.xlu0 %1739
    %1741 = vrot.lane.b32.xlu0 %v1487, 117
    %v1742 = vpop.permute.xlu0 %1741
    %1743 = vrot.lane.b32.xlu0 %v1491, 117
    %v1744 = vpop.permute.xlu0 %1743
    %1745 = vrot.lane.b32.xlu0 %v1488, 117
    %v1746 = vpop.permute.xlu0 %1745
    %1747 = vrot.lane.b32.xlu0 %v1492, 117
    %v1748 = vpop.permute.xlu0 %1747
    %v1749 = vsel %vm374, %v1742, %v1746
    %v1750 = vsel %vm374, %v1744, %v1748
    %v1751 = vsel %vm374, %v1738, %v1742
    %v1752 = vsel %vm374, %v1740, %v1744
    %v1753 = vsel %vm374, %v1734, %v1738
    %v1754 = vsel %vm374, %v1736, %v1740
    %v1755 = vsel %vm374, %v1746, %v1734
    %v1756 = vsel %vm374, %v1748, %v1736
    %v1757 = vmul.f32 %v1753, %v382
    %v1758 = vmul.f32 %v1751, %v386
    %v1759 = vmul.f32 %v1749, %v390
    %v1760 = vmul.f32 %v1755, %v394
    %v1761 = vmul.f32 %v1754, %v382
    %v1762 = vmul.f32 %v1752, %v386
    %v1763 = vmul.f32 %v1750, %v390
    %v1764 = vmul.f32 %v1756, %v394
    %1766 = vset.pattern.permute.xlu0 0
    %1767 = vperm.xlu0 %1766, %v1499
    %v1768 = vpop.permute.xlu0 %1767
    %1771 = vset.pattern.permute.xlu0 0
    %1772 = vperm.xlu0 %1771, %v1500
    %v1773 = vpop.permute.xlu0 %1772
    %v1776 = vsel %vm858, %v1495, 0
    %v1779 = vsel %vm858, %v1497, 0
    %1781 = vmatprep.subr.mxu0 %v1526
    %1782 = vmatpush1.msra.mxu0 %v1525
    %1783 = vmatprep.subr.mxu0 %v1530
    %1784 = vmatpush1.msra.mxu0 %v1529
    %1785 = vmatprep.subr.mxu0 %v1558
    %1786 = vmatpush1.msra.mxu0 %v1557
    %1787 = vmatprep.subr.mxu0 %v1562
    %1788 = vmatpush1.msra.mxu0 %v1561
    %1789 = vmatprep.subr.mxu0 %v1590
    %1790 = vmatpush1.msra.mxu0 %v1589
    %1791 = vmatprep.subr.mxu0 %v1594
    %1792 = vmatpush1.msra.mxu0 %v1593
    %1793 = vmatprep.subr.mxu0 %v1622
    %1794 = vmatpush1.msra.mxu0 %v1621
    %1795 = vmatprep.subr.mxu0 %v1626
    %1796 = vmatpush1.msra.mxu0 %v1625
    %1797 = vmatprep.subr.mxu0 %v1630
    %1798 = vmatpush1.msra.mxu0 %v1629
    %1799 = vmatprep.subr.mxu0 %v1634
    %1800 = vmatpush1.msra.mxu0 %v1633
    %1801 = vmatprep.subr.mxu0 %v1662
    %1802 = vmatpush1.msra.mxu0 %v1661
    %1803 = vmatprep.subr.mxu0 %v1666
    %1804 = vmatpush1.msra.mxu0 %v1665
    %1805 = vmatprep.subr.mxu0 %v1694
    %1806 = vmatpush1.msra.mxu0 %v1693
    %1807 = vmatprep.subr.mxu0 %v1698
    %1808 = vmatpush1.msra.mxu0 %v1697
    %1809 = vmatprep.subr.mxu0 %v1726
    %1810 = vmatpush1.msra.mxu0 %v1725
    %1811 = vmatprep.subr.mxu0 %v1730
    %1812 = vmatpush1.msra.mxu0 %v1729
    %1813 = vmatprep.subr.mxu0 %v1758
    %1814 = vmatpush1.msra.mxu0 %v1757
    %1815 = vmatprep.subr.mxu0 %v1762
    %1816 = vmatpush1.msra.mxu0 %v1761
    %1817 = vmatprep.subr.mxu0 0.0
    %1818 = vmatpush1.msra.mxu0 0.0
    %1819 = vmatprep.subr.mxu0 0.0
    %1820 = vmatpush1.msra.mxu0 0.0
    %1821 = vmatprep.subr.mxu0 0.0
    %1822 = vmatpush1.msra.mxu0 0.0
    %1823 = vmatprep.subr.mxu0 0.0
    %1824 = vmatpush1.msra.mxu0 0.0
    %1825 = vmatprep.subr.mxu0 0.0
    %1826 = vmatpush1.msra.mxu0 0.0
    %1827 = vmatprep.subr.mxu0 0.0
    %1828 = vmatpush1.msra.mxu0 0.0
    %1829 = vmatprep.subr.mxu0 0.0
    %1830 = vmatpush1.msra.mxu0 0.0
    %1831 = vmatprep.subr.mxu0 0.0
    %1832 = vmatpush1.msra.mxu0 0.0
    %1833 = vmatprep.subr.mxu0 0.0
    %1834 = vmatpush1.msra.mxu0 0.0
    %1835 = vmatprep.subr.mxu0 0.0
    %1836 = vmatpush1.msra.mxu0 0.0
    %1837 = vmatprep.subr.mxu0 0.0
    %1838 = vmatpush1.msra.mxu0 0.0
    %1839 = vmatprep.subr.mxu0 0.0
    %1840 = vmatpush1.msra.mxu0 0.0
    %1841 = vmatprep.subr.mxu0 0.0
    %1842 = vmatpush1.msra.mxu0 0.0
    %1843 = vmatprep.subr.mxu0 0.0
    %1844 = vmatpush1.msra.mxu0 0.0
    %1845 = vmatprep.mubr.f32.mxu0 %v1776
    %1846 = vmatmul.mubr.f32.gmra.mrb[0].mxu0 %v1494
    %v1847 = vpop.f32.mrb[0].mxu0
    %v1848 = vadd.f32 %v1768, %v1847
    %v1849 = vpop.f32.mrb[0].mxu0
    %v1850 = vadd.f32 %v1768, %v1849
    %1851 = vmatprep.mubr.f32.mxu0 %v1779
    %1852 = vmatmul.mubr.f32.gmra.mrb[0].mxu0 %v1496
    %v1853 = vpop.f32.mrb[0].mxu0
    %v1854 = vadd.f32 %v1773, %v1853
    %v1855 = vpop.f32.mrb[0].mxu0
    %v1856 = vadd.f32 %v1773, %v1855
    %1857 = vdwg.mxu0
    %1858 = vmatprep.subr.mxu0 %v1528
    %1859 = vmatpush1.msra.mxu0 %v1527
    %1860 = vmatprep.subr.mxu0 %v1532
    %1861 = vmatpush1.msra.mxu0 %v1531
    %1862 = vmatprep.subr.mxu0 %v1560
    %1863 = vmatpush1.msra.mxu0 %v1559
    %1864 = vmatprep.subr.mxu0 %v1564
    %1865 = vmatpush1.msra.mxu0 %v1563
    %1866 = vmatprep.subr.mxu0 %v1592
    %1867 = vmatpush1.msra.mxu0 %v1591
    %1868 = vmatprep.subr.mxu0 %v1596
    %1869 = vmatpush1.msra.mxu0 %v1595
    %1870 = vmatprep.subr.mxu0 %v1624
    %1871 = vmatpush1.msra.mxu0 %v1623
    %1872 = vmatprep.subr.mxu0 %v1628
    %1873 = vmatpush1.msra.mxu0 %v1627
    %1874 = vmatprep.subr.mxu0 %v1632
    %1875 = vmatpush1.msra.mxu0 %v1631
    %1876 = vmatprep.subr.mxu0 %v1636
    %1877 = vmatpush1.msra.mxu0 %v1635
    %1878 = vmatprep.subr.mxu0 %v1664
    %1879 = vmatpush1.msra.mxu0 %v1663
    %1880 = vmatprep.subr.mxu0 %v1668
    %1881 = vmatpush1.msra.mxu0 %v1667
    %1882 = vmatprep.subr.mxu0 %v1696
    %1883 = vmatpush1.msra.mxu0 %v1695
    %1884 = vmatprep.subr.mxu0 %v1700
    %1885 = vmatpush1.msra.mxu0 %v1699
    %1886 = vmatprep.subr.mxu0 %v1728
    %1887 = vmatpush1.msra.mxu0 %v1727
    %1888 = vmatprep.subr.mxu0 %v1732
    %1889 = vmatpush1.msra.mxu0 %v1731
    %1890 = vmatprep.subr.mxu0 %v1760
    %1891 = vmatpush1.msra.mxu0 %v1759
    %1892 = vmatprep.subr.mxu0 %v1764
    %1893 = vmatpush1.msra.mxu0 %v1763
    %1894 = vmatprep.subr.mxu0 0.0
    %1895 = vmatpush1.msra.mxu0 0.0
    %1896 = vmatprep.subr.mxu0 0.0
    %1897 = vmatpush1.msra.mxu0 0.0
    %1898 = vmatprep.subr.mxu0 0.0
    %1899 = vmatpush1.msra.mxu0 0.0
    %1900 = vmatprep.subr.mxu0 0.0
    %1901 = vmatpush1.msra.mxu0 0.0
    %1902 = vmatprep.subr.mxu0 0.0
    %1903 = vmatpush1.msra.mxu0 0.0
    %1904 = vmatprep.subr.mxu0 0.0
    %1905 = vmatpush1.msra.mxu0 0.0
    %1906 = vmatprep.subr.mxu0 0.0
    %1907 = vmatpush1.msra.mxu0 0.0
    %1908 = vmatprep.subr.mxu0 0.0
    %1909 = vmatpush1.msra.mxu0 0.0
    %1910 = vmatprep.subr.mxu0 0.0
    %1911 = vmatpush1.msra.mxu0 0.0
    %1912 = vmatprep.subr.mxu0 0.0
    %1913 = vmatpush1.msra.mxu0 0.0
    %1914 = vmatprep.subr.mxu0 0.0
    %1915 = vmatpush1.msra.mxu0 0.0
    %1916 = vmatprep.subr.mxu0 0.0
    %1917 = vmatpush1.msra.mxu0 0.0
    %1918 = vmatprep.subr.mxu0 0.0
    %1919 = vmatpush1.msra.mxu0 0.0
    %1920 = vmatprep.subr.mxu0 0.0
    %1921 = vmatpush1.msra.mxu0 0.0
    %1922 = vmatprep.mubr.f32.mxu0 %v1776
    %1923 = vmatmul.mubr.f32.gmra.mrb[0].mxu0 %v1494
    %v1924 = vpop.f32.mrb[0].mxu0
    %v1925 = vadd.f32 %v1768, %v1924
    %v1926 = vpop.f32.mrb[0].mxu0
    %v1927 = vadd.f32 %v1768, %v1926
    %1928 = vmatprep.mubr.f32.mxu0 %v1779
    %1929 = vmatmul.mubr.f32.gmra.mrb[0].mxu0 %v1496
    %v1930 = vpop.f32.mrb[0].mxu0
    %v1931 = vadd.f32 %v1773, %v1930
    %v1932 = vpop.f32.mrb[0].mxu0
    %v1933 = vadd.f32 %v1773, %v1932
    %1934 = vdwg.mxu0
    %v1935 = vadd.f32 %v1848, %v1485
    %v1936 = vadd.f32 %v1850, %v1486
    %v1937 = vadd.f32 %v1925, %v1487
    %v1938 = vadd.f32 %v1927, %v1488
    %v1939 = vadd.f32 %v1854, %v1489
    %v1940 = vadd.f32 %v1856, %v1490
    %v1941 = vadd.f32 %v1931, %v1491
    %v1942 = vadd.f32 %v1933, %v1492
    %v1943 = vmax.f32 %v1935, 0.0
    %v1944 = vmax.f32 %v1936, 0.0
    %v1945 = vmax.f32 %v1937, 0.0
    %v1946 = vmax.f32 %v1938, 0.0
    %v1947 = vmax.f32 %v1939, 0.0
    %v1948 = vmax.f32 %v1940, 0.0
    %v1949 = vmax.f32 %v1941, 0.0
    %v1950 = vmax.f32 %v1942, 0.0
    %v1951 = vld [vmem:[%s7] sm:$0xff]
    %v1952 = vld [vmem:[%s8] sm:$0xff]
    %1954 = vset.pattern.permute.xlu0 0
    %1955 = vperm.xlu0 %1954, %v1952
    %v1956 = vpop.permute.xlu0 %1955
    %v1959 = vsel %vm858, %v1951, 0
    %1961 = vmatprep.subr.mxu0 %v1944
    %1962 = vmatpush1.msra.mxu0 %v1943
    %1963 = vmatprep.subr.mxu0 %v1948
    %1964 = vmatpush1.msra.mxu0 %v1947
    %1965 = vmatprep.subr.mxu0 0.0
    %1966 = vmatpush1.msra.mxu0 0.0
    %1967 = vmatprep.subr.mxu0 0.0
    %1968 = vmatpush1.msra.mxu0 0.0
    %1969 = vmatprep.subr.mxu0 0.0
    %1970 = vmatpush1.msra.mxu0 0.0
    %1971 = vmatprep.subr.mxu0 0.0
    %1972 = vmatpush1.msra.mxu0 0.0
    %1973 = vmatprep.subr.mxu0 0.0
    %1974 = vmatpush1.msra.mxu0 0.0
    %1975 = vmatprep.subr.mxu0 0.0
    %1976 = vmatpush1.msra.mxu0 0.0
    %1977 = vmatprep.subr.mxu0 0.0
    %1978 = vmatpush1.msra.mxu0 0.0
    %1979 = vmatprep.subr.mxu0 0.0
    %1980 = vmatpush1.msra.mxu0 0.0
    %1981 = vmatprep.subr.mxu0 0.0
    %1982 = vmatpush1.msra.mxu0 0.0
    %1983 = vmatprep.subr.mxu0 0.0
    %1984 = vmatpush1.msra.mxu0 0.0
    %1985 = vmatprep.subr.mxu0 0.0
    %1986 = vmatpush1.msra.mxu0 0.0
    %1987 = vmatprep.subr.mxu0 0.0
    %1988 = vmatpush1.msra.mxu0 0.0
    %1989 = vmatprep.subr.mxu0 0.0
    %1990 = vmatpush1.msra.mxu0 0.0
    %1991 = vmatprep.subr.mxu0 0.0
    %1992 = vmatpush1.msra.mxu0 0.0
    %1993 = vmatprep.subr.mxu0 0.0
    %1994 = vmatpush1.msra.mxu0 0.0
    %1995 = vmatprep.subr.mxu0 0.0
    %1996 = vmatpush1.msra.mxu0 0.0
    %1997 = vmatprep.subr.mxu0 0.0
    %1998 = vmatpush1.msra.mxu0 0.0
    %1999 = vmatprep.subr.mxu0 0.0
    %2000 = vmatpush1.msra.mxu0 0.0
    %2001 = vmatprep.subr.mxu0 0.0
    %2002 = vmatpush1.msra.mxu0 0.0
    %2003 = vmatprep.subr.mxu0 0.0
    %2004 = vmatpush1.msra.mxu0 0.0
    %2005 = vmatprep.subr.mxu0 0.0
    %2006 = vmatpush1.msra.mxu0 0.0
    %2007 = vmatprep.subr.mxu0 0.0
    %2008 = vmatpush1.msra.mxu0 0.0
    %2009 = vmatprep.subr.mxu0 0.0
    %2010 = vmatpush1.msra.mxu0 0.0
    %2011 = vmatprep.subr.mxu0 0.0
    %2012 = vmatpush1.msra.mxu0 0.0
    %2013 = vmatprep.subr.mxu0 0.0
    %2014 = vmatpush1.msra.mxu0 0.0
    %2015 = vmatprep.subr.mxu0 0.0
    %2016 = vmatpush1.msra.mxu0 0.0
    %2017 = vmatprep.subr.mxu0 0.0
    %2018 = vmatpush1.msra.mxu0 0.0
    %2019 = vmatprep.subr.mxu0 0.0
    %2020 = vmatpush1.msra.mxu0 0.0
    %2021 = vmatprep.subr.mxu0 0.0
    %2022 = vmatpush1.msra.mxu0 0.0
    %2023 = vmatprep.subr.mxu0 0.0
    %2024 = vmatpush1.msra.mxu0 0.0
    %2025 = vmatprep.mubr.f32.mxu0 0.0
    %2026 = vmatmul.mubr.f32.gmra.mrb[0].mxu0 %v1959
    %v2027 = vpop.f32.mrb[0].mxu0
    %v2028 = vadd.f32 %v1956, %v2027
    %v2029 = vpop.f32.mrb[0].mxu0
    %v2030 = vadd.f32 %v1956, %v2029
    %2031 = vdwg.mxu0
    %2032 = vmatprep.subr.mxu0 %v1946
    %2033 = vmatpush1.msra.mxu0 %v1945
    %2034 = vmatprep.subr.mxu0 %v1950
    %2035 = vmatpush1.msra.mxu0 %v1949
    %2036 = vmatprep.subr.mxu0 0.0
    %2037 = vmatpush1.msra.mxu0 0.0
    %2038 = vmatprep.subr.mxu0 0.0
    %2039 = vmatpush1.msra.mxu0 0.0
    %2040 = vmatprep.subr.mxu0 0.0
    %2041 = vmatpush1.msra.mxu0 0.0
    %2042 = vmatprep.subr.mxu0 0.0
    %2043 = vmatpush1.msra.mxu0 0.0
    %2044 = vmatprep.subr.mxu0 0.0
    %2045 = vmatpush1.msra.mxu0 0.0
    %2046 = vmatprep.subr.mxu0 0.0
    %2047 = vmatpush1.msra.mxu0 0.0
    %2048 = vmatprep.subr.mxu0 0.0
    %2049 = vmatpush1.msra.mxu0 0.0
    %2050 = vmatprep.subr.mxu0 0.0
    %2051 = vmatpush1.msra.mxu0 0.0
    %2052 = vmatprep.subr.mxu0 0.0
    %2053 = vmatpush1.msra.mxu0 0.0
    %2054 = vmatprep.subr.mxu0 0.0
    %2055 = vmatpush1.msra.mxu0 0.0
    %2056 = vmatprep.subr.mxu0 0.0
    %2057 = vmatpush1.msra.mxu0 0.0
    %2058 = vmatprep.subr.mxu0 0.0
    %2059 = vmatpush1.msra.mxu0 0.0
    %2060 = vmatprep.subr.mxu0 0.0
    %2061 = vmatpush1.msra.mxu0 0.0
    %2062 = vmatprep.subr.mxu0 0.0
    %2063 = vmatpush1.msra.mxu0 0.0
    %2064 = vmatprep.subr.mxu0 0.0
    %2065 = vmatpush1.msra.mxu0 0.0
    %2066 = vmatprep.subr.mxu0 0.0
    %2067 = vmatpush1.msra.mxu0 0.0
    %2068 = vmatprep.subr.mxu0 0.0
    %2069 = vmatpush1.msra.mxu0 0.0
    %2070 = vmatprep.subr.mxu0 0.0
    %2071 = vmatpush1.msra.mxu0 0.0
    %2072 = vmatprep.subr.mxu0 0.0
    %2073 = vmatpush1.msra.mxu0 0.0
    %2074 = vmatprep.subr.mxu0 0.0
    %2075 = vmatpush1.msra.mxu0 0.0
    %2076 = vmatprep.subr.mxu0 0.0
    %2077 = vmatpush1.msra.mxu0 0.0
    %2078 = vmatprep.subr.mxu0 0.0
    %2079 = vmatpush1.msra.mxu0 0.0
    %2080 = vmatprep.subr.mxu0 0.0
    %2081 = vmatpush1.msra.mxu0 0.0
    %2082 = vmatprep.subr.mxu0 0.0
    %2083 = vmatpush1.msra.mxu0 0.0
    %2084 = vmatprep.subr.mxu0 0.0
    %2085 = vmatpush1.msra.mxu0 0.0
    %2086 = vmatprep.subr.mxu0 0.0
    %2087 = vmatpush1.msra.mxu0 0.0
    %2088 = vmatprep.subr.mxu0 0.0
    %2089 = vmatpush1.msra.mxu0 0.0
    %2090 = vmatprep.subr.mxu0 0.0
    %2091 = vmatpush1.msra.mxu0 0.0
    %2092 = vmatprep.subr.mxu0 0.0
    %2093 = vmatpush1.msra.mxu0 0.0
    %2094 = vmatprep.subr.mxu0 0.0
    %2095 = vmatpush1.msra.mxu0 0.0
    %2096 = vmatprep.mubr.f32.mxu0 0.0
    %2097 = vmatmul.mubr.f32.gmra.mrb[0].mxu0 %v1959
    %v2098 = vpop.f32.mrb[0].mxu0
    %v2099 = vadd.f32 %v1956, %v2098
    %v2100 = vpop.f32.mrb[0].mxu0
    %v2101 = vadd.f32 %v1956, %v2100
    %2102 = vdwg.mxu0
    %v2103 = vmax.f32 %v2028, 0.0
    %v2104 = vmax.f32 %v2030, 0.0
    %v2105 = vmax.f32 %v2099, 0.0
    %v2106 = vmax.f32 %v2101, 0.0
    %v2107 = vmul.f32 %v2103, %v250
    %v2108 = vmul.f32 %v2104, %v254
    %v2109 = vmul.f32 %v2105, %v258
    %v2110 = vmul.f32 %v2106, %v262
    %v2112 = vrot.slane %v2107, 1
    %v2114 = vrot.slane %v2107, 2
    %v2116 = vrot.slane %v2107, 3
    %v2118 = vrot.slane %v2107, 4
    %v2120 = vrot.slane %v2107, 5
    %v2122 = vrot.slane %v2107, 6
    %v2124 = vrot.slane %v2107, 7
    %v2126 = vld [vmem:[%s9] sm:$0xff]
    %v2127 = vld [vmem:[%s9 + $0x8] sm:$0xff]
    %v2128 = vld [vmem:[%s9 + $0x10] sm:$0xff]
    %v2129 = vld [vmem:[%s9 + $0x18] sm:$0xff]
    %v2130 = vld [vmem:[%s9 + $0x20] sm:$0xff]
    %v2131 = vld [vmem:[%s9 + $0x28] sm:$0xff]
    %v2132 = vld [vmem:[%s9 + $0x30] sm:$0xff]
    %v2133 = vld [vmem:[%s9 + $0x38] sm:$0xff]
    %v2134 = vld [vmem:[%s9 + $0x40] sm:$0xff]
    %v2135 = vld [vmem:[%s9 + $0x48] sm:$0xff]
    %v2136 = vld [vmem:[%s9 + $0x50] sm:$0xff]
    %v2137 = vld [vmem:[%s9 + $0x58] sm:$0xff]
    %v2138 = vld [vmem:[%s9 + $0x60] sm:$0xff]
    %v2139 = vld [vmem:[%s9 + $0x68] sm:$0xff]
    %v2140 = vld [vmem:[%s9 + $0x70] sm:$0xff]
    %v2141 = vld [vmem:[%s9 + $0x78] sm:$0xff]
    %v2142 = vld [vmem:[%s9 + $0x80] sm:$0xff]
    %v2143 = vld [vmem:[%s9 + $0x88] sm:$0xff]
    %v2144 = vld [vmem:[%s9 + $0x90] sm:$0xff]
    %v2145 = vld [vmem:[%s9 + $0x98] sm:$0xff]
    %v2146 = vld [vmem:[%s9 + $0xa0] sm:$0xff]
    %v2147 = vld [vmem:[%s9 + $0xa8] sm:$0xff]
    %v2148 = vld [vmem:[%s9 + $0xb0] sm:$0xff]
    %v2149 = vld [vmem:[%s9 + $0xb8] sm:$0xff]
    %v2150 = vld [vmem:[%s9 + $0xc0] sm:$0xff]
    %v2151 = vld [vmem:[%s9 + $0xc8] sm:$0xff]
    %v2152 = vld [vmem:[%s9 + $0xd0] sm:$0xff]
    %v2153 = vld [vmem:[%s9 + $0xd8] sm:$0xff]
    %v2154 = vld [vmem:[%s9 + $0xe0] sm:$0xff]
    %v2155 = vld [vmem:[%s9 + $0xe8] sm:$0xff]
    %v2156 = vld [vmem:[%s9 + $0xf0] sm:$0xff]
    %v2157 = vld [vmem:[%s9 + $0xf8] sm:$0xff]
    %v2158 = vld [vmem:[%s9 + $0x100] sm:$0xff]
    %v2159 = vld [vmem:[%s9 + $0x108] sm:$0xff]
    %v2160 = vld [vmem:[%s9 + $0x110] sm:$0xff]
    %v2161 = vld [vmem:[%s9 + $0x118] sm:$0xff]
    %v2162 = vld [vmem:[%s9 + $0x120] sm:$0xff]
    %v2163 = vld [vmem:[%s9 + $0x128] sm:$0xff]
    %v2164 = vld [vmem:[%s9 + $0x130] sm:$0xff]
    %v2165 = vld [vmem:[%s9 + $0x138] sm:$0xff]
    %v2166 = vld [vmem:[%s9 + $0x140] sm:$0xff]
    %v2167 = vld [vmem:[%s9 + $0x148] sm:$0xff]
    %v2168 = vld [vmem:[%s9 + $0x150] sm:$0xff]
    %v2169 = vld [vmem:[%s9 + $0x158] sm:$0xff]
    %v2170 = vld [vmem:[%s9 + $0x160] sm:$0xff]
    %v2171 = vld [vmem:[%s9 + $0x168] sm:$0xff]
    %v2172 = vld [vmem:[%s9 + $0x170] sm:$0xff]
    %v2173 = vld [vmem:[%s9 + $0x178] sm:$0xff]
    %v2174 = vld [vmem:[%s9 + $0x180] sm:$0xff]
    %v2175 = vld [vmem:[%s9 + $0x188] sm:$0xff]
    %v2176 = vld [vmem:[%s9 + $0x190] sm:$0xff]
    %v2177 = vld [vmem:[%s9 + $0x198] sm:$0xff]
    %v2178 = vld [vmem:[%s9 + $0x1a0] sm:$0xff]
    %v2179 = vld [vmem:[%s9 + $0x1a8] sm:$0xff]
    %v2180 = vld [vmem:[%s9 + $0x1b0] sm:$0xff]
    %v2181 = vld [vmem:[%s9 + $0x1b8] sm:$0xff]
    %v2182 = vld [vmem:[%s9 + $0x1c0] sm:$0xff]
    %v2183 = vld [vmem:[%s9 + $0x1c8] sm:$0xff]
    %v2184 = vld [vmem:[%s9 + $0x1d0] sm:$0xff]
    %v2185 = vld [vmem:[%s9 + $0x1d8] sm:$0xff]
    %v2186 = vld [vmem:[%s9 + $0x1e0] sm:$0xff]
    %v2187 = vld [vmem:[%s9 + $0x1e8] sm:$0xff]
    %v2188 = vld [vmem:[%s9 + $0x1f0] sm:$0xff]
    %v2189 = vld [vmem:[%s9 + $0x1f8] sm:$0xff]
    %v2190 = vld [vmem:[%s9 + $0x200] sm:$0xff]
    %v2191 = vld [vmem:[%s9 + $0x208] sm:$0xff]
    %v2192 = vld [vmem:[%s9 + $0x210] sm:$0xff]
    %v2193 = vld [vmem:[%s9 + $0x218] sm:$0xff]
    %v2194 = vld [vmem:[%s9 + $0x220] sm:$0xff]
    %v2195 = vld [vmem:[%s9 + $0x228] sm:$0xff]
    %v2196 = vld [vmem:[%s9 + $0x230] sm:$0xff]
    %v2197 = vld [vmem:[%s9 + $0x238] sm:$0xff]
    %v2198 = vld [vmem:[%s9 + $0x240] sm:$0xff]
    %v2199 = vld [vmem:[%s9 + $0x248] sm:$0xff]
    %v2200 = vld [vmem:[%s9 + $0x250] sm:$0xff]
    %v2201 = vld [vmem:[%s9 + $0x258] sm:$0xff]
    %v2202 = vld [vmem:[%s9 + $0x260] sm:$0xff]
    %v2203 = vld [vmem:[%s9 + $0x268] sm:$0xff]
    %v2204 = vld [vmem:[%s9 + $0x270] sm:$0xff]
    %v2205 = vld [vmem:[%s9 + $0x278] sm:$0xff]
    %v2206 = vld [vmem:[%s9 + $0x280] sm:$0xff]
    %v2207 = vld [vmem:[%s9 + $0x288] sm:$0xff]
    %v2208 = vld [vmem:[%s9 + $0x290] sm:$0xff]
    %v2209 = vld [vmem:[%s9 + $0x298] sm:$0xff]
    %v2210 = vld [vmem:[%s9 + $0x2a0] sm:$0xff]
    %v2211 = vld [vmem:[%s9 + $0x2a8] sm:$0xff]
    %v2212 = vld [vmem:[%s9 + $0x2b0] sm:$0xff]
    %v2213 = vld [vmem:[%s9 + $0x2b8] sm:$0xff]
    %v2214 = vld [vmem:[%s9 + $0x2c0] sm:$0xff]
    %v2215 = vld [vmem:[%s9 + $0x2c8] sm:$0xff]
    %v2216 = vld [vmem:[%s9 + $0x2d0] sm:$0xff]
    %v2217 = vld [vmem:[%s9 + $0x2d8] sm:$0xff]
    %v2218 = vld [vmem:[%s9 + $0x2e0] sm:$0xff]
    %v2219 = vld [vmem:[%s9 + $0x2e8] sm:$0xff]
    %v2220 = vld [vmem:[%s9 + $0x2f0] sm:$0xff]
    %v2221 = vld [vmem:[%s9 + $0x2f8] sm:$0xff]
    %v2222 = vld [vmem:[%s9 + $0x300] sm:$0xff]
    %v2223 = vld [vmem:[%s9 + $0x308] sm:$0xff]
    %v2224 = vld [vmem:[%s9 + $0x310] sm:$0xff]
    %v2225 = vld [vmem:[%s9 + $0x318] sm:$0xff]
    %v2226 = vld [vmem:[%s9 + $0x320] sm:$0xff]
    %v2227 = vld [vmem:[%s9 + $0x328] sm:$0xff]
    %v2228 = vld [vmem:[%s9 + $0x330] sm:$0xff]
    %v2229 = vld [vmem:[%s9 + $0x338] sm:$0xff]
    %v2230 = vld [vmem:[%s9 + $0x340] sm:$0xff]
    %v2231 = vld [vmem:[%s9 + $0x348] sm:$0xff]
    %v2232 = vld [vmem:[%s9 + $0x350] sm:$0xff]
    %v2233 = vld [vmem:[%s9 + $0x358] sm:$0xff]
    %v2234 = vld [vmem:[%s9 + $0x360] sm:$0xff]
    %v2235 = vld [vmem:[%s9 + $0x368] sm:$0xff]
    %v2236 = vld [vmem:[%s9 + $0x370] sm:$0xff]
    %v2237 = vld [vmem:[%s9 + $0x378] sm:$0xff]
    %v2238 = vld [vmem:[%s9 + $0x380] sm:$0xff]
    %v2239 = vld [vmem:[%s9 + $0x388] sm:$0xff]
    %v2240 = vld [vmem:[%s9 + $0x390] sm:$0xff]
    %v2241 = vld [vmem:[%s9 + $0x398] sm:$0xff]
    %v2242 = vld [vmem:[%s9 + $0x3a0] sm:$0xff]
    %v2243 = vld [vmem:[%s9 + $0x3a8] sm:$0xff]
    %v2244 = vld [vmem:[%s9 + $0x3b0] sm:$0xff]
    %v2245 = vld [vmem:[%s9 + $0x3b8] sm:$0xff]
    %v2246 = vld [vmem:[%s9 + $0x3c0] sm:$0xff]
    %v2247 = vld [vmem:[%s9 + $0x3c8] sm:$0xff]
    %v2248 = vld [vmem:[%s9 + $0x3d0] sm:$0xff]
    %v2249 = vld [vmem:[%s9 + $0x3d8] sm:$0xff]
    %v2250 = vld [vmem:[%s9 + $0x3e0] sm:$0xff]
    %v2251 = vld [vmem:[%s9 + $0x3e8] sm:$0xff]
    %v2252 = vld [vmem:[%s9 + $0x3f0] sm:$0xff]
    %v2253 = vld [vmem:[%s9 + $0x3f8] sm:$0xff]
    %v2254 = vld [vmem:[%s10] sm:$0x1]
    %2255 = vmatprep.subr.mxu0 0.0
    %2256 = vmatpush1.msra.mxu0 %v2126
    %2257 = vmatprep.subr.mxu0 0.0
    %2258 = vmatpush1.msra.mxu0 %v2127
    %2259 = vmatprep.subr.mxu0 0.0
    %2260 = vmatpush1.msra.mxu0 %v2128
    %2261 = vmatprep.subr.mxu0 0.0
    %2262 = vmatpush1.msra.mxu0 %v2129
    %2263 = vmatprep.subr.mxu0 0.0
    %2264 = vmatpush1.msra.mxu0 %v2130
    %2265 = vmatprep.subr.mxu0 0.0
    %2266 = vmatpush1.msra.mxu0 %v2131
    %2267 = vmatprep.subr.mxu0 0.0
    %2268 = vmatpush1.msra.mxu0 %v2132
    %2269 = vmatprep.subr.mxu0 0.0
    %2270 = vmatpush1.msra.mxu0 %v2133
    %2271 = vmatprep.subr.mxu0 0.0
    %2272 = vmatpush1.msra.mxu0 %v2134
    %2273 = vmatprep.subr.mxu0 0.0
    %2274 = vmatpush1.msra.mxu0 %v2135
    %2275 = vmatprep.subr.mxu0 0.0
    %2276 = vmatpush1.msra.mxu0 %v2136
    %2277 = vmatprep.subr.mxu0 0.0
    %2278 = vmatpush1.msra.mxu0 %v2137
    %2279 = vmatprep.subr.mxu0 0.0
    %2280 = vmatpush1.msra.mxu0 %v2138
    %2281 = vmatprep.subr.mxu0 0.0
    %2282 = vmatpush1.msra.mxu0 %v2139
    %2283 = vmatprep.subr.mxu0 0.0
    %2284 = vmatpush1.msra.mxu0 %v2140
    %2285 = vmatprep.subr.mxu0 0.0
    %2286 = vmatpush1.msra.mxu0 %v2141
    %2287 = vmatprep.subr.mxu0 0.0
    %2288 = vmatpush1.msra.mxu0 %v2142
    %2289 = vmatprep.subr.mxu0 0.0
    %2290 = vmatpush1.msra.mxu0 %v2143
    %2291 = vmatprep.subr.mxu0 0.0
    %2292 = vmatpush1.msra.mxu0 %v2144
    %2293 = vmatprep.subr.mxu0 0.0
    %2294 = vmatpush1.msra.mxu0 %v2145
    %2295 = vmatprep.subr.mxu0 0.0
    %2296 = vmatpush1.msra.mxu0 %v2146
    %2297 = vmatprep.subr.mxu0 0.0
    %2298 = vmatpush1.msra.mxu0 %v2147
    %2299 = vmatprep.subr.mxu0 0.0
    %2300 = vmatpush1.msra.mxu0 %v2148
    %2301 = vmatprep.subr.mxu0 0.0
    %2302 = vmatpush1.msra.mxu0 %v2149
    %2303 = vmatprep.subr.mxu0 0.0
    %2304 = vmatpush1.msra.mxu0 %v2150
    %2305 = vmatprep.subr.mxu0 0.0
    %2306 = vmatpush1.msra.mxu0 %v2151
    %2307 = vmatprep.subr.mxu0 0.0
    %2308 = vmatpush1.msra.mxu0 %v2152
    %2309 = vmatprep.subr.mxu0 0.0
    %2310 = vmatpush1.msra.mxu0 %v2153
    %2311 = vmatprep.subr.mxu0 0.0
    %2312 = vmatpush1.msra.mxu0 %v2154
    %2313 = vmatprep.subr.mxu0 0.0
    %2314 = vmatpush1.msra.mxu0 %v2155
    %2315 = vmatprep.subr.mxu0 0.0
    %2316 = vmatpush1.msra.mxu0 %v2156
    %2317 = vmatprep.subr.mxu0 0.0
    %2318 = vmatpush1.msra.mxu0 %v2157
    %2319 = vmatprep.mubr.f32.mxu0 %v2112
    %2320 = vmatmul.mubr.f32.gmra.mrb[0].mxu0 %v2107
    %v2321 = vpop.f32.mrb[0].mxu0
    %v2322 = vadd.f32 %v2254, %v2321
    %v2323 = vpop.f32.mrb[0].mxu0
    %2324 = vdwg.mxu0
    %2325 = vmatprep.subr.mxu0 0.0
    %2326 = vmatpush1.msra.mxu0 %v2158
    %2327 = vmatprep.subr.mxu0 0.0
    %2328 = vmatpush1.msra.mxu0 %v2159
    %2329 = vmatprep.subr.mxu0 0.0
    %2330 = vmatpush1.msra.mxu0 %v2160
    %2331 = vmatprep.subr.mxu0 0.0
    %2332 = vmatpush1.msra.mxu0 %v2161
    %2333 = vmatprep.subr.mxu0 0.0
    %2334 = vmatpush1.msra.mxu0 %v2162
    %2335 = vmatprep.subr.mxu0 0.0
    %2336 = vmatpush1.msra.mxu0 %v2163
    %2337 = vmatprep.subr.mxu0 0.0
    %2338 = vmatpush1.msra.mxu0 %v2164
    %2339 = vmatprep.subr.mxu0 0.0
    %2340 = vmatpush1.msra.mxu0 %v2165
    %2341 = vmatprep.subr.mxu0 0.0
    %2342 = vmatpush1.msra.mxu0 %v2166
    %2343 = vmatprep.subr.mxu0 0.0
    %2344 = vmatpush1.msra.mxu0 %v2167
    %2345 = vmatprep.subr.mxu0 0.0
    %2346 = vmatpush1.msra.mxu0 %v2168
    %2347 = vmatprep.subr.mxu0 0.0
    %2348 = vmatpush1.msra.mxu0 %v2169
    %2349 = vmatprep.subr.mxu0 0.0
    %2350 = vmatpush1.msra.mxu0 %v2170
    %2351 = vmatprep.subr.mxu0 0.0
    %2352 = vmatpush1.msra.mxu0 %v2171
    %2353 = vmatprep.subr.mxu0 0.0
    %2354 = vmatpush1.msra.mxu0 %v2172
    %2355 = vmatprep.subr.mxu0 0.0
    %2356 = vmatpush1.msra.mxu0 %v2173
    %2357 = vmatprep.subr.mxu0 0.0
    %2358 = vmatpush1.msra.mxu0 %v2174
    %2359 = vmatprep.subr.mxu0 0.0
    %2360 = vmatpush1.msra.mxu0 %v2175
    %2361 = vmatprep.subr.mxu0 0.0
    %2362 = vmatpush1.msra.mxu0 %v2176
    %2363 = vmatprep.subr.mxu0 0.0
    %2364 = vmatpush1.msra.mxu0 %v2177
    %2365 = vmatprep.subr.mxu0 0.0
    %2366 = vmatpush1.msra.mxu0 %v2178
    %2367 = vmatprep.subr.mxu0 0.0
    %2368 = vmatpush1.msra.mxu0 %v2179
    %2369 = vmatprep.subr.mxu0 0.0
    %2370 = vmatpush1.msra.mxu0 %v2180
    %2371 = vmatprep.subr.mxu0 0.0
    %2372 = vmatpush1.msra.mxu0 %v2181
    %2373 = vmatprep.subr.mxu0 0.0
    %2374 = vmatpush1.msra.mxu0 %v2182
    %2375 = vmatprep.subr.mxu0 0.0
    %2376 = vmatpush1.msra.mxu0 %v2183
    %2377 = vmatprep.subr.mxu0 0.0
    %2378 = vmatpush1.msra.mxu0 %v2184
    %2379 = vmatprep.subr.mxu0 0.0
    %2380 = vmatpush1.msra.mxu0 %v2185
    %2381 = vmatprep.subr.mxu0 0.0
    %2382 = vmatpush1.msra.mxu0 %v2186
    %2383 = vmatprep.subr.mxu0 0.0
    %2384 = vmatpush1.msra.mxu0 %v2187
    %2385 = vmatprep.subr.mxu0 0.0
    %2386 = vmatpush1.msra.mxu0 %v2188
    %2387 = vmatprep.subr.mxu0 0.0
    %2388 = vmatpush1.msra.mxu0 %v2189
    %2389 = vmatprep.mubr.f32.mxu0 %v2116
    %2390 = vmatmul.mubr.f32.gmra.mrb[0].mxu0 %v2114
    %v2391 = vpop.f32.mrb[0].mxu0
    %v2392 = vadd.f32 %v2322, %v2391
    %v2393 = vpop.f32.mrb[0].mxu0
    %2394 = vdwg.mxu0
    %2395 = vmatprep.subr.mxu0 0.0
    %2396 = vmatpush1.msra.mxu0 %v2190
    %2397 = vmatprep.subr.mxu0 0.0
    %2398 = vmatpush1.msra.mxu0 %v2191
    %2399 = vmatprep.subr.mxu0 0.0
    %2400 = vmatpush1.msra.mxu0 %v2192
    %2401 = vmatprep.subr.mxu0 0.0
    %2402 = vmatpush1.msra.mxu0 %v2193
    %2403 = vmatprep.subr.mxu0 0.0
    %2404 = vmatpush1.msra.mxu0 %v2194
    %2405 = vmatprep.subr.mxu0 0.0
    %2406 = vmatpush1.msra.mxu0 %v2195
    %2407 = vmatprep.subr.mxu0 0.0
    %2408 = vmatpush1.msra.mxu0 %v2196
    %2409 = vmatprep.subr.mxu0 0.0
    %2410 = vmatpush1.msra.mxu0 %v2197
    %2411 = vmatprep.subr.mxu0 0.0
    %2412 = vmatpush1.msra.mxu0 %v2198
    %2413 = vmatprep.subr.mxu0 0.0
    %2414 = vmatpush1.msra.mxu0 %v2199
    %2415 = vmatprep.subr.mxu0 0.0
    %2416 = vmatpush1.msra.mxu0 %v2200
    %2417 = vmatprep.subr.mxu0 0.0
    %2418 = vmatpush1.msra.mxu0 %v2201
    %2419 = vmatprep.subr.mxu0 0.0
    %2420 = vmatpush1.msra.mxu0 %v2202
    %2421 = vmatprep.subr.mxu0 0.0
    %2422 = vmatpush1.msra.mxu0 %v2203
    %2423 = vmatprep.subr.mxu0 0.0
    %2424 = vmatpush1.msra.mxu0 %v2204
    %2425 = vmatprep.subr.mxu0 0.0
    %2426 = vmatpush1.msra.mxu0 %v2205
    %2427 = vmatprep.subr.mxu0 0.0
    %2428 = vmatpush1.msra.mxu0 %v2206
    %2429 = vmatprep.subr.mxu0 0.0
    %2430 = vmatpush1.msra.mxu0 %v2207
    %2431 = vmatprep.subr.mxu0 0.0
    %2432 = vmatpush1.msra.mxu0 %v2208
    %2433 = vmatprep.subr.mxu0 0.0
    %2434 = vmatpush1.msra.mxu0 %v2209
    %2435 = vmatprep.subr.mxu0 0.0
    %2436 = vmatpush1.msra.mxu0 %v2210
    %2437 = vmatprep.subr.mxu0 0.0
    %2438 = vmatpush1.msra.mxu0 %v2211
    %2439 = vmatprep.subr.mxu0 0.0
    %2440 = vmatpush1.msra.mxu0 %v2212
    %2441 = vmatprep.subr.mxu0 0.0
    %2442 = vmatpush1.msra.mxu0 %v2213
    %2443 = vmatprep.subr.mxu0 0.0
    %2444 = vmatpush1.msra.mxu0 %v2214
    %2445 = vmatprep.subr.mxu0 0.0
    %2446 = vmatpush1.msra.mxu0 %v2215
    %2447 = vmatprep.subr.mxu0 0.0
    %2448 = vmatpush1.msra.mxu0 %v2216
    %2449 = vmatprep.subr.mxu0 0.0
    %2450 = vmatpush1.msra.mxu0 %v2217
    %2451 = vmatprep.subr.mxu0 0.0
    %2452 = vmatpush1.msra.mxu0 %v2218
    %2453 = vmatprep.subr.mxu0 0.0
    %2454 = vmatpush1.msra.mxu0 %v2219
    %2455 = vmatprep.subr.mxu0 0.0
    %2456 = vmatpush1.msra.mxu0 %v2220
    %2457 = vmatprep.subr.mxu0 0.0
    %2458 = vmatpush1.msra.mxu0 %v2221
    %2459 = vmatprep.mubr.f32.mxu0 %v2120
    %2460 = vmatmul.mubr.f32.gmra.mrb[0].mxu0 %v2118
    %v2461 = vpop.f32.mrb[0].mxu0
    %v2462 = vadd.f32 %v2392, %v2461
    %v2463 = vpop.f32.mrb[0].mxu0
    %2464 = vdwg.mxu0
    %2465 = vmatprep.subr.mxu0 0.0
    %2466 = vmatpush1.msra.mxu0 %v2222
    %2467 = vmatprep.subr.mxu0 0.0
    %2468 = vmatpush1.msra.mxu0 %v2223
    %2469 = vmatprep.subr.mxu0 0.0
    %2470 = vmatpush1.msra.mxu0 %v2224
    %2471 = vmatprep.subr.mxu0 0.0
    %2472 = vmatpush1.msra.mxu0 %v2225
    %2473 = vmatprep.subr.mxu0 0.0
    %2474 = vmatpush1.msra.mxu0 %v2226
    %2475 = vmatprep.subr.mxu0 0.0
    %2476 = vmatpush1.msra.mxu0 %v2227
    %2477 = vmatprep.subr.mxu0 0.0
    %2478 = vmatpush1.msra.mxu0 %v2228
    %2479 = vmatprep.subr.mxu0 0.0
    %2480 = vmatpush1.msra.mxu0 %v2229
    %2481 = vmatprep.subr.mxu0 0.0
    %2482 = vmatpush1.msra.mxu0 %v2230
    %2483 = vmatprep.subr.mxu0 0.0
    %2484 = vmatpush1.msra.mxu0 %v2231
    %2485 = vmatprep.subr.mxu0 0.0
    %2486 = vmatpush1.msra.mxu0 %v2232
    %2487 = vmatprep.subr.mxu0 0.0
    %2488 = vmatpush1.msra.mxu0 %v2233
    %2489 = vmatprep.subr.mxu0 0.0
    %2490 = vmatpush1.msra.mxu0 %v2234
    %2491 = vmatprep.subr.mxu0 0.0
    %2492 = vmatpush1.msra.mxu0 %v2235
    %2493 = vmatprep.subr.mxu0 0.0
    %2494 = vmatpush1.msra.mxu0 %v2236
    %2495 = vmatprep.subr.mxu0 0.0
    %2496 = vmatpush1.msra.mxu0 %v2237
    %2497 = vmatprep.subr.mxu0 0.0
    %2498 = vmatpush1.msra.mxu0 %v2238
    %2499 = vmatprep.subr.mxu0 0.0
    %2500 = vmatpush1.msra.mxu0 %v2239
    %2501 = vmatprep.subr.mxu0 0.0
    %2502 = vmatpush1.msra.mxu0 %v2240
    %2503 = vmatprep.subr.mxu0 0.0
    %2504 = vmatpush1.msra.mxu0 %v2241
    %2505 = vmatprep.subr.mxu0 0.0
    %2506 = vmatpush1.msra.mxu0 %v2242
    %2507 = vmatprep.subr.mxu0 0.0
    %2508 = vmatpush1.msra.mxu0 %v2243
    %2509 = vmatprep.subr.mxu0 0.0
    %2510 = vmatpush1.msra.mxu0 %v2244
    %2511 = vmatprep.subr.mxu0 0.0
    %2512 = vmatpush1.msra.mxu0 %v2245
    %2513 = vmatprep.subr.mxu0 0.0
    %2514 = vmatpush1.msra.mxu0 %v2246
    %2515 = vmatprep.subr.mxu0 0.0
    %2516 = vmatpush1.msra.mxu0 %v2247
    %2517 = vmatprep.subr.mxu0 0.0
    %2518 = vmatpush1.msra.mxu0 %v2248
    %2519 = vmatprep.subr.mxu0 0.0
    %2520 = vmatpush1.msra.mxu0 %v2249
    %2521 = vmatprep.subr.mxu0 0.0
    %2522 = vmatpush1.msra.mxu0 %v2250
    %2523 = vmatprep.subr.mxu0 0.0
    %2524 = vmatpush1.msra.mxu0 %v2251
    %2525 = vmatprep.subr.mxu0 0.0
    %2526 = vmatpush1.msra.mxu0 %v2252
    %2527 = vmatprep.subr.mxu0 0.0
    %2528 = vmatpush1.msra.mxu0 %v2253
    %2529 = vmatprep.mubr.f32.mxu0 %v2124
    %2530 = vmatmul.mubr.f32.gmra.mrb[0].mxu0 %v2122
    %v2531 = vpop.f32.mrb[0].mxu0
    %v2532 = vadd.f32 %v2462, %v2531
    %v2533 = vpop.f32.mrb[0].mxu0
    %2534 = vdwg.mxu0
    %v2536 = vrot.slane %v2108, 1
    %v2538 = vrot.slane %v2108, 2
    %v2540 = vrot.slane %v2108, 3
    %v2542 = vrot.slane %v2108, 4
    %v2544 = vrot.slane %v2108, 5
    %v2546 = vrot.slane %v2108, 6
    %v2548 = vrot.slane %v2108, 7
    %2550 = vmatprep.subr.mxu0 0.0
    %2551 = vmatpush1.msra.mxu0 %v2126
    %2552 = vmatprep.subr.mxu0 0.0
    %2553 = vmatpush1.msra.mxu0 %v2127
    %2554 = vmatprep.subr.mxu0 0.0
    %2555 = vmatpush1.msra.mxu0 %v2128
    %2556 = vmatprep.subr.mxu0 0.0
    %2557 = vmatpush1.msra.mxu0 %v2129
    %2558 = vmatprep.subr.mxu0 0.0
    %2559 = vmatpush1.msra.mxu0 %v2130
    %2560 = vmatprep.subr.mxu0 0.0
    %2561 = vmatpush1.msra.mxu0 %v2131
    %2562 = vmatprep.subr.mxu0 0.0
    %2563 = vmatpush1.msra.mxu0 %v2132
    %2564 = vmatprep.subr.mxu0 0.0
    %2565 = vmatpush1.msra.mxu0 %v2133
    %2566 = vmatprep.subr.mxu0 0.0
    %2567 = vmatpush1.msra.mxu0 %v2134
    %2568 = vmatprep.subr.mxu0 0.0
    %2569 = vmatpush1.msra.mxu0 %v2135
    %2570 = vmatprep.subr.mxu0 0.0
    %2571 = vmatpush1.msra.mxu0 %v2136
    %2572 = vmatprep.subr.mxu0 0.0
    %2573 = vmatpush1.msra.mxu0 %v2137
    %2574 = vmatprep.subr.mxu0 0.0
    %2575 = vmatpush1.msra.mxu0 %v2138
    %2576 = vmatprep.subr.mxu0 0.0
    %2577 = vmatpush1.msra.mxu0 %v2139
    %2578 = vmatprep.subr.mxu0 0.0
    %2579 = vmatpush1.msra.mxu0 %v2140
    %2580 = vmatprep.subr.mxu0 0.0
    %2581 = vmatpush1.msra.mxu0 %v2141
    %2582 = vmatprep.subr.mxu0 0.0
    %2583 = vmatpush1.msra.mxu0 %v2142
    %2584 = vmatprep.subr.mxu0 0.0
    %2585 = vmatpush1.msra.mxu0 %v2143
    %2586 = vmatprep.subr.mxu0 0.0
    %2587 = vmatpush1.msra.mxu0 %v2144
    %2588 = vmatprep.subr.mxu0 0.0
    %2589 = vmatpush1.msra.mxu0 %v2145
    %2590 = vmatprep.subr.mxu0 0.0
    %2591 = vmatpush1.msra.mxu0 %v2146
    %2592 = vmatprep.subr.mxu0 0.0
    %2593 = vmatpush1.msra.mxu0 %v2147
    %2594 = vmatprep.subr.mxu0 0.0
    %2595 = vmatpush1.msra.mxu0 %v2148
    %2596 = vmatprep.subr.mxu0 0.0
    %2597 = vmatpush1.msra.mxu0 %v2149
    %2598 = vmatprep.subr.mxu0 0.0
    %2599 = vmatpush1.msra.mxu0 %v2150
    %2600 = vmatprep.subr.mxu0 0.0
    %2601 = vmatpush1.msra.mxu0 %v2151
    %2602 = vmatprep.subr.mxu0 0.0
    %2603 = vmatpush1.msra.mxu0 %v2152
    %2604 = vmatprep.subr.mxu0 0.0
    %2605 = vmatpush1.msra.mxu0 %v2153
    %2606 = vmatprep.subr.mxu0 0.0
    %2607 = vmatpush1.msra.mxu0 %v2154
    %2608 = vmatprep.subr.mxu0 0.0
    %2609 = vmatpush1.msra.mxu0 %v2155
    %2610 = vmatprep.subr.mxu0 0.0
    %2611 = vmatpush1.msra.mxu0 %v2156
    %2612 = vmatprep.subr.mxu0 0.0
    %2613 = vmatpush1.msra.mxu0 %v2157
    %2614 = vmatprep.mubr.f32.mxu0 %v2536
    %2615 = vmatmul.mubr.f32.gmra.mrb[0].mxu0 %v2108
    %v2616 = vpop.f32.mrb[0].mxu0
    %v2617 = vadd.f32 %v2254, %v2616
    %v2618 = vpop.f32.mrb[0].mxu0
    %2619 = vdwg.mxu0
    %2620 = vmatprep.subr.mxu0 0.0
    %2621 = vmatpush1.msra.mxu0 %v2158
    %2622 = vmatprep.subr.mxu0 0.0
    %2623 = vmatpush1.msra.mxu0 %v2159
    %2624 = vmatprep.subr.mxu0 0.0
    %2625 = vmatpush1.msra.mxu0 %v2160
    %2626 = vmatprep.subr.mxu0 0.0
    %2627 = vmatpush1.msra.mxu0 %v2161
    %2628 = vmatprep.subr.mxu0 0.0
    %2629 = vmatpush1.msra.mxu0 %v2162
    %2630 = vmatprep.subr.mxu0 0.0
    %2631 = vmatpush1.msra.mxu0 %v2163
    %2632 = vmatprep.subr.mxu0 0.0
    %2633 = vmatpush1.msra.mxu0 %v2164
    %2634 = vmatprep.subr.mxu0 0.0
    %2635 = vmatpush1.msra.mxu0 %v2165
    %2636 = vmatprep.subr.mxu0 0.0
    %2637 = vmatpush1.msra.mxu0 %v2166
    %2638 = vmatprep.subr.mxu0 0.0
    %2639 = vmatpush1.msra.mxu0 %v2167
    %2640 = vmatprep.subr.mxu0 0.0
    %2641 = vmatpush1.msra.mxu0 %v2168
    %2642 = vmatprep.subr.mxu0 0.0
    %2643 = vmatpush1.msra.mxu0 %v2169
    %2644 = vmatprep.subr.mxu0 0.0
    %2645 = vmatpush1.msra.mxu0 %v2170
    %2646 = vmatprep.subr.mxu0 0.0
    %2647 = vmatpush1.msra.mxu0 %v2171
    %2648 = vmatprep.subr.mxu0 0.0
    %2649 = vmatpush1.msra.mxu0 %v2172
    %2650 = vmatprep.subr.mxu0 0.0
    %2651 = vmatpush1.msra.mxu0 %v2173
    %2652 = vmatprep.subr.mxu0 0.0
    %2653 = vmatpush1.msra.mxu0 %v2174
    %2654 = vmatprep.subr.mxu0 0.0
    %2655 = vmatpush1.msra.mxu0 %v2175
    %2656 = vmatprep.subr.mxu0 0.0
    %2657 = vmatpush1.msra.mxu0 %v2176
    %2658 = vmatprep.subr.mxu0 0.0
    %2659 = vmatpush1.msra.mxu0 %v2177
    %2660 = vmatprep.subr.mxu0 0.0
    %2661 = vmatpush1.msra.mxu0 %v2178
    %2662 = vmatprep.subr.mxu0 0.0
    %2663 = vmatpush1.msra.mxu0 %v2179
    %2664 = vmatprep.subr.mxu0 0.0
    %2665 = vmatpush1.msra.mxu0 %v2180
    %2666 = vmatprep.subr.mxu0 0.0
    %2667 = vmatpush1.msra.mxu0 %v2181
    %2668 = vmatprep.subr.mxu0 0.0
    %2669 = vmatpush1.msra.mxu0 %v2182
    %2670 = vmatprep.subr.mxu0 0.0
    %2671 = vmatpush1.msra.mxu0 %v2183
    %2672 = vmatprep.subr.mxu0 0.0
    %2673 = vmatpush1.msra.mxu0 %v2184
    %2674 = vmatprep.subr.mxu0 0.0
    %2675 = vmatpush1.msra.mxu0 %v2185
    %2676 = vmatprep.subr.mxu0 0.0
    %2677 = vmatpush1.msra.mxu0 %v2186
    %2678 = vmatprep.subr.mxu0 0.0
    %2679 = vmatpush1.msra.mxu0 %v2187
    %2680 = vmatprep.subr.mxu0 0.0
    %2681 = vmatpush1.msra.mxu0 %v2188
    %2682 = vmatprep.subr.mxu0 0.0
    %2683 = vmatpush1.msra.mxu0 %v2189
    %2684 = vmatprep.mubr.f32.mxu0 %v2540
    %2685 = vmatmul.mubr.f32.gmra.mrb[0].mxu0 %v2538
    %v2686 = vpop.f32.mrb[0].mxu0
    %v2687 = vadd.f32 %v2617, %v2686
    %v2688 = vpop.f32.mrb[0].mxu0
    %2689 = vdwg.mxu0
    %2690 = vmatprep.subr.mxu0 0.0
    %2691 = vmatpush1.msra.mxu0 %v2190
    %2692 = vmatprep.subr.mxu0 0.0
    %2693 = vmatpush1.msra.mxu0 %v2191
    %2694 = vmatprep.subr.mxu0 0.0
    %2695 = vmatpush1.msra.mxu0 %v2192
    %2696 = vmatprep.subr.mxu0 0.0
    %2697 = vmatpush1.msra.mxu0 %v2193
    %2698 = vmatprep.subr.mxu0 0.0
    %2699 = vmatpush1.msra.mxu0 %v2194
    %2700 = vmatprep.subr.mxu0 0.0
    %2701 = vmatpush1.msra.mxu0 %v2195
    %2702 = vmatprep.subr.mxu0 0.0
    %2703 = vmatpush1.msra.mxu0 %v2196
    %2704 = vmatprep.subr.mxu0 0.0
    %2705 = vmatpush1.msra.mxu0 %v2197
    %2706 = vmatprep.subr.mxu0 0.0
    %2707 = vmatpush1.msra.mxu0 %v2198
    %2708 = vmatprep.subr.mxu0 0.0
    %2709 = vmatpush1.msra.mxu0 %v2199
    %2710 = vmatprep.subr.mxu0 0.0
    %2711 = vmatpush1.msra.mxu0 %v2200
    %2712 = vmatprep.subr.mxu0 0.0
    %2713 = vmatpush1.msra.mxu0 %v2201
    %2714 = vmatprep.subr.mxu0 0.0
    %2715 = vmatpush1.msra.mxu0 %v2202
    %2716 = vmatprep.subr.mxu0 0.0
    %2717 = vmatpush1.msra.mxu0 %v2203
    %2718 = vmatprep.subr.mxu0 0.0
    %2719 = vmatpush1.msra.mxu0 %v2204
    %2720 = vmatprep.subr.mxu0 0.0
    %2721 = vmatpush1.msra.mxu0 %v2205
    %2722 = vmatprep.subr.mxu0 0.0
    %2723 = vmatpush1.msra.mxu0 %v2206
    %2724 = vmatprep.subr.mxu0 0.0
    %2725 = vmatpush1.msra.mxu0 %v2207
    %2726 = vmatprep.subr.mxu0 0.0
    %2727 = vmatpush1.msra.mxu0 %v2208
    %2728 = vmatprep.subr.mxu0 0.0
    %2729 = vmatpush1.msra.mxu0 %v2209
    %2730 = vmatprep.subr.mxu0 0.0
    %2731 = vmatpush1.msra.mxu0 %v2210
    %2732 = vmatprep.subr.mxu0 0.0
    %2733 = vmatpush1.msra.mxu0 %v2211
    %2734 = vmatprep.subr.mxu0 0.0
    %2735 = vmatpush1.msra.mxu0 %v2212
    %2736 = vmatprep.subr.mxu0 0.0
    %2737 = vmatpush1.msra.mxu0 %v2213
    %2738 = vmatprep.subr.mxu0 0.0
    %2739 = vmatpush1.msra.mxu0 %v2214
    %2740 = vmatprep.subr.mxu0 0.0
    %2741 = vmatpush1.msra.mxu0 %v2215
    %2742 = vmatprep.subr.mxu0 0.0
    %2743 = vmatpush1.msra.mxu0 %v2216
    %2744 = vmatprep.subr.mxu0 0.0
    %2745 = vmatpush1.msra.mxu0 %v2217
    %2746 = vmatprep.subr.mxu0 0.0
    %2747 = vmatpush1.msra.mxu0 %v2218
    %2748 = vmatprep.subr.mxu0 0.0
    %2749 = vmatpush1.msra.mxu0 %v2219
    %2750 = vmatprep.subr.mxu0 0.0
    %2751 = vmatpush1.msra.mxu0 %v2220
    %2752 = vmatprep.subr.mxu0 0.0
    %2753 = vmatpush1.msra.mxu0 %v2221
    %2754 = vmatprep.mubr.f32.mxu0 %v2544
    %2755 = vmatmul.mubr.f32.gmra.mrb[0].mxu0 %v2542
    %v2756 = vpop.f32.mrb[0].mxu0
    %v2757 = vadd.f32 %v2687, %v2756
    %v2758 = vpop.f32.mrb[0].mxu0
    %2759 = vdwg.mxu0
    %2760 = vmatprep.subr.mxu0 0.0
    %2761 = vmatpush1.msra.mxu0 %v2222
    %2762 = vmatprep.subr.mxu0 0.0
    %2763 = vmatpush1.msra.mxu0 %v2223
    %2764 = vmatprep.subr.mxu0 0.0
    %2765 = vmatpush1.msra.mxu0 %v2224
    %2766 = vmatprep.subr.mxu0 0.0
    %2767 = vmatpush1.msra.mxu0 %v2225
    %2768 = vmatprep.subr.mxu0 0.0
    %2769 = vmatpush1.msra.mxu0 %v2226
    %2770 = vmatprep.subr.mxu0 0.0
    %2771 = vmatpush1.msra.mxu0 %v2227
    %2772 = vmatprep.subr.mxu0 0.0
    %2773 = vmatpush1.msra.mxu0 %v2228
    %2774 = vmatprep.subr.mxu0 0.0
    %2775 = vmatpush1.msra.mxu0 %v2229
    %2776 = vmatprep.subr.mxu0 0.0
    %2777 = vmatpush1.msra.mxu0 %v2230
    %2778 = vmatprep.subr.mxu0 0.0
    %2779 = vmatpush1.msra.mxu0 %v2231
    %2780 = vmatprep.subr.mxu0 0.0
    %2781 = vmatpush1.msra.mxu0 %v2232
    %2782 = vmatprep.subr.mxu0 0.0
    %2783 = vmatpush1.msra.mxu0 %v2233
    %2784 = vmatprep.subr.mxu0 0.0
    %2785 = vmatpush1.msra.mxu0 %v2234
    %2786 = vmatprep.subr.mxu0 0.0
    %2787 = vmatpush1.msra.mxu0 %v2235
    %2788 = vmatprep.subr.mxu0 0.0
    %2789 = vmatpush1.msra.mxu0 %v2236
    %2790 = vmatprep.subr.mxu0 0.0
    %2791 = vmatpush1.msra.mxu0 %v2237
    %2792 = vmatprep.subr.mxu0 0.0
    %2793 = vmatpush1.msra.mxu0 %v2238
    %2794 = vmatprep.subr.mxu0 0.0
    %2795 = vmatpush1.msra.mxu0 %v2239
    %2796 = vmatprep.subr.mxu0 0.0
    %2797 = vmatpush1.msra.mxu0 %v2240
    %2798 = vmatprep.subr.mxu0 0.0
    %2799 = vmatpush1.msra.mxu0 %v2241
    %2800 = vmatprep.subr.mxu0 0.0
    %2801 = vmatpush1.msra.mxu0 %v2242
    %2802 = vmatprep.subr.mxu0 0.0
    %2803 = vmatpush1.msra.mxu0 %v2243
    %2804 = vmatprep.subr.mxu0 0.0
    %2805 = vmatpush1.msra.mxu0 %v2244
    %2806 = vmatprep.subr.mxu0 0.0
    %2807 = vmatpush1.msra.mxu0 %v2245
    %2808 = vmatprep.subr.mxu0 0.0
    %2809 = vmatpush1.msra.mxu0 %v2246
    %2810 = vmatprep.subr.mxu0 0.0
    %2811 = vmatpush1.msra.mxu0 %v2247
    %2812 = vmatprep.subr.mxu0 0.0
    %2813 = vmatpush1.msra.mxu0 %v2248
    %2814 = vmatprep.subr.mxu0 0.0
    %2815 = vmatpush1.msra.mxu0 %v2249
    %2816 = vmatprep.subr.mxu0 0.0
    %2817 = vmatpush1.msra.mxu0 %v2250
    %2818 = vmatprep.subr.mxu0 0.0
    %2819 = vmatpush1.msra.mxu0 %v2251
    %2820 = vmatprep.subr.mxu0 0.0
    %2821 = vmatpush1.msra.mxu0 %v2252
    %2822 = vmatprep.subr.mxu0 0.0
    %2823 = vmatpush1.msra.mxu0 %v2253
    %2824 = vmatprep.mubr.f32.mxu0 %v2548
    %2825 = vmatmul.mubr.f32.gmra.mrb[0].mxu0 %v2546
    %v2826 = vpop.f32.mrb[0].mxu0
    %v2827 = vadd.f32 %v2757, %v2826
    %v2828 = vpop.f32.mrb[0].mxu0
    %2829 = vdwg.mxu0
    %v2831 = vrot.slane %v2109, 1
    %v2833 = vrot.slane %v2109, 2
    %v2835 = vrot.slane %v2109, 3
    %v2837 = vrot.slane %v2109, 4
    %v2839 = vrot.slane %v2109, 5
    %v2841 = vrot.slane %v2109, 6
    %v2843 = vrot.slane %v2109, 7
    %2845 = vmatprep.subr.mxu0 0.0
    %2846 = vmatpush1.msra.mxu0 %v2126
    %2847 = vmatprep.subr.mxu0 0.0
    %2848 = vmatpush1.msra.mxu0 %v2127
    %2849 = vmatprep.subr.mxu0 0.0
    %2850 = vmatpush1.msra.mxu0 %v2128
    %2851 = vmatprep.subr.mxu0 0.0
    %2852 = vmatpush1.msra.mxu0 %v2129
    %2853 = vmatprep.subr.mxu0 0.0
    %2854 = vmatpush1.msra.mxu0 %v2130
    %2855 = vmatprep.subr.mxu0 0.0
    %2856 = vmatpush1.msra.mxu0 %v2131
    %2857 = vmatprep.subr.mxu0 0.0
    %2858 = vmatpush1.msra.mxu0 %v2132
    %2859 = vmatprep.subr.mxu0 0.0
    %2860 = vmatpush1.msra.mxu0 %v2133
    %2861 = vmatprep.subr.mxu0 0.0
    %2862 = vmatpush1.msra.mxu0 %v2134
    %2863 = vmatprep.subr.mxu0 0.0
    %2864 = vmatpush1.msra.mxu0 %v2135
    %2865 = vmatprep.subr.mxu0 0.0
    %2866 = vmatpush1.msra.mxu0 %v2136
    %2867 = vmatprep.subr.mxu0 0.0
    %2868 = vmatpush1.msra.mxu0 %v2137
    %2869 = vmatprep.subr.mxu0 0.0
    %2870 = vmatpush1.msra.mxu0 %v2138
    %2871 = vmatprep.subr.mxu0 0.0
    %2872 = vmatpush1.msra.mxu0 %v2139
    %2873 = vmatprep.subr.mxu0 0.0
    %2874 = vmatpush1.msra.mxu0 %v2140
    %2875 = vmatprep.subr.mxu0 0.0
    %2876 = vmatpush1.msra.mxu0 %v2141
    %2877 = vmatprep.subr.mxu0 0.0
    %2878 = vmatpush1.msra.mxu0 %v2142
    %2879 = vmatprep.subr.mxu0 0.0
    %2880 = vmatpush1.msra.mxu0 %v2143
    %2881 = vmatprep.subr.mxu0 0.0
    %2882 = vmatpush1.msra.mxu0 %v2144
    %2883 = vmatprep.subr.mxu0 0.0
    %2884 = vmatpush1.msra.mxu0 %v2145
    %2885 = vmatprep.subr.mxu0 0.0
    %2886 = vmatpush1.msra.mxu0 %v2146
    %2887 = vmatprep.subr.mxu0 0.0
    %2888 = vmatpush1.msra.mxu0 %v2147
    %2889 = vmatprep.subr.mxu0 0.0
    %2890 = vmatpush1.msra.mxu0 %v2148
    %2891 = vmatprep.subr.mxu0 0.0
    %2892 = vmatpush1.msra.mxu0 %v2149
    %2893 = vmatprep.subr.mxu0 0.0
    %2894 = vmatpush1.msra.mxu0 %v2150
    %2895 = vmatprep.subr.mxu0 0.0
    %2896 = vmatpush1.msra.mxu0 %v2151
    %2897 = vmatprep.subr.mxu0 0.0
    %2898 = vmatpush1.msra.mxu0 %v2152
    %2899 = vmatprep.subr.mxu0 0.0
    %2900 = vmatpush1.msra.mxu0 %v2153
    %2901 = vmatprep.subr.mxu0 0.0
    %2902 = vmatpush1.msra.mxu0 %v2154
    %2903 = vmatprep.subr.mxu0 0.0
    %2904 = vmatpush1.msra.mxu0 %v2155
    %2905 = vmatprep.subr.mxu0 0.0
    %2906 = vmatpush1.msra.mxu0 %v2156
    %2907 = vmatprep.subr.mxu0 0.0
    %2908 = vmatpush1.msra.mxu0 %v2157
    %2909 = vmatprep.mubr.f32.mxu0 %v2831
    %2910 = vmatmul.mubr.f32.gmra.mrb[0].mxu0 %v2109
    %v2911 = vpop.f32.mrb[0].mxu0
    %v2912 = vadd.f32 %v2254, %v2911
    %v2913 = vpop.f32.mrb[0].mxu0
    %2914 = vdwg.mxu0
    %2915 = vmatprep.subr.mxu0 0.0
    %2916 = vmatpush1.msra.mxu0 %v2158
    %2917 = vmatprep.subr.mxu0 0.0
    %2918 = vmatpush1.msra.mxu0 %v2159
    %2919 = vmatprep.subr.mxu0 0.0
    %2920 = vmatpush1.msra.mxu0 %v2160
    %2921 = vmatprep.subr.mxu0 0.0
    %2922 = vmatpush1.msra.mxu0 %v2161
    %2923 = vmatprep.subr.mxu0 0.0
    %2924 = vmatpush1.msra.mxu0 %v2162
    %2925 = vmatprep.subr.mxu0 0.0
    %2926 = vmatpush1.msra.mxu0 %v2163
    %2927 = vmatprep.subr.mxu0 0.0
    %2928 = vmatpush1.msra.mxu0 %v2164
    %2929 = vmatprep.subr.mxu0 0.0
    %2930 = vmatpush1.msra.mxu0 %v2165
    %2931 = vmatprep.subr.mxu0 0.0
    %2932 = vmatpush1.msra.mxu0 %v2166
    %2933 = vmatprep.subr.mxu0 0.0
    %2934 = vmatpush1.msra.mxu0 %v2167
    %2935 = vmatprep.subr.mxu0 0.0
    %2936 = vmatpush1.msra.mxu0 %v2168
    %2937 = vmatprep.subr.mxu0 0.0
    %2938 = vmatpush1.msra.mxu0 %v2169
    %2939 = vmatprep.subr.mxu0 0.0
    %2940 = vmatpush1.msra.mxu0 %v2170
    %2941 = vmatprep.subr.mxu0 0.0
    %2942 = vmatpush1.msra.mxu0 %v2171
    %2943 = vmatprep.subr.mxu0 0.0
    %2944 = vmatpush1.msra.mxu0 %v2172
    %2945 = vmatprep.subr.mxu0 0.0
    %2946 = vmatpush1.msra.mxu0 %v2173
    %2947 = vmatprep.subr.mxu0 0.0
    %2948 = vmatpush1.msra.mxu0 %v2174
    %2949 = vmatprep.subr.mxu0 0.0
    %2950 = vmatpush1.msra.mxu0 %v2175
    %2951 = vmatprep.subr.mxu0 0.0
    %2952 = vmatpush1.msra.mxu0 %v2176
    %2953 = vmatprep.subr.mxu0 0.0
    %2954 = vmatpush1.msra.mxu0 %v2177
    %2955 = vmatprep.subr.mxu0 0.0
    %2956 = vmatpush1.msra.mxu0 %v2178
    %2957 = vmatprep.subr.mxu0 0.0
    %2958 = vmatpush1.msra.mxu0 %v2179
    %2959 = vmatprep.subr.mxu0 0.0
    %2960 = vmatpush1.msra.mxu0 %v2180
    %2961 = vmatprep.subr.mxu0 0.0
    %2962 = vmatpush1.msra.mxu0 %v2181
    %2963 = vmatprep.subr.mxu0 0.0
    %2964 = vmatpush1.msra.mxu0 %v2182
    %2965 = vmatprep.subr.mxu0 0.0
    %2966 = vmatpush1.msra.mxu0 %v2183
    %2967 = vmatprep.subr.mxu0 0.0
    %2968 = vmatpush1.msra.mxu0 %v2184
    %2969 = vmatprep.subr.mxu0 0.0
    %2970 = vmatpush1.msra.mxu0 %v2185
    %2971 = vmatprep.subr.mxu0 0.0
    %2972 = vmatpush1.msra.mxu0 %v2186
    %2973 = vmatprep.subr.mxu0 0.0
    %2974 = vmatpush1.msra.mxu0 %v2187
    %2975 = vmatprep.subr.mxu0 0.0
    %2976 = vmatpush1.msra.mxu0 %v2188
    %2977 = vmatprep.subr.mxu0 0.0
    %2978 = vmatpush1.msra.mxu0 %v2189
    %2979 = vmatprep.mubr.f32.mxu0 %v2835
    %2980 = vmatmul.mubr.f32.gmra.mrb[0].mxu0 %v2833
    %v2981 = vpop.f32.mrb[0].mxu0
    %v2982 = vadd.f32 %v2912, %v2981
    %v2983 = vpop.f32.mrb[0].mxu0
    %2984 = vdwg.mxu0
    %2985 = vmatprep.subr.mxu0 0.0
    %2986 = vmatpush1.msra.mxu0 %v2190
    %2987 = vmatprep.subr.mxu0 0.0
    %2988 = vmatpush1.msra.mxu0 %v2191
    %2989 = vmatprep.subr.mxu0 0.0
    %2990 = vmatpush1.msra.mxu0 %v2192
    %2991 = vmatprep.subr.mxu0 0.0
    %2992 = vmatpush1.msra.mxu0 %v2193
    %2993 = vmatprep.subr.mxu0 0.0
    %2994 = vmatpush1.msra.mxu0 %v2194
    %2995 = vmatprep.subr.mxu0 0.0
    %2996 = vmatpush1.msra.mxu0 %v2195
    %2997 = vmatprep.subr.mxu0 0.0
    %2998 = vmatpush1.msra.mxu0 %v2196
    %2999 = vmatprep.subr.mxu0 0.0
    %3000 = vmatpush1.msra.mxu0 %v2197
    %3001 = vmatprep.subr.mxu0 0.0
    %3002 = vmatpush1.msra.mxu0 %v2198
    %3003 = vmatprep.subr.mxu0 0.0
    %3004 = vmatpush1.msra.mxu0 %v2199
    %3005 = vmatprep.subr.mxu0 0.0
    %3006 = vmatpush1.msra.mxu0 %v2200
    %3007 = vmatprep.subr.mxu0 0.0
    %3008 = vmatpush1.msra.mxu0 %v2201
    %3009 = vmatprep.subr.mxu0 0.0
    %3010 = vmatpush1.msra.mxu0 %v2202
    %3011 = vmatprep.subr.mxu0 0.0
    %3012 = vmatpush1.msra.mxu0 %v2203
    %3013 = vmatprep.subr.mxu0 0.0
    %3014 = vmatpush1.msra.mxu0 %v2204
    %3015 = vmatprep.subr.mxu0 0.0
    %3016 = vmatpush1.msra.mxu0 %v2205
    %3017 = vmatprep.subr.mxu0 0.0
    %3018 = vmatpush1.msra.mxu0 %v2206
    %3019 = vmatprep.subr.mxu0 0.0
    %3020 = vmatpush1.msra.mxu0 %v2207
    %3021 = vmatprep.subr.mxu0 0.0
    %3022 = vmatpush1.msra.mxu0 %v2208
    %3023 = vmatprep.subr.mxu0 0.0
    %3024 = vmatpush1.msra.mxu0 %v2209
    %3025 = vmatprep.subr.mxu0 0.0
    %3026 = vmatpush1.msra.mxu0 %v2210
    %3027 = vmatprep.subr.mxu0 0.0
    %3028 = vmatpush1.msra.mxu0 %v2211
    %3029 = vmatprep.subr.mxu0 0.0
    %3030 = vmatpush1.msra.mxu0 %v2212
    %3031 = vmatprep.subr.mxu0 0.0
    %3032 = vmatpush1.msra.mxu0 %v2213
    %3033 = vmatprep.subr.mxu0 0.0
    %3034 = vmatpush1.msra.mxu0 %v2214
    %3035 = vmatprep.subr.mxu0 0.0
    %3036 = vmatpush1.msra.mxu0 %v2215
    %3037 = vmatprep.subr.mxu0 0.0
    %3038 = vmatpush1.msra.mxu0 %v2216
    %3039 = vmatprep.subr.mxu0 0.0
    %3040 = vmatpush1.msra.mxu0 %v2217
    %3041 = vmatprep.subr.mxu0 0.0
    %3042 = vmatpush1.msra.mxu0 %v2218
    %3043 = vmatprep.subr.mxu0 0.0
    %3044 = vmatpush1.msra.mxu0 %v2219
    %3045 = vmatprep.subr.mxu0 0.0
    %3046 = vmatpush1.msra.mxu0 %v2220
    %3047 = vmatprep.subr.mxu0 0.0
    %3048 = vmatpush1.msra.mxu0 %v2221
    %3049 = vmatprep.mubr.f32.mxu0 %v2839
    %3050 = vmatmul.mubr.f32.gmra.mrb[0].mxu0 %v2837
    %v3051 = vpop.f32.mrb[0].mxu0
    %v3052 = vadd.f32 %v2982, %v3051
    %v3053 = vpop.f32.mrb[0].mxu0
    %3054 = vdwg.mxu0
    %3055 = vmatprep.subr.mxu0 0.0
    %3056 = vmatpush1.msra.mxu0 %v2222
    %3057 = vmatprep.subr.mxu0 0.0
    %3058 = vmatpush1.msra.mxu0 %v2223
    %3059 = vmatprep.subr.mxu0 0.0
    %3060 = vmatpush1.msra.mxu0 %v2224
    %3061 = vmatprep.subr.mxu0 0.0
    %3062 = vmatpush1.msra.mxu0 %v2225
    %3063 = vmatprep.subr.mxu0 0.0
    %3064 = vmatpush1.msra.mxu0 %v2226
    %3065 = vmatprep.subr.mxu0 0.0
    %3066 = vmatpush1.msra.mxu0 %v2227
    %3067 = vmatprep.subr.mxu0 0.0
    %3068 = vmatpush1.msra.mxu0 %v2228
    %3069 = vmatprep.subr.mxu0 0.0
    %3070 = vmatpush1.msra.mxu0 %v2229
    %3071 = vmatprep.subr.mxu0 0.0
    %3072 = vmatpush1.msra.mxu0 %v2230
    %3073 = vmatprep.subr.mxu0 0.0
    %3074 = vmatpush1.msra.mxu0 %v2231
    %3075 = vmatprep.subr.mxu0 0.0
    %3076 = vmatpush1.msra.mxu0 %v2232
    %3077 = vmatprep.subr.mxu0 0.0
    %3078 = vmatpush1.msra.mxu0 %v2233
    %3079 = vmatprep.subr.mxu0 0.0
    %3080 = vmatpush1.msra.mxu0 %v2234
    %3081 = vmatprep.subr.mxu0 0.0
    %3082 = vmatpush1.msra.mxu0 %v2235
    %3083 = vmatprep.subr.mxu0 0.0
    %3084 = vmatpush1.msra.mxu0 %v2236
    %3085 = vmatprep.subr.mxu0 0.0
    %3086 = vmatpush1.msra.mxu0 %v2237
    %3087 = vmatprep.subr.mxu0 0.0
    %3088 = vmatpush1.msra.mxu0 %v2238
    %3089 = vmatprep.subr.mxu0 0.0
    %3090 = vmatpush1.msra.mxu0 %v2239
    %3091 = vmatprep.subr.mxu0 0.0
    %3092 = vmatpush1.msra.mxu0 %v2240
    %3093 = vmatprep.subr.mxu0 0.0
    %3094 = vmatpush1.msra.mxu0 %v2241
    %3095 = vmatprep.subr.mxu0 0.0
    %3096 = vmatpush1.msra.mxu0 %v2242
    %3097 = vmatprep.subr.mxu0 0.0
    %3098 = vmatpush1.msra.mxu0 %v2243
    %3099 = vmatprep.subr.mxu0 0.0
    %3100 = vmatpush1.msra.mxu0 %v2244
    %3101 = vmatprep.subr.mxu0 0.0
    %3102 = vmatpush1.msra.mxu0 %v2245
    %3103 = vmatprep.subr.mxu0 0.0
    %3104 = vmatpush1.msra.mxu0 %v2246
    %3105 = vmatprep.subr.mxu0 0.0
    %3106 = vmatpush1.msra.mxu0 %v2247
    %3107 = vmatprep.subr.mxu0 0.0
    %3108 = vmatpush1.msra.mxu0 %v2248
    %3109 = vmatprep.subr.mxu0 0.0
    %3110 = vmatpush1.msra.mxu0 %v2249
    %3111 = vmatprep.subr.mxu0 0.0
    %3112 = vmatpush1.msra.mxu0 %v2250
    %3113 = vmatprep.subr.mxu0 0.0
    %3114 = vmatpush1.msra.mxu0 %v2251
    %3115 = vmatprep.subr.mxu0 0.0
    %3116 = vmatpush1.msra.mxu0 %v2252
    %3117 = vmatprep.subr.mxu0 0.0
    %3118 = vmatpush1.msra.mxu0 %v2253
    %3119 = vmatprep.mubr.f32.mxu0 %v2843
    %3120 = vmatmul.mubr.f32.gmra.mrb[0].mxu0 %v2841
    %v3121 = vpop.f32.mrb[0].mxu0
    %v3122 = vadd.f32 %v3052, %v3121
    %v3123 = vpop.f32.mrb[0].mxu0
    %3124 = vdwg.mxu0
    %v3126 = vrot.slane %v2110, 1
    %v3128 = vrot.slane %v2110, 2
    %v3130 = vrot.slane %v2110, 3
    %v3132 = vrot.slane %v2110, 4
    %v3134 = vrot.slane %v2110, 5
    %v3136 = vrot.slane %v2110, 6
    %v3138 = vrot.slane %v2110, 7
    %3140 = vmatprep.subr.mxu0 0.0
    %3141 = vmatpush1.msra.mxu0 %v2126
    %3142 = vmatprep.subr.mxu0 0.0
    %3143 = vmatpush1.msra.mxu0 %v2127
    %3144 = vmatprep.subr.mxu0 0.0
    %3145 = vmatpush1.msra.mxu0 %v2128
    %3146 = vmatprep.subr.mxu0 0.0
    %3147 = vmatpush1.msra.mxu0 %v2129
    %3148 = vmatprep.subr.mxu0 0.0
    %3149 = vmatpush1.msra.mxu0 %v2130
    %3150 = vmatprep.subr.mxu0 0.0
    %3151 = vmatpush1.msra.mxu0 %v2131
    %3152 = vmatprep.subr.mxu0 0.0
    %3153 = vmatpush1.msra.mxu0 %v2132
    %3154 = vmatprep.subr.mxu0 0.0
    %3155 = vmatpush1.msra.mxu0 %v2133
    %3156 = vmatprep.subr.mxu0 0.0
    %3157 = vmatpush1.msra.mxu0 %v2134
    %3158 = vmatprep.subr.mxu0 0.0
    %3159 = vmatpush1.msra.mxu0 %v2135
    %3160 = vmatprep.subr.mxu0 0.0
    %3161 = vmatpush1.msra.mxu0 %v2136
    %3162 = vmatprep.subr.mxu0 0.0
    %3163 = vmatpush1.msra.mxu0 %v2137
    %3164 = vmatprep.subr.mxu0 0.0
    %3165 = vmatpush1.msra.mxu0 %v2138
    %3166 = vmatprep.subr.mxu0 0.0
    %3167 = vmatpush1.msra.mxu0 %v2139
    %3168 = vmatprep.subr.mxu0 0.0
    %3169 = vmatpush1.msra.mxu0 %v2140
    %3170 = vmatprep.subr.mxu0 0.0
    %3171 = vmatpush1.msra.mxu0 %v2141
    %3172 = vmatprep.subr.mxu0 0.0
    %3173 = vmatpush1.msra.mxu0 %v2142
    %3174 = vmatprep.subr.mxu0 0.0
    %3175 = vmatpush1.msra.mxu0 %v2143
    %3176 = vmatprep.subr.mxu0 0.0
    %3177 = vmatpush1.msra.mxu0 %v2144
    %3178 = vmatprep.subr.mxu0 0.0
    %3179 = vmatpush1.msra.mxu0 %v2145
    %3180 = vmatprep.subr.mxu0 0.0
    %3181 = vmatpush1.msra.mxu0 %v2146
    %3182 = vmatprep.subr.mxu0 0.0
    %3183 = vmatpush1.msra.mxu0 %v2147
    %3184 = vmatprep.subr.mxu0 0.0
    %3185 = vmatpush1.msra.mxu0 %v2148
    %3186 = vmatprep.subr.mxu0 0.0
    %3187 = vmatpush1.msra.mxu0 %v2149
    %3188 = vmatprep.subr.mxu0 0.0
    %3189 = vmatpush1.msra.mxu0 %v2150
    %3190 = vmatprep.subr.mxu0 0.0
    %3191 = vmatpush1.msra.mxu0 %v2151
    %3192 = vmatprep.subr.mxu0 0.0
    %3193 = vmatpush1.msra.mxu0 %v2152
    %3194 = vmatprep.subr.mxu0 0.0
    %3195 = vmatpush1.msra.mxu0 %v2153
    %3196 = vmatprep.subr.mxu0 0.0
    %3197 = vmatpush1.msra.mxu0 %v2154
    %3198 = vmatprep.subr.mxu0 0.0
    %3199 = vmatpush1.msra.mxu0 %v2155
    %3200 = vmatprep.subr.mxu0 0.0
    %3201 = vmatpush1.msra.mxu0 %v2156
    %3202 = vmatprep.subr.mxu0 0.0
    %3203 = vmatpush1.msra.mxu0 %v2157
    %3204 = vmatprep.mubr.f32.mxu0 %v3126
    %3205 = vmatmul.mubr.f32.gmra.mrb[0].mxu0 %v2110
    %v3206 = vpop.f32.mrb[0].mxu0
    %v3207 = vadd.f32 %v2254, %v3206
    %v3208 = vpop.f32.mrb[0].mxu0
    %3209 = vdwg.mxu0
    %3210 = vmatprep.subr.mxu0 0.0
    %3211 = vmatpush1.msra.mxu0 %v2158
    %3212 = vmatprep.subr.mxu0 0.0
    %3213 = vmatpush1.msra.mxu0 %v2159
    %3214 = vmatprep.subr.mxu0 0.0
    %3215 = vmatpush1.msra.mxu0 %v2160
    %3216 = vmatprep.subr.mxu0 0.0
    %3217 = vmatpush1.msra.mxu0 %v2161
    %3218 = vmatprep.subr.mxu0 0.0
    %3219 = vmatpush1.msra.mxu0 %v2162
    %3220 = vmatprep.subr.mxu0 0.0
    %3221 = vmatpush1.msra.mxu0 %v2163
    %3222 = vmatprep.subr.mxu0 0.0
    %3223 = vmatpush1.msra.mxu0 %v2164
    %3224 = vmatprep.subr.mxu0 0.0
    %3225 = vmatpush1.msra.mxu0 %v2165
    %3226 = vmatprep.subr.mxu0 0.0
    %3227 = vmatpush1.msra.mxu0 %v2166
    %3228 = vmatprep.subr.mxu0 0.0
    %3229 = vmatpush1.msra.mxu0 %v2167
    %3230 = vmatprep.subr.mxu0 0.0
    %3231 = vmatpush1.msra.mxu0 %v2168
    %3232 = vmatprep.subr.mxu0 0.0
    %3233 = vmatpush1.msra.mxu0 %v2169
    %3234 = vmatprep.subr.mxu0 0.0
    %3235 = vmatpush1.msra.mxu0 %v2170
    %3236 = vmatprep.subr.mxu0 0.0
    %3237 = vmatpush1.msra.mxu0 %v2171
    %3238 = vmatprep.subr.mxu0 0.0
    %3239 = vmatpush1.msra.mxu0 %v2172
    %3240 = vmatprep.subr.mxu0 0.0
    %3241 = vmatpush1.msra.mxu0 %v2173
    %3242 = vmatprep.subr.mxu0 0.0
    %3243 = vmatpush1.msra.mxu0 %v2174
    %3244 = vmatprep.subr.mxu0 0.0
    %3245 = vmatpush1.msra.mxu0 %v2175
    %3246 = vmatprep.subr.mxu0 0.0
    %3247 = vmatpush1.msra.mxu0 %v2176
    %3248 = vmatprep.subr.mxu0 0.0
    %3249 = vmatpush1.msra.mxu0 %v2177
    %3250 = vmatprep.subr.mxu0 0.0
    %3251 = vmatpush1.msra.mxu0 %v2178
    %3252 = vmatprep.subr.mxu0 0.0
    %3253 = vmatpush1.msra.mxu0 %v2179
    %3254 = vmatprep.subr.mxu0 0.0
    %3255 = vmatpush1.msra.mxu0 %v2180
    %3256 = vmatprep.subr.mxu0 0.0
    %3257 = vmatpush1.msra.mxu0 %v2181
    %3258 = vmatprep.subr.mxu0 0.0
    %3259 = vmatpush1.msra.mxu0 %v2182
    %3260 = vmatprep.subr.mxu0 0.0
    %3261 = vmatpush1.msra.mxu0 %v2183
    %3262 = vmatprep.subr.mxu0 0.0
    %3263 = vmatpush1.msra.mxu0 %v2184
    %3264 = vmatprep.subr.mxu0 0.0
    %3265 = vmatpush1.msra.mxu0 %v2185
    %3266 = vmatprep.subr.mxu0 0.0
    %3267 = vmatpush1.msra.mxu0 %v2186
    %3268 = vmatprep.subr.mxu0 0.0
    %3269 = vmatpush1.msra.mxu0 %v2187
    %3270 = vmatprep.subr.mxu0 0.0
    %3271 = vmatpush1.msra.mxu0 %v2188
    %3272 = vmatprep.subr.mxu0 0.0
    %3273 = vmatpush1.msra.mxu0 %v2189
    %3274 = vmatprep.mubr.f32.mxu0 %v3130
    %3275 = vmatmul.mubr.f32.gmra.mrb[0].mxu0 %v3128
    %v3276 = vpop.f32.mrb[0].mxu0
    %v3277 = vadd.f32 %v3207, %v3276
    %v3278 = vpop.f32.mrb[0].mxu0
    %3279 = vdwg.mxu0
    %3280 = vmatprep.subr.mxu0 0.0
    %3281 = vmatpush1.msra.mxu0 %v2190
    %3282 = vmatprep.subr.mxu0 0.0
    %3283 = vmatpush1.msra.mxu0 %v2191
    %3284 = vmatprep.subr.mxu0 0.0
    %3285 = vmatpush1.msra.mxu0 %v2192
    %3286 = vmatprep.subr.mxu0 0.0
    %3287 = vmatpush1.msra.mxu0 %v2193
    %3288 = vmatprep.subr.mxu0 0.0
    %3289 = vmatpush1.msra.mxu0 %v2194
    %3290 = vmatprep.subr.mxu0 0.0
    %3291 = vmatpush1.msra.mxu0 %v2195
    %3292 = vmatprep.subr.mxu0 0.0
    %3293 = vmatpush1.msra.mxu0 %v2196
    %3294 = vmatprep.subr.mxu0 0.0
    %3295 = vmatpush1.msra.mxu0 %v2197
    %3296 = vmatprep.subr.mxu0 0.0
    %3297 = vmatpush1.msra.mxu0 %v2198
    %3298 = vmatprep.subr.mxu0 0.0
    %3299 = vmatpush1.msra.mxu0 %v2199
    %3300 = vmatprep.subr.mxu0 0.0
    %3301 = vmatpush1.msra.mxu0 %v2200
    %3302 = vmatprep.subr.mxu0 0.0
    %3303 = vmatpush1.msra.mxu0 %v2201
    %3304 = vmatprep.subr.mxu0 0.0
    %3305 = vmatpush1.msra.mxu0 %v2202
    %3306 = vmatprep.subr.mxu0 0.0
    %3307 = vmatpush1.msra.mxu0 %v2203
    %3308 = vmatprep.subr.mxu0 0.0
    %3309 = vmatpush1.msra.mxu0 %v2204
    %3310 = vmatprep.subr.mxu0 0.0
    %3311 = vmatpush1.msra.mxu0 %v2205
    %3312 = vmatprep.subr.mxu0 0.0
    %3313 = vmatpush1.msra.mxu0 %v2206
    %3314 = vmatprep.subr.mxu0 0.0
    %3315 = vmatpush1.msra.mxu0 %v2207
    %3316 = vmatprep.subr.mxu0 0.0
    %3317 = vmatpush1.msra.mxu0 %v2208
    %3318 = vmatprep.subr.mxu0 0.0
    %3319 = vmatpush1.msra.mxu0 %v2209
    %3320 = vmatprep.subr.mxu0 0.0
    %3321 = vmatpush1.msra.mxu0 %v2210
    %3322 = vmatprep.subr.mxu0 0.0
    %3323 = vmatpush1.msra.mxu0 %v2211
    %3324 = vmatprep.subr.mxu0 0.0
    %3325 = vmatpush1.msra.mxu0 %v2212
    %3326 = vmatprep.subr.mxu0 0.0
    %3327 = vmatpush1.msra.mxu0 %v2213
    %3328 = vmatprep.subr.mxu0 0.0
    %3329 = vmatpush1.msra.mxu0 %v2214
    %3330 = vmatprep.subr.mxu0 0.0
    %3331 = vmatpush1.msra.mxu0 %v2215
    %3332 = vmatprep.subr.mxu0 0.0
    %3333 = vmatpush1.msra.mxu0 %v2216
    %3334 = vmatprep.subr.mxu0 0.0
    %3335 = vmatpush1.msra.mxu0 %v2217
    %3336 = vmatprep.subr.mxu0 0.0
    %3337 = vmatpush1.msra.mxu0 %v2218
    %3338 = vmatprep.subr.mxu0 0.0
    %3339 = vmatpush1.msra.mxu0 %v2219
    %3340 = vmatprep.subr.mxu0 0.0
    %3341 = vmatpush1.msra.mxu0 %v2220
    %3342 = vmatprep.subr.mxu0 0.0
    %3343 = vmatpush1.msra.mxu0 %v2221
    %3344 = vmatprep.mubr.f32.mxu0 %v3134
    %3345 = vmatmul.mubr.f32.gmra.mrb[0].mxu0 %v3132
    %v3346 = vpop.f32.mrb[0].mxu0
    %v3347 = vadd.f32 %v3277, %v3346
    %v3348 = vpop.f32.mrb[0].mxu0
    %3349 = vdwg.mxu0
    %3350 = vmatprep.subr.mxu0 0.0
    %3351 = vmatpush1.msra.mxu0 %v2222
    %3352 = vmatprep.subr.mxu0 0.0
    %3353 = vmatpush1.msra.mxu0 %v2223
    %3354 = vmatprep.subr.mxu0 0.0
    %3355 = vmatpush1.msra.mxu0 %v2224
    %3356 = vmatprep.subr.mxu0 0.0
    %3357 = vmatpush1.msra.mxu0 %v2225
    %3358 = vmatprep.subr.mxu0 0.0
    %3359 = vmatpush1.msra.mxu0 %v2226
    %3360 = vmatprep.subr.mxu0 0.0
    %3361 = vmatpush1.msra.mxu0 %v2227
    %3362 = vmatprep.subr.mxu0 0.0
    %3363 = vmatpush1.msra.mxu0 %v2228
    %3364 = vmatprep.subr.mxu0 0.0
    %3365 = vmatpush1.msra.mxu0 %v2229
    %3366 = vmatprep.subr.mxu0 0.0
    %3367 = vmatpush1.msra.mxu0 %v2230
    %3368 = vmatprep.subr.mxu0 0.0
    %3369 = vmatpush1.msra.mxu0 %v2231
    %3370 = vmatprep.subr.mxu0 0.0
    %3371 = vmatpush1.msra.mxu0 %v2232
    %3372 = vmatprep.subr.mxu0 0.0
    %3373 = vmatpush1.msra.mxu0 %v2233
    %3374 = vmatprep.subr.mxu0 0.0
    %3375 = vmatpush1.msra.mxu0 %v2234
    %3376 = vmatprep.subr.mxu0 0.0
    %3377 = vmatpush1.msra.mxu0 %v2235
    %3378 = vmatprep.subr.mxu0 0.0
    %3379 = vmatpush1.msra.mxu0 %v2236
    %3380 = vmatprep.subr.mxu0 0.0
    %3381 = vmatpush1.msra.mxu0 %v2237
    %3382 = vmatprep.subr.mxu0 0.0
    %3383 = vmatpush1.msra.mxu0 %v2238
    %3384 = vmatprep.subr.mxu0 0.0
    %3385 = vmatpush1.msra.mxu0 %v2239
    %3386 = vmatprep.subr.mxu0 0.0
    %3387 = vmatpush1.msra.mxu0 %v2240
    %3388 = vmatprep.subr.mxu0 0.0
    %3389 = vmatpush1.msra.mxu0 %v2241
    %3390 = vmatprep.subr.mxu0 0.0
    %3391 = vmatpush1.msra.mxu0 %v2242
    %3392 = vmatprep.subr.mxu0 0.0
    %3393 = vmatpush1.msra.mxu0 %v2243
    %3394 = vmatprep.subr.mxu0 0.0
    %3395 = vmatpush1.msra.mxu0 %v2244
    %3396 = vmatprep.subr.mxu0 0.0
    %3397 = vmatpush1.msra.mxu0 %v2245
    %3398 = vmatprep.subr.mxu0 0.0
    %3399 = vmatpush1.msra.mxu0 %v2246
    %3400 = vmatprep.subr.mxu0 0.0
    %3401 = vmatpush1.msra.mxu0 %v2247
    %3402 = vmatprep.subr.mxu0 0.0
    %3403 = vmatpush1.msra.mxu0 %v2248
    %3404 = vmatprep.subr.mxu0 0.0
    %3405 = vmatpush1.msra.mxu0 %v2249
    %3406 = vmatprep.subr.mxu0 0.0
    %3407 = vmatpush1.msra.mxu0 %v2250
    %3408 = vmatprep.subr.mxu0 0.0
    %3409 = vmatpush1.msra.mxu0 %v2251
    %3410 = vmatprep.subr.mxu0 0.0
    %3411 = vmatpush1.msra.mxu0 %v2252
    %3412 = vmatprep.subr.mxu0 0.0
    %3413 = vmatpush1.msra.mxu0 %v2253
    %3414 = vmatprep.mubr.f32.mxu0 %v3138
    %3415 = vmatmul.mubr.f32.gmra.mrb[0].mxu0 %v3136
    %v3416 = vpop.f32.mrb[0].mxu0
    %v3417 = vadd.f32 %v3347, %v3416
    %v3418 = vpop.f32.mrb[0].mxu0
    %3419 = vdwg.mxu0
    %v3420 = vcvt.s32.f32 %v122
    %v3421 = vld [vmem:[%s11] sm:$0xff]
    %v3422 = vld [vmem:[%s11 + $0x8] sm:$0xff]
    %v3423 = vld [vmem:[%s11 + $0x10] sm:$0xff]
    %v3424 = vld [vmem:[%s11 + $0x18] sm:$0xff]
    %v3425 = vld [vmem:[%s12] sm:$0x1]
    %vm3426 = vcmask 261120
    %v3428 = vsel %vm3426, %v2532, 0
    %3430 = vmatprep.subr.mxu0 0.0
    %3431 = vmatpush1.msra.mxu0 %v3421
    %3432 = vmatprep.subr.mxu0 0.0
    %3433 = vmatpush1.msra.mxu0 %v3422
    %3434 = vmatprep.subr.mxu0 0.0
    %3435 = vmatpush1.msra.mxu0 %v3423
    %3436 = vmatprep.subr.mxu0 0.0
    %3437 = vmatpush1.msra.mxu0 %v3424
    %3438 = vmatprep.subr.mxu0 0.0
    %3439 = vmatpush1.msra.mxu0 0.0
    %3440 = vmatprep.subr.mxu0 0.0
    %3441 = vmatpush1.msra.mxu0 0.0
    %3442 = vmatprep.subr.mxu0 0.0
    %3443 = vmatpush1.msra.mxu0 0.0
    %3444 = vmatprep.subr.mxu0 0.0
    %3445 = vmatpush1.msra.mxu0 0.0
    %3446 = vmatprep.subr.mxu0 0.0
    %3447 = vmatpush1.msra.mxu0 0.0
    %3448 = vmatprep.subr.mxu0 0.0
    %3449 = vmatpush1.msra.mxu0 0.0
    %3450 = vmatprep.subr.mxu0 0.0
    %3451 = vmatpush1.msra.mxu0 0.0
    %3452 = vmatprep.subr.mxu0 0.0
    %3453 = vmatpush1.msra.mxu0 0.0
    %3454 = vmatprep.subr.mxu0 0.0
    %3455 = vmatpush1.msra.mxu0 0.0
    %3456 = vmatprep.subr.mxu0 0.0
    %3457 = vmatpush1.msra.mxu0 0.0
    %3458 = vmatprep.subr.mxu0 0.0
    %3459 = vmatpush1.msra.mxu0 0.0
    %3460 = vmatprep.subr.mxu0 0.0
    %3461 = vmatpush1.msra.mxu0 0.0
    %3462 = vmatprep.subr.mxu0 0.0
    %3463 = vmatpush1.msra.mxu0 0.0
    %3464 = vmatprep.subr.mxu0 0.0
    %3465 = vmatpush1.msra.mxu0 0.0
    %3466 = vmatprep.subr.mxu0 0.0
    %3467 = vmatpush1.msra.mxu0 0.0
    %3468 = vmatprep.subr.mxu0 0.0
    %3469 = vmatpush1.msra.mxu0 0.0
    %3470 = vmatprep.subr.mxu0 0.0
    %3471 = vmatpush1.msra.mxu0 0.0
    %3472 = vmatprep.subr.mxu0 0.0
    %3473 = vmatpush1.msra.mxu0 0.0
    %3474 = vmatprep.subr.mxu0 0.0
    %3475 = vmatpush1.msra.mxu0 0.0
    %3476 = vmatprep.subr.mxu0 0.0
    %3477 = vmatpush1.msra.mxu0 0.0
    %3478 = vmatprep.subr.mxu0 0.0
    %3479 = vmatpush1.msra.mxu0 0.0
    %3480 = vmatprep.subr.mxu0 0.0
    %3481 = vmatpush1.msra.mxu0 0.0
    %3482 = vmatprep.subr.mxu0 0.0
    %3483 = vmatpush1.msra.mxu0 0.0
    %3484 = vmatprep.subr.mxu0 0.0
    %3485 = vmatpush1.msra.mxu0 0.0
    %3486 = vmatprep.subr.mxu0 0.0
    %3487 = vmatpush1.msra.mxu0 0.0
    %3488 = vmatprep.subr.mxu0 0.0
    %3489 = vmatpush1.msra.mxu0 0.0
    %3490 = vmatprep.subr.mxu0 0.0
    %3491 = vmatpush1.msra.mxu0 0.0
    %3492 = vmatprep.subr.mxu0 0.0
    %3493 = vmatpush1.msra.mxu0 0.0
    %3494 = vmatprep.mubr.f32.mxu0 0.0
    %3495 = vmatmul.mubr.f32.gmra.mrb[0].mxu0 %v3428
    %v3496 = vpop.f32.mrb[0].mxu0
    %v3497 = vadd.f32 %v3425, %v3496
    %v3498 = vpop.f32.mrb[0].mxu0
    %3499 = vdwg.mxu0
    %v3500 = vmax.f32 %v3497, 0.0
    %v3501 = vld [vmem:[%s13] sm:$0xff]
    %v3502 = vld [vmem:[%s13 + $0x8] sm:$0xff]
    %v3503 = vld [vmem:[%s13 + $0x10] sm:$0xff]
    %v3504 = vld [vmem:[%s13 + $0x18] sm:$0xff]
    %v3505 = vld [vmem:[%s14] sm:$0x1]
    %v3507 = vsel %vm3426, %v3500, 0
    %3509 = vmatprep.subr.mxu0 0.0
    %3510 = vmatpush1.msra.mxu0 %v3501
    %3511 = vmatprep.subr.mxu0 0.0
    %3512 = vmatpush1.msra.mxu0 %v3502
    %3513 = vmatprep.subr.mxu0 0.0
    %3514 = vmatpush1.msra.mxu0 %v3503
    %3515 = vmatprep.subr.mxu0 0.0
    %3516 = vmatpush1.msra.mxu0 %v3504
    %3517 = vmatprep.subr.mxu0 0.0
    %3518 = vmatpush1.msra.mxu0 0.0
    %3519 = vmatprep.subr.mxu0 0.0
    %3520 = vmatpush1.msra.mxu0 0.0
    %3521 = vmatprep.subr.mxu0 0.0
    %3522 = vmatpush1.msra.mxu0 0.0
    %3523 = vmatprep.subr.mxu0 0.0
    %3524 = vmatpush1.msra.mxu0 0.0
    %3525 = vmatprep.subr.mxu0 0.0
    %3526 = vmatpush1.msra.mxu0 0.0
    %3527 = vmatprep.subr.mxu0 0.0
    %3528 = vmatpush1.msra.mxu0 0.0
    %3529 = vmatprep.subr.mxu0 0.0
    %3530 = vmatpush1.msra.mxu0 0.0
    %3531 = vmatprep.subr.mxu0 0.0
    %3532 = vmatpush1.msra.mxu0 0.0
    %3533 = vmatprep.subr.mxu0 0.0
    %3534 = vmatpush1.msra.mxu0 0.0
    %3535 = vmatprep.subr.mxu0 0.0
    %3536 = vmatpush1.msra.mxu0 0.0
    %3537 = vmatprep.subr.mxu0 0.0
    %3538 = vmatpush1.msra.mxu0 0.0
    %3539 = vmatprep.subr.mxu0 0.0
    %3540 = vmatpush1.msra.mxu0 0.0
    %3541 = vmatprep.subr.mxu0 0.0
    %3542 = vmatpush1.msra.mxu0 0.0
    %3543 = vmatprep.subr.mxu0 0.0
    %3544 = vmatpush1.msra.mxu0 0.0
    %3545 = vmatprep.subr.mxu0 0.0
    %3546 = vmatpush1.msra.mxu0 0.0
    %3547 = vmatprep.subr.mxu0 0.0
    %3548 = vmatpush1.msra.mxu0 0.0
    %3549 = vmatprep.subr.mxu0 0.0
    %3550 = vmatpush1.msra.mxu0 0.0
    %3551 = vmatprep.subr.mxu0 0.0
    %3552 = vmatpush1.msra.mxu0 0.0
    %3553 = vmatprep.subr.mxu0 0.0
    %3554 = vmatpush1.msra.mxu0 0.0
    %3555 = vmatprep.subr.mxu0 0.0
    %3556 = vmatpush1.msra.mxu0 0.0
    %3557 = vmatprep.subr.mxu0 0.0
    %3558 = vmatpush1.msra.mxu0 0.0
    %3559 = vmatprep.subr.mxu0 0.0
    %3560 = vmatpush1.msra.mxu0 0.0
    %3561 = vmatprep.subr.mxu0 0.0
    %3562 = vmatpush1.msra.mxu0 0.0
    %3563 = vmatprep.subr.mxu0 0.0
    %3564 = vmatpush1.msra.mxu0 0.0
    %3565 = vmatprep.subr.mxu0 0.0
    %3566 = vmatpush1.msra.mxu0 0.0
    %3567 = vmatprep.subr.mxu0 0.0
    %3568 = vmatpush1.msra.mxu0 0.0
    %3569 = vmatprep.subr.mxu0 0.0
    %3570 = vmatpush1.msra.mxu0 0.0
    %3571 = vmatprep.subr.mxu0 0.0
    %3572 = vmatpush1.msra.mxu0 0.0
    %3573 = vmatprep.mubr.f32.mxu0 0.0
    %3574 = vmatmul.mubr.f32.gmra.mrb[0].mxu0 %v3507
    %v3575 = vpop.f32.mrb[0].mxu0
    %v3576 = vadd.f32 %v3505, %v3575
    %v3577 = vpop.f32.mrb[0].mxu0
    %3578 = vdwg.mxu0
    %vm3579 = vcmask 581632
    %v3580 = vsel %vm3579, %v3576, -inf
    %3581 = vmax.xlane.f32.xlu0 %v3580
    %v3582 = vpop.xlane.xlu0 %3581
    %vm3583 = vcmp.ge.f32.partialorder %v3576, %v3582
    %v3584 = vsel %vm3583, %v3420, 72.0
    %v3585 = vsel %vm3579, %v3584, inf
    %3586 = vmin.xlane.f32.xlu0 %v3585
    %v3587 = vpop.xlane.xlu0 %3586
    %vm3588 = vcmp.eq.f32.partialorder %v3420, %v3587
    %v3589 = vsel %vm3588, 1, 0
    %v3590 = vcvt.s32.f32 %v3589
    %s3591 = sld [smem:[#allocation2]]
    %v3592 = vld [vmem:[%s19] sm:$0xff]
    %v3593 = vld [vmem:[%s19 + $0x8] sm:$0xff]
    %v3594 = vld [vmem:[%s19 + $0x10] sm:$0xff]
    %v3595 = vld [vmem:[%s19 + $0x18] sm:$0xff]
    %v3596 = vld [vmem:[%s20] sm:$0xff]
    %v3597 = vld [vmem:[%s20 + $0x8] sm:$0xff]
    %v3598 = vld [vmem:[%s20 + $0x10] sm:$0xff]
    %v3599 = vld [vmem:[%s20 + $0x18] sm:$0xff]
    %v3601 = vsel %vm3426, %v2827, 0
    %3603 = vmatprep.subr.mxu0 0.0
    %3604 = vmatpush1.msra.mxu0 %v3596
    %3605 = vmatprep.subr.mxu0 0.0
    %3606 = vmatpush1.msra.mxu0 %v3597
    %3607 = vmatprep.subr.mxu0 0.0
    %3608 = vmatpush1.msra.mxu0 %v3598
    %3609 = vmatprep.subr.mxu0 0.0
    %3610 = vmatpush1.msra.mxu0 %v3599
    %3611 = vmatprep.subr.mxu0 0.0
    %3612 = vmatpush1.msra.mxu0 0.0
    %3613 = vmatprep.subr.mxu0 0.0
    %3614 = vmatpush1.msra.mxu0 0.0
    %3615 = vmatprep.subr.mxu0 0.0
    %3616 = vmatpush1.msra.mxu0 0.0
    %3617 = vmatprep.subr.mxu0 0.0
    %3618 = vmatpush1.msra.mxu0 0.0
    %3619 = vmatprep.subr.mxu0 0.0
    %3620 = vmatpush1.msra.mxu0 0.0
    %3621 = vmatprep.subr.mxu0 0.0
    %3622 = vmatpush1.msra.mxu0 0.0
    %3623 = vmatprep.subr.mxu0 0.0
    %3624 = vmatpush1.msra.mxu0 0.0
    %3625 = vmatprep.subr.mxu0 0.0
    %3626 = vmatpush1.msra.mxu0 0.0
    %3627 = vmatprep.subr.mxu0 0.0
    %3628 = vmatpush1.msra.mxu0 0.0
    %3629 = vmatprep.subr.mxu0 0.0
    %3630 = vmatpush1.msra.mxu0 0.0
    %3631 = vmatprep.subr.mxu0 0.0
    %3632 = vmatpush1.msra.mxu0 0.0
    %3633 = vmatprep.subr.mxu0 0.0
    %3634 = vmatpush1.msra.mxu0 0.0
    %3635 = vmatprep.subr.mxu0 0.0
    %3636 = vmatpush1.msra.mxu0 0.0
    %3637 = vmatprep.subr.mxu0 0.0
    %3638 = vmatpush1.msra.mxu0 0.0
    %3639 = vmatprep.subr.mxu0 0.0
    %3640 = vmatpush1.msra.mxu0 0.0
    %3641 = vmatprep.subr.mxu0 0.0
    %3642 = vmatpush1.msra.mxu0 0.0
    %3643 = vmatprep.subr.mxu0 0.0
    %3644 = vmatpush1.msra.mxu0 0.0
    %3645 = vmatprep.subr.mxu0 0.0
    %3646 = vmatpush1.msra.mxu0 0.0
    %3647 = vmatprep.subr.mxu0 0.0
    %3648 = vmatpush1.msra.mxu0 0.0
    %3649 = vmatprep.subr.mxu0 0.0
    %3650 = vmatpush1.msra.mxu0 0.0
    %3651 = vmatprep.subr.mxu0 0.0
    %3652 = vmatpush1.msra.mxu0 0.0
    %3653 = vmatprep.subr.mxu0 0.0
    %3654 = vmatpush1.msra.mxu0 0.0
    %3655 = vmatprep.subr.mxu0 0.0
    %3656 = vmatpush1.msra.mxu0 0.0
    %3657 = vmatprep.subr.mxu0 0.0
    %3658 = vmatpush1.msra.mxu0 0.0
    %3659 = vmatprep.subr.mxu0 0.0
    %3660 = vmatpush1.msra.mxu0 0.0
    %3661 = vmatprep.subr.mxu0 0.0
    %3662 = vmatpush1.msra.mxu0 0.0
    %3663 = vmatprep.subr.mxu0 0.0
    %3664 = vmatpush1.msra.mxu0 0.0
    %3665 = vmatprep.subr.mxu0 0.0
    %3666 = vmatpush1.msra.mxu0 0.0
    %3667 = vmatprep.mubr.f32.mxu0 0.0
    %3668 = vmatmul.mubr.f32.gmra.mrb[0].mxu0 %v3601
    %v3669 = vpop.f32.mrb[0].mxu0
    %v3670 = vadd.f32 0.0, %v3669
    %v3671 = vpop.f32.mrb[0].mxu0
    %3672 = vdwg.mxu0
    %3673 = vmatprep.subr.mxu0 0.0
    %3674 = vmatpush1.msra.mxu0 %v3592
    %3675 = vmatprep.subr.mxu0 0.0
    %3676 = vmatpush1.msra.mxu0 %v3593
    %3677 = vmatprep.subr.mxu0 0.0
    %3678 = vmatpush1.msra.mxu0 %v3594
    %3679 = vmatprep.subr.mxu0 0.0
    %3680 = vmatpush1.msra.mxu0 %v3595
    %3681 = vmatprep.subr.mxu0 0.0
    %3682 = vmatpush1.msra.mxu0 0.0
    %3683 = vmatprep.subr.mxu0 0.0
    %3684 = vmatpush1.msra.mxu0 0.0
    %3685 = vmatprep.subr.mxu0 0.0
    %3686 = vmatpush1.msra.mxu0 0.0
    %3687 = vmatprep.subr.mxu0 0.0
    %3688 = vmatpush1.msra.mxu0 0.0
    %3689 = vmatprep.subr.mxu0 0.0
    %3690 = vmatpush1.msra.mxu0 0.0
    %3691 = vmatprep.subr.mxu0 0.0
    %3692 = vmatpush1.msra.mxu0 0.0
    %3693 = vmatprep.subr.mxu0 0.0
    %3694 = vmatpush1.msra.mxu0 0.0
    %3695 = vmatprep.subr.mxu0 0.0
    %3696 = vmatpush1.msra.mxu0 0.0
    %3697 = vmatprep.subr.mxu0 0.0
    %3698 = vmatpush1.msra.mxu0 0.0
    %3699 = vmatprep.subr.mxu0 0.0
    %3700 = vmatpush1.msra.mxu0 0.0
    %3701 = vmatprep.subr.mxu0 0.0
    %3702 = vmatpush1.msra.mxu0 0.0
    %3703 = vmatprep.subr.mxu0 0.0
    %3704 = vmatpush1.msra.mxu0 0.0
    %3705 = vmatprep.subr.mxu0 0.0
    %3706 = vmatpush1.msra.mxu0 0.0
    %3707 = vmatprep.subr.mxu0 0.0
    %3708 = vmatpush1.msra.mxu0 0.0
    %3709 = vmatprep.subr.mxu0 0.0
    %3710 = vmatpush1.msra.mxu0 0.0
    %3711 = vmatprep.subr.mxu0 0.0
    %3712 = vmatpush1.msra.mxu0 0.0
    %3713 = vmatprep.subr.mxu0 0.0
    %3714 = vmatpush1.msra.mxu0 0.0
    %3715 = vmatprep.subr.mxu0 0.0
    %3716 = vmatpush1.msra.mxu0 0.0
    %3717 = vmatprep.subr.mxu0 0.0
    %3718 = vmatpush1.msra.mxu0 0.0
    %3719 = vmatprep.subr.mxu0 0.0
    %3720 = vmatpush1.msra.mxu0 0.0
    %3721 = vmatprep.subr.mxu0 0.0
    %3722 = vmatpush1.msra.mxu0 0.0
    %3723 = vmatprep.subr.mxu0 0.0
    %3724 = vmatpush1.msra.mxu0 0.0
    %3725 = vmatprep.subr.mxu0 0.0
    %3726 = vmatpush1.msra.mxu0 0.0
    %3727 = vmatprep.subr.mxu0 0.0
    %3728 = vmatpush1.msra.mxu0 0.0
    %3729 = vmatprep.subr.mxu0 0.0
    %3730 = vmatpush1.msra.mxu0 0.0
    %3731 = vmatprep.subr.mxu0 0.0
    %3732 = vmatpush1.msra.mxu0 0.0
    %3733 = vmatprep.subr.mxu0 0.0
    %3734 = vmatpush1.msra.mxu0 0.0
    %3735 = vmatprep.subr.mxu0 0.0
    %3736 = vmatpush1.msra.mxu0 0.0
    %3737 = vmatprep.mubr.f32.mxu0 0.0
    %3738 = vmatmul.mubr.f32.gmra.mrb[0].mxu0 %v3428
    %v3739 = vpop.f32.mrb[0].mxu0
    %v3740 = vadd.f32 %v3670, %v3739
    %v3741 = vpop.f32.mrb[0].mxu0
    %3742 = vdwg.mxu0
    %v3743 = vld [vmem:[%s22] sm:$0xff]
    %v3744 = vld [vmem:[%s22 + $0x8] sm:$0xff]
    %v3745 = vld [vmem:[%s22 + $0x10] sm:$0xff]
    %v3746 = vld [vmem:[%s22 + $0x18] sm:$0xff]
    %v3747 = vld [vmem:[%s22 + $0x20] sm:$0xff]
    %v3748 = vld [vmem:[%s22 + $0x28] sm:$0xff]
    %v3749 = vld [vmem:[%s22 + $0x30] sm:$0xff]
    %v3750 = vld [vmem:[%s22 + $0x38] sm:$0xff]
    %v3751 = vld [vmem:[%s22 + $0x40] sm:$0xff]
    %v3753 = vsel %vm409, %v3590, 0
    %3755 = vmatprep.subr.mxu0 0.0
    %3756 = vmatpush1.msra.mxu0 %v3743
    %3757 = vmatprep.subr.mxu0 0.0
    %3758 = vmatpush1.msra.mxu0 %v3744
    %3759 = vmatprep.subr.mxu0 0.0
    %3760 = vmatpush1.msra.mxu0 %v3745
    %3761 = vmatprep.subr.mxu0 0.0
    %3762 = vmatpush1.msra.mxu0 %v3746
    %3763 = vmatprep.subr.mxu0 0.0
    %3764 = vmatpush1.msra.mxu0 %v3747
    %3765 = vmatprep.subr.mxu0 0.0
    %3766 = vmatpush1.msra.mxu0 %v3748
    %3767 = vmatprep.subr.mxu0 0.0
    %3768 = vmatpush1.msra.mxu0 %v3749
    %3769 = vmatprep.subr.mxu0 0.0
    %3770 = vmatpush1.msra.mxu0 %v3750
    %3771 = vmatprep.subr.mxu0 0.0
    %3772 = vmatpush1.msra.mxu0 %v3751
    %3773 = vmatprep.subr.mxu0 0.0
    %3774 = vmatpush1.msra.mxu0 0.0
    %3775 = vmatprep.subr.mxu0 0.0
    %3776 = vmatpush1.msra.mxu0 0.0
    %3777 = vmatprep.subr.mxu0 0.0
    %3778 = vmatpush1.msra.mxu0 0.0
    %3779 = vmatprep.subr.mxu0 0.0
    %3780 = vmatpush1.msra.mxu0 0.0
    %3781 = vmatprep.subr.mxu0 0.0
    %3782 = vmatpush1.msra.mxu0 0.0
    %3783 = vmatprep.subr.mxu0 0.0
    %3784 = vmatpush1.msra.mxu0 0.0
    %3785 = vmatprep.subr.mxu0 0.0
    %3786 = vmatpush1.msra.mxu0 0.0
    %3787 = vmatprep.subr.mxu0 0.0
    %3788 = vmatpush1.msra.mxu0 0.0
    %3789 = vmatprep.subr.mxu0 0.0
    %3790 = vmatpush1.msra.mxu0 0.0
    %3791 = vmatprep.subr.mxu0 0.0
    %3792 = vmatpush1.msra.mxu0 0.0
    %3793 = vmatprep.subr.mxu0 0.0
    %3794 = vmatpush1.msra.mxu0 0.0
    %3795 = vmatprep.subr.mxu0 0.0
    %3796 = vmatpush1.msra.mxu0 0.0
    %3797 = vmatprep.subr.mxu0 0.0
    %3798 = vmatpush1.msra.mxu0 0.0
    %3799 = vmatprep.subr.mxu0 0.0
    %3800 = vmatpush1.msra.mxu0 0.0
    %3801 = vmatprep.subr.mxu0 0.0
    %3802 = vmatpush1.msra.mxu0 0.0
    %3803 = vmatprep.subr.mxu0 0.0
    %3804 = vmatpush1.msra.mxu0 0.0
    %3805 = vmatprep.subr.mxu0 0.0
    %3806 = vmatpush1.msra.mxu0 0.0
    %3807 = vmatprep.subr.mxu0 0.0
    %3808 = vmatpush1.msra.mxu0 0.0
    %3809 = vmatprep.subr.mxu0 0.0
    %3810 = vmatpush1.msra.mxu0 0.0
    %3811 = vmatprep.subr.mxu0 0.0
    %3812 = vmatpush1.msra.mxu0 0.0
    %3813 = vmatprep.subr.mxu0 0.0
    %3814 = vmatpush1.msra.mxu0 0.0
    %3815 = vmatprep.subr.mxu0 0.0
    %3816 = vmatpush1.msra.mxu0 0.0
    %3817 = vmatprep.subr.mxu0 0.0
    %3818 = vmatpush1.msra.mxu0 0.0
    %3819 = vmatprep.mubr.f32.mxu0 0.0
    %3820 = vmatmul.mubr.f32.gmra.mrb[0].mxu0 %v3753
    %v3821 = vpop.f32.mrb[0].mxu0
    %v3822 = vadd.f32 0.0, %v3821
    %v3823 = vpop.f32.mrb[0].mxu0
    %3824 = vdwg.mxu0
    %v3825 = vadd.f32 %v3740, %v3822
    %v3826 = vld [vmem:[%s21] sm:$0x1]
    %v3827 = vstv %s3591
    %v3828 = vmul.f32 %v3827, %v3826
    %v3829 = vadd.f32 %v3825, %v3828
    %v3830 = vld [vmem:[%s23] sm:$0x1]
    %v3831 = vadd.f32 %v3829, %v3830
    %v3832 = vmax.f32 %v3831, 0.0
    %v3833 = vld [vmem:[%s24] sm:$0xff]
    %v3834 = vld [vmem:[%s24 + $0x8] sm:$0xff]
    %v3835 = vld [vmem:[%s24 + $0x10] sm:$0xff]
    %v3836 = vld [vmem:[%s24 + $0x18] sm:$0xff]
    %v3837 = vld [vmem:[%s25] sm:$0x1]
    %v3839 = vsel %vm3426, %v3832, 0
    %3841 = vmatprep.subr.mxu0 0.0
    %3842 = vmatpush1.msra.mxu0 %v3833
    %3843 = vmatprep.subr.mxu0 0.0
    %3844 = vmatpush1.msra.mxu0 %v3834
    %3845 = vmatprep.subr.mxu0 0.0
    %3846 = vmatpush1.msra.mxu0 %v3835
    %3847 = vmatprep.subr.mxu0 0.0
    %3848 = vmatpush1.msra.mxu0 %v3836
    %3849 = vmatprep.subr.mxu0 0.0
    %3850 = vmatpush1.msra.mxu0 0.0
    %3851 = vmatprep.subr.mxu0 0.0
    %3852 = vmatpush1.msra.mxu0 0.0
    %3853 = vmatprep.subr.mxu0 0.0
    %3854 = vmatpush1.msra.mxu0 0.0
    %3855 = vmatprep.subr.mxu0 0.0
    %3856 = vmatpush1.msra.mxu0 0.0
    %3857 = vmatprep.subr.mxu0 0.0
    %3858 = vmatpush1.msra.mxu0 0.0
    %3859 = vmatprep.subr.mxu0 0.0
    %3860 = vmatpush1.msra.mxu0 0.0
    %3861 = vmatprep.subr.mxu0 0.0
    %3862 = vmatpush1.msra.mxu0 0.0
    %3863 = vmatprep.subr.mxu0 0.0
    %3864 = vmatpush1.msra.mxu0 0.0
    %3865 = vmatprep.subr.mxu0 0.0
    %3866 = vmatpush1.msra.mxu0 0.0
    %3867 = vmatprep.subr.mxu0 0.0
    %3868 = vmatpush1.msra.mxu0 0.0
    %3869 = vmatprep.subr.mxu0 0.0
    %3870 = vmatpush1.msra.mxu0 0.0
    %3871 = vmatprep.subr.mxu0 0.0
    %3872 = vmatpush1.msra.mxu0 0.0
    %3873 = vmatprep.subr.mxu0 0.0
    %3874 = vmatpush1.msra.mxu0 0.0
    %3875 = vmatprep.subr.mxu0 0.0
    %3876 = vmatpush1.msra.mxu0 0.0
    %3877 = vmatprep.subr.mxu0 0.0
    %3878 = vmatpush1.msra.mxu0 0.0
    %3879 = vmatprep.subr.mxu0 0.0
    %3880 = vmatpush1.msra.mxu0 0.0
    %3881 = vmatprep.subr.mxu0 0.0
    %3882 = vmatpush1.msra.mxu0 0.0
    %3883 = vmatprep.subr.mxu0 0.0
    %3884 = vmatpush1.msra.mxu0 0.0
    %3885 = vmatprep.subr.mxu0 0.0
    %3886 = vmatpush1.msra.mxu0 0.0
    %3887 = vmatprep.subr.mxu0 0.0
    %3888 = vmatpush1.msra.mxu0 0.0
    %3889 = vmatprep.subr.mxu0 0.0
    %3890 = vmatpush1.msra.mxu0 0.0
    %3891 = vmatprep.subr.mxu0 0.0
    %3892 = vmatpush1.msra.mxu0 0.0
    %3893 = vmatprep.subr.mxu0 0.0
    %3894 = vmatpush1.msra.mxu0 0.0
    %3895 = vmatprep.subr.mxu0 0.0
    %3896 = vmatpush1.msra.mxu0 0.0
    %3897 = vmatprep.subr.mxu0 0.0
    %3898 = vmatpush1.msra.mxu0 0.0
    %3899 = vmatprep.subr.mxu0 0.0
    %3900 = vmatpush1.msra.mxu0 0.0
    %3901 = vmatprep.subr.mxu0 0.0
    %3902 = vmatpush1.msra.mxu0 0.0
    %3903 = vmatprep.subr.mxu0 0.0
    %3904 = vmatpush1.msra.mxu0 0.0
    %3905 = vmatprep.mubr.f32.mxu0 0.0
    %3906 = vmatmul.mubr.f32.gmra.mrb[0].mxu0 %v3839
    %v3907 = vpop.f32.mrb[0].mxu0
    %v3908 = vadd.f32 %v3837, %v3907
    %v3909 = vpop.f32.mrb[0].mxu0
    %3910 = vdwg.mxu0
    %v3911 = vadd.f32 %v2532, %v3908
    %v3913 = vsel %vm3426, %v3911, 0
    %3915 = vmatprep.subr.mxu0 0.0
    %3916 = vmatpush1.msra.mxu0 %v3421
    %3917 = vmatprep.subr.mxu0 0.0
    %3918 = vmatpush1.msra.mxu0 %v3422
    %3919 = vmatprep.subr.mxu0 0.0
    %3920 = vmatpush1.msra.mxu0 %v3423
    %3921 = vmatprep.subr.mxu0 0.0
    %3922 = vmatpush1.msra.mxu0 %v3424
    %3923 = vmatprep.subr.mxu0 0.0
    %3924 = vmatpush1.msra.mxu0 0.0
    %3925 = vmatprep.subr.mxu0 0.0
    %3926 = vmatpush1.msra.mxu0 0.0
    %3927 = vmatprep.subr.mxu0 0.0
    %3928 = vmatpush1.msra.mxu0 0.0
    %3929 = vmatprep.subr.mxu0 0.0
    %3930 = vmatpush1.msra.mxu0 0.0
    %3931 = vmatprep.subr.mxu0 0.0
    %3932 = vmatpush1.msra.mxu0 0.0
    %3933 = vmatprep.subr.mxu0 0.0
    %3934 = vmatpush1.msra.mxu0 0.0
    %3935 = vmatprep.subr.mxu0 0.0
    %3936 = vmatpush1.msra.mxu0 0.0
    %3937 = vmatprep.subr.mxu0 0.0
    %3938 = vmatpush1.msra.mxu0 0.0
    %3939 = vmatprep.subr.mxu0 0.0
    %3940 = vmatpush1.msra.mxu0 0.0
    %3941 = vmatprep.subr.mxu0 0.0
    %3942 = vmatpush1.msra.mxu0 0.0
    %3943 = vmatprep.subr.mxu0 0.0
    %3944 = vmatpush1.msra.mxu0 0.0
    %3945 = vmatprep.subr.mxu0 0.0
    %3946 = vmatpush1.msra.mxu0 0.0
    %3947 = vmatprep.subr.mxu0 0.0
    %3948 = vmatpush1.msra.mxu0 0.0
    %3949 = vmatprep.subr.mxu0 0.0
    %3950 = vmatpush1.msra.mxu0 0.0
    %3951 = vmatprep.subr.mxu0 0.0
    %3952 = vmatpush1.msra.mxu0 0.0
    %3953 = vmatprep.subr.mxu0 0.0
    %3954 = vmatpush1.msra.mxu0 0.0
    %3955 = vmatprep.subr.mxu0 0.0
    %3956 = vmatpush1.msra.mxu0 0.0
    %3957 = vmatprep.subr.mxu0 0.0
    %3958 = vmatpush1.msra.mxu0 0.0
    %3959 = vmatprep.subr.mxu0 0.0
    %3960 = vmatpush1.msra.mxu0 0.0
    %3961 = vmatprep.subr.mxu0 0.0
    %3962 = vmatpush1.msra.mxu0 0.0
    %3963 = vmatprep.subr.mxu0 0.0
    %3964 = vmatpush1.msra.mxu0 0.0
    %3965 = vmatprep.subr.mxu0 0.0
    %3966 = vmatpush1.msra.mxu0 0.0
    %3967 = vmatprep.subr.mxu0 0.0
    %3968 = vmatpush1.msra.mxu0 0.0
    %3969 = vmatprep.subr.mxu0 0.0
    %3970 = vmatpush1.msra.mxu0 0.0
    %3971 = vmatprep.subr.mxu0 0.0
    %3972 = vmatpush1.msra.mxu0 0.0
    %3973 = vmatprep.subr.mxu0 0.0
    %3974 = vmatpush1.msra.mxu0 0.0
    %3975 = vmatprep.subr.mxu0 0.0
    %3976 = vmatpush1.msra.mxu0 0.0
    %3977 = vmatprep.subr.mxu0 0.0
    %3978 = vmatpush1.msra.mxu0 0.0
    %3979 = vmatprep.mubr.f32.mxu0 0.0
    %3980 = vmatmul.mubr.f32.gmra.mrb[0].mxu0 %v3913
    %v3981 = vpop.f32.mrb[0].mxu0
    %v3982 = vadd.f32 %v3425, %v3981
    %v3983 = vpop.f32.mrb[0].mxu0
    %3984 = vdwg.mxu0
    %v3985 = vmax.f32 %v3982, 0.0
    %v3987 = vsel %vm3426, %v3985, 0
    %3989 = vmatprep.subr.mxu0 0.0
    %3990 = vmatpush1.msra.mxu0 %v3501
    %3991 = vmatprep.subr.mxu0 0.0
    %3992 = vmatpush1.msra.mxu0 %v3502
    %3993 = vmatprep.subr.mxu0 0.0
    %3994 = vmatpush1.msra.mxu0 %v3503
    %3995 = vmatprep.subr.mxu0 0.0
    %3996 = vmatpush1.msra.mxu0 %v3504
    %3997 = vmatprep.subr.mxu0 0.0
    %3998 = vmatpush1.msra.mxu0 0.0
    %3999 = vmatprep.subr.mxu0 0.0
    %4000 = vmatpush1.msra.mxu0 0.0
    %4001 = vmatprep.subr.mxu0 0.0
    %4002 = vmatpush1.msra.mxu0 0.0
    %4003 = vmatprep.subr.mxu0 0.0
    %4004 = vmatpush1.msra.mxu0 0.0
    %4005 = vmatprep.subr.mxu0 0.0
    %4006 = vmatpush1.msra.mxu0 0.0
    %4007 = vmatprep.subr.mxu0 0.0
    %4008 = vmatpush1.msra.mxu0 0.0
    %4009 = vmatprep.subr.mxu0 0.0
    %4010 = vmatpush1.msra.mxu0 0.0
    %4011 = vmatprep.subr.mxu0 0.0
    %4012 = vmatpush1.msra.mxu0 0.0
    %4013 = vmatprep.subr.mxu0 0.0
    %4014 = vmatpush1.msra.mxu0 0.0
    %4015 = vmatprep.subr.mxu0 0.0
    %4016 = vmatpush1.msra.mxu0 0.0
    %4017 = vmatprep.subr.mxu0 0.0
    %4018 = vmatpush1.msra.mxu0 0.0
    %4019 = vmatprep.subr.mxu0 0.0
    %4020 = vmatpush1.msra.mxu0 0.0
    %4021 = vmatprep.subr.mxu0 0.0
    %4022 = vmatpush1.msra.mxu0 0.0
    %4023 = vmatprep.subr.mxu0 0.0
    %4024 = vmatpush1.msra.mxu0 0.0
    %4025 = vmatprep.subr.mxu0 0.0
    %4026 = vmatpush1.msra.mxu0 0.0
    %4027 = vmatprep.subr.mxu0 0.0
    %4028 = vmatpush1.msra.mxu0 0.0
    %4029 = vmatprep.subr.mxu0 0.0
    %4030 = vmatpush1.msra.mxu0 0.0
    %4031 = vmatprep.subr.mxu0 0.0
    %4032 = vmatpush1.msra.mxu0 0.0
    %4033 = vmatprep.subr.mxu0 0.0
    %4034 = vmatpush1.msra.mxu0 0.0
    %4035 = vmatprep.subr.mxu0 0.0
    %4036 = vmatpush1.msra.mxu0 0.0
    %4037 = vmatprep.subr.mxu0 0.0
    %4038 = vmatpush1.msra.mxu0 0.0
    %4039 = vmatprep.subr.mxu0 0.0
    %4040 = vmatpush1.msra.mxu0 0.0
    %4041 = vmatprep.subr.mxu0 0.0
    %4042 = vmatpush1.msra.mxu0 0.0
    %4043 = vmatprep.subr.mxu0 0.0
    %4044 = vmatpush1.msra.mxu0 0.0
    %4045 = vmatprep.subr.mxu0 0.0
    %4046 = vmatpush1.msra.mxu0 0.0
    %4047 = vmatprep.subr.mxu0 0.0
    %4048 = vmatpush1.msra.mxu0 0.0
    %4049 = vmatprep.subr.mxu0 0.0
    %4050 = vmatpush1.msra.mxu0 0.0
    %4051 = vmatprep.subr.mxu0 0.0
    %4052 = vmatpush1.msra.mxu0 0.0
    %4053 = vmatprep.mubr.f32.mxu0 0.0
    %4054 = vmatmul.mubr.f32.gmra.mrb[0].mxu0 %v3987
    %v4055 = vpop.f32.mrb[0].mxu0
    %v4056 = vadd.f32 %v3505, %v4055
    %v4057 = vpop.f32.mrb[0].mxu0
    %4058 = vdwg.mxu0
    %v4059 = vsel %vm3579, %v4056, -inf
    %4060 = vmax.xlane.f32.xlu0 %v4059
    %v4061 = vpop.xlane.xlu0 %4060
    %vm4062 = vcmp.ge.f32.partialorder %v4056, %v4061
    %v4063 = vsel %vm4062, %v3420, 72.0
    %v4064 = vsel %vm3579, %v4063, inf
    %4065 = vmin.xlane.f32.xlu0 %v4064
    %v4066 = vpop.xlane.xlu0 %4065
    %vm4067 = vcmp.eq.f32.partialorder %v3420, %v4066
    %v4068 = vsel %vm4067, 1, 0
    %v4069 = vcvt.s32.f32 %v4068
    %s4070 = sld [smem:[#allocation2 + $0x1]]
    %v4072 = vsel %vm3426, %v3122, 0
    %4074 = vmatprep.subr.mxu0 0.0
    %4075 = vmatpush1.msra.mxu0 %v3596
    %4076 = vmatprep.subr.mxu0 0.0
    %4077 = vmatpush1.msra.mxu0 %v3597
    %4078 = vmatprep.subr.mxu0 0.0
    %4079 = vmatpush1.msra.mxu0 %v3598
    %4080 = vmatprep.subr.mxu0 0.0
    %4081 = vmatpush1.msra.mxu0 %v3599
    %4082 = vmatprep.subr.mxu0 0.0
    %4083 = vmatpush1.msra.mxu0 0.0
    %4084 = vmatprep.subr.mxu0 0.0
    %4085 = vmatpush1.msra.mxu0 0.0
    %4086 = vmatprep.subr.mxu0 0.0
    %4087 = vmatpush1.msra.mxu0 0.0
    %4088 = vmatprep.subr.mxu0 0.0
    %4089 = vmatpush1.msra.mxu0 0.0
    %4090 = vmatprep.subr.mxu0 0.0
    %4091 = vmatpush1.msra.mxu0 0.0
    %4092 = vmatprep.subr.mxu0 0.0
    %4093 = vmatpush1.msra.mxu0 0.0
    %4094 = vmatprep.subr.mxu0 0.0
    %4095 = vmatpush1.msra.mxu0 0.0
    %4096 = vmatprep.subr.mxu0 0.0
    %4097 = vmatpush1.msra.mxu0 0.0
    %4098 = vmatprep.subr.mxu0 0.0
    %4099 = vmatpush1.msra.mxu0 0.0
    %4100 = vmatprep.subr.mxu0 0.0
    %4101 = vmatpush1.msra.mxu0 0.0
    %4102 = vmatprep.subr.mxu0 0.0
    %4103 = vmatpush1.msra.mxu0 0.0
    %4104 = vmatprep.subr.mxu0 0.0
    %4105 = vmatpush1.msra.mxu0 0.0
    %4106 = vmatprep.subr.mxu0 0.0
    %4107 = vmatpush1.msra.mxu0 0.0
    %4108 = vmatprep.subr.mxu0 0.0
    %4109 = vmatpush1.msra.mxu0 0.0
    %4110 = vmatprep.subr.mxu0 0.0
    %4111 = vmatpush1.msra.mxu0 0.0
    %4112 = vmatprep.subr.mxu0 0.0
    %4113 = vmatpush1.msra.mxu0 0.0
    %4114 = vmatprep.subr.mxu0 0.0
    %4115 = vmatpush1.msra.mxu0 0.0
    %4116 = vmatprep.subr.mxu0 0.0
    %4117 = vmatpush1.msra.mxu0 0.0
    %4118 = vmatprep.subr.mxu0 0.0
    %4119 = vmatpush1.msra.mxu0 0.0
    %4120 = vmatprep.subr.mxu0 0.0
    %4121 = vmatpush1.msra.mxu0 0.0
    %4122 = vmatprep.subr.mxu0 0.0
    %4123 = vmatpush1.msra.mxu0 0.0
    %4124 = vmatprep.subr.mxu0 0.0
    %4125 = vmatpush1.msra.mxu0 0.0
    %4126 = vmatprep.subr.mxu0 0.0
    %4127 = vmatpush1.msra.mxu0 0.0
    %4128 = vmatprep.subr.mxu0 0.0
    %4129 = vmatpush1.msra.mxu0 0.0
    %4130 = vmatprep.subr.mxu0 0.0
    %4131 = vmatpush1.msra.mxu0 0.0
    %4132 = vmatprep.subr.mxu0 0.0
    %4133 = vmatpush1.msra.mxu0 0.0
    %4134 = vmatprep.subr.mxu0 0.0
    %4135 = vmatpush1.msra.mxu0 0.0
    %4136 = vmatprep.subr.mxu0 0.0
    %4137 = vmatpush1.msra.mxu0 0.0
    %4138 = vmatprep.mubr.f32.mxu0 0.0
    %4139 = vmatmul.mubr.f32.gmra.mrb[0].mxu0 %v4072
    %v4140 = vpop.f32.mrb[0].mxu0
    %v4141 = vadd.f32 0.0, %v4140
    %v4142 = vpop.f32.mrb[0].mxu0
    %4143 = vdwg.mxu0
    %4144 = vmatprep.subr.mxu0 0.0
    %4145 = vmatpush1.msra.mxu0 %v3592
    %4146 = vmatprep.subr.mxu0 0.0
    %4147 = vmatpush1.msra.mxu0 %v3593
    %4148 = vmatprep.subr.mxu0 0.0
    %4149 = vmatpush1.msra.mxu0 %v3594
    %4150 = vmatprep.subr.mxu0 0.0
    %4151 = vmatpush1.msra.mxu0 %v3595
    %4152 = vmatprep.subr.mxu0 0.0
    %4153 = vmatpush1.msra.mxu0 0.0
    %4154 = vmatprep.subr.mxu0 0.0
    %4155 = vmatpush1.msra.mxu0 0.0
    %4156 = vmatprep.subr.mxu0 0.0
    %4157 = vmatpush1.msra.mxu0 0.0
    %4158 = vmatprep.subr.mxu0 0.0
    %4159 = vmatpush1.msra.mxu0 0.0
    %4160 = vmatprep.subr.mxu0 0.0
    %4161 = vmatpush1.msra.mxu0 0.0
    %4162 = vmatprep.subr.mxu0 0.0
    %4163 = vmatpush1.msra.mxu0 0.0
    %4164 = vmatprep.subr.mxu0 0.0
    %4165 = vmatpush1.msra.mxu0 0.0
    %4166 = vmatprep.subr.mxu0 0.0
    %4167 = vmatpush1.msra.mxu0 0.0
    %4168 = vmatprep.subr.mxu0 0.0
    %4169 = vmatpush1.msra.mxu0 0.0
    %4170 = vmatprep.subr.mxu0 0.0
    %4171 = vmatpush1.msra.mxu0 0.0
    %4172 = vmatprep.subr.mxu0 0.0
    %4173 = vmatpush1.msra.mxu0 0.0
    %4174 = vmatprep.subr.mxu0 0.0
    %4175 = vmatpush1.msra.mxu0 0.0
    %4176 = vmatprep.subr.mxu0 0.0
    %4177 = vmatpush1.msra.mxu0 0.0
    %4178 = vmatprep.subr.mxu0 0.0
    %4179 = vmatpush1.msra.mxu0 0.0
    %4180 = vmatprep.subr.mxu0 0.0
    %4181 = vmatpush1.msra.mxu0 0.0
    %4182 = vmatprep.subr.mxu0 0.0
    %4183 = vmatpush1.msra.mxu0 0.0
    %4184 = vmatprep.subr.mxu0 0.0
    %4185 = vmatpush1.msra.mxu0 0.0
    %4186 = vmatprep.subr.mxu0 0.0
    %4187 = vmatpush1.msra.mxu0 0.0
    %4188 = vmatprep.subr.mxu0 0.0
    %4189 = vmatpush1.msra.mxu0 0.0
    %4190 = vmatprep.subr.mxu0 0.0
    %4191 = vmatpush1.msra.mxu0 0.0
    %4192 = vmatprep.subr.mxu0 0.0
    %4193 = vmatpush1.msra.mxu0 0.0
    %4194 = vmatprep.subr.mxu0 0.0
    %4195 = vmatpush1.msra.mxu0 0.0
    %4196 = vmatprep.subr.mxu0 0.0
    %4197 = vmatpush1.msra.mxu0 0.0
    %4198 = vmatprep.subr.mxu0 0.0
    %4199 = vmatpush1.msra.mxu0 0.0
    %4200 = vmatprep.subr.mxu0 0.0
    %4201 = vmatpush1.msra.mxu0 0.0
    %4202 = vmatprep.subr.mxu0 0.0
    %4203 = vmatpush1.msra.mxu0 0.0
    %4204 = vmatprep.subr.mxu0 0.0
    %4205 = vmatpush1.msra.mxu0 0.0
    %4206 = vmatprep.subr.mxu0 0.0
    %4207 = vmatpush1.msra.mxu0 0.0
    %4208 = vmatprep.mubr.f32.mxu0 0.0
    %4209 = vmatmul.mubr.f32.gmra.mrb[0].mxu0 %v3913
    %v4210 = vpop.f32.mrb[0].mxu0
    %v4211 = vadd.f32 %v4141, %v4210
    %v4212 = vpop.f32.mrb[0].mxu0
    %4213 = vdwg.mxu0
    %v4215 = vsel %vm409, %v4069, 0
    %4217 = vmatprep.subr.mxu0 0.0
    %4218 = vmatpush1.msra.mxu0 %v3743
    %4219 = vmatprep.subr.mxu0 0.0
    %4220 = vmatpush1.msra.mxu0 %v3744
    %4221 = vmatprep.subr.mxu0 0.0
    %4222 = vmatpush1.msra.mxu0 %v3745
    %4223 = vmatprep.subr.mxu0 0.0
    %4224 = vmatpush1.msra.mxu0 %v3746
    %4225 = vmatprep.subr.mxu0 0.0
    %4226 = vmatpush1.msra.mxu0 %v3747
    %4227 = vmatprep.subr.mxu0 0.0
    %4228 = vmatpush1.msra.mxu0 %v3748
    %4229 = vmatprep.subr.mxu0 0.0
    %4230 = vmatpush1.msra.mxu0 %v3749
    %4231 = vmatprep.subr.mxu0 0.0
    %4232 = vmatpush1.msra.mxu0 %v3750
    %4233 = vmatprep.subr.mxu0 0.0
    %4234 = vmatpush1.msra.mxu0 %v3751
    %4235 = vmatprep.subr.mxu0 0.0
    %4236 = vmatpush1.msra.mxu0 0.0
    %4237 = vmatprep.subr.mxu0 0.0
    %4238 = vmatpush1.msra.mxu0 0.0
    %4239 = vmatprep.subr.mxu0 0.0
    %4240 = vmatpush1.msra.mxu0 0.0
    %4241 = vmatprep.subr.mxu0 0.0
    %4242 = vmatpush1.msra.mxu0 0.0
    %4243 = vmatprep.subr.mxu0 0.0
    %4244 = vmatpush1.msra.mxu0 0.0
    %4245 = vmatprep.subr.mxu0 0.0
    %4246 = vmatpush1.msra.mxu0 0.0
    %4247 = vmatprep.subr.mxu0 0.0
    %4248 = vmatpush1.msra.mxu0 0.0
    %4249 = vmatprep.subr.mxu0 0.0
    %4250 = vmatpush1.msra.mxu0 0.0
    %4251 = vmatprep.subr.mxu0 0.0
    %4252 = vmatpush1.msra.mxu0 0.0
    %4253 = vmatprep.subr.mxu0 0.0
    %4254 = vmatpush1.msra.mxu0 0.0
    %4255 = vmatprep.subr.mxu0 0.0
    %4256 = vmatpush1.msra.mxu0 0.0
    %4257 = vmatprep.subr.mxu0 0.0
    %4258 = vmatpush1.msra.mxu0 0.0
    %4259 = vmatprep.subr.mxu0 0.0
    %4260 = vmatpush1.msra.mxu0 0.0
    %4261 = vmatprep.subr.mxu0 0.0
    %4262 = vmatpush1.msra.mxu0 0.0
    %4263 = vmatprep.subr.mxu0 0.0
    %4264 = vmatpush1.msra.mxu0 0.0
    %4265 = vmatprep.subr.mxu0 0.0
    %4266 = vmatpush1.msra.mxu0 0.0
    %4267 = vmatprep.subr.mxu0 0.0
    %4268 = vmatpush1.msra.mxu0 0.0
    %4269 = vmatprep.subr.mxu0 0.0
    %4270 = vmatpush1.msra.mxu0 0.0
    %4271 = vmatprep.subr.mxu0 0.0
    %4272 = vmatpush1.msra.mxu0 0.0
    %4273 = vmatprep.subr.mxu0 0.0
    %4274 = vmatpush1.msra.mxu0 0.0
    %4275 = vmatprep.subr.mxu0 0.0
    %4276 = vmatpush1.msra.mxu0 0.0
    %4277 = vmatprep.subr.mxu0 0.0
    %4278 = vmatpush1.msra.mxu0 0.0
    %4279 = vmatprep.subr.mxu0 0.0
    %4280 = vmatpush1.msra.mxu0 0.0
    %4281 = vmatprep.mubr.f32.mxu0 0.0
    %4282 = vmatmul.mubr.f32.gmra.mrb[0].mxu0 %v4215
    %v4283 = vpop.f32.mrb[0].mxu0
    %v4284 = vadd.f32 0.0, %v4283
    %v4285 = vpop.f32.mrb[0].mxu0
    %4286 = vdwg.mxu0
    %v4287 = vadd.f32 %v4211, %v4284
    %v4288 = vstv %s4070
    %v4289 = vmul.f32 %v4288, %v3826
    %v4290 = vadd.f32 %v4287, %v4289
    %v4291 = vadd.f32 %v4290, %v3830
    %v4292 = vmax.f32 %v4291, 0.0
    %v4294 = vsel %vm3426, %v4292, 0
    %4296 = vmatprep.subr.mxu0 0.0
    %4297 = vmatpush1.msra.mxu0 %v3833
    %4298 = vmatprep.subr.mxu0 0.0
    %4299 = vmatpush1.msra.mxu0 %v3834
    %4300 = vmatprep.subr.mxu0 0.0
    %4301 = vmatpush1.msra.mxu0 %v3835
    %4302 = vmatprep.subr.mxu0 0.0
    %4303 = vmatpush1.msra.mxu0 %v3836
    %4304 = vmatprep.subr.mxu0 0.0
    %4305 = vmatpush1.msra.mxu0 0.0
    %4306 = vmatprep.subr.mxu0 0.0
    %4307 = vmatpush1.msra.mxu0 0.0
    %4308 = vmatprep.subr.mxu0 0.0
    %4309 = vmatpush1.msra.mxu0 0.0
    %4310 = vmatprep.subr.mxu0 0.0
    %4311 = vmatpush1.msra.mxu0 0.0
    %4312 = vmatprep.subr.mxu0 0.0
    %4313 = vmatpush1.msra.mxu0 0.0
    %4314 = vmatprep.subr.mxu0 0.0
    %4315 = vmatpush1.msra.mxu0 0.0
    %4316 = vmatprep.subr.mxu0 0.0
    %4317 = vmatpush1.msra.mxu0 0.0
    %4318 = vmatprep.subr.mxu0 0.0
    %4319 = vmatpush1.msra.mxu0 0.0
    %4320 = vmatprep.subr.mxu0 0.0
    %4321 = vmatpush1.msra.mxu0 0.0
    %4322 = vmatprep.subr.mxu0 0.0
    %4323 = vmatpush1.msra.mxu0 0.0
    %4324 = vmatprep.subr.mxu0 0.0
    %4325 = vmatpush1.msra.mxu0 0.0
    %4326 = vmatprep.subr.mxu0 0.0
    %4327 = vmatpush1.msra.mxu0 0.0
    %4328 = vmatprep.subr.mxu0 0.0
    %4329 = vmatpush1.msra.mxu0 0.0
    %4330 = vmatprep.subr.mxu0 0.0
    %4331 = vmatpush1.msra.mxu0 0.0
    %4332 = vmatprep.subr.mxu0 0.0
    %4333 = vmatpush1.msra.mxu0 0.0
    %4334 = vmatprep.subr.mxu0 0.0
    %4335 = vmatpush1.msra.mxu0 0.0
    %4336 = vmatprep.subr.mxu0 0.0
    %4337 = vmatpush1.msra.mxu0 0.0
    %4338 = vmatprep.subr.mxu0 0.0
    %4339 = vmatpush1.msra.mxu0 0.0
    %4340 = vmatprep.subr.mxu0 0.0
    %4341 = vmatpush1.msra.mxu0 0.0
    %4342 = vmatprep.subr.mxu0 0.0
    %4343 = vmatpush1.msra.mxu0 0.0
    %4344 = vmatprep.subr.mxu0 0.0
    %4345 = vmatpush1.msra.mxu0 0.0
    %4346 = vmatprep.subr.mxu0 0.0
    %4347 = vmatpush1.msra.mxu0 0.0
    %4348 = vmatprep.subr.mxu0 0.0
    %4349 = vmatpush1.msra.mxu0 0.0
    %4350 = vmatprep.subr.mxu0 0.0
    %4351 = vmatpush1.msra.mxu0 0.0
    %4352 = vmatprep.subr.mxu0 0.0
    %4353 = vmatpush1.msra.mxu0 0.0
    %4354 = vmatprep.subr.mxu0 0.0
    %4355 = vmatpush1.msra.mxu0 0.0
    %4356 = vmatprep.subr.mxu0 0.0
    %4357 = vmatpush1.msra.mxu0 0.0
    %4358 = vmatprep.subr.mxu0 0.0
    %4359 = vmatpush1.msra.mxu0 0.0
    %4360 = vmatprep.mubr.f32.mxu0 0.0
    %4361 = vmatmul.mubr.f32.gmra.mrb[0].mxu0 %v4294
    %v4362 = vpop.f32.mrb[0].mxu0
    %v4363 = vadd.f32 %v3837, %v4362
    %v4364 = vpop.f32.mrb[0].mxu0
    %4365 = vdwg.mxu0
    %v4366 = vadd.f32 %v3911, %v4363
    %v4368 = vsel %vm3426, %v4366, 0
    %4370 = vmatprep.subr.mxu0 0.0
    %4371 = vmatpush1.msra.mxu0 %v3421
    %4372 = vmatprep.subr.mxu0 0.0
    %4373 = vmatpush1.msra.mxu0 %v3422
    %4374 = vmatprep.subr.mxu0 0.0
    %4375 = vmatpush1.msra.mxu0 %v3423
    %4376 = vmatprep.subr.mxu0 0.0
    %4377 = vmatpush1.msra.mxu0 %v3424
    %4378 = vmatprep.subr.mxu0 0.0
    %4379 = vmatpush1.msra.mxu0 0.0
    %4380 = vmatprep.subr.mxu0 0.0
    %4381 = vmatpush1.msra.mxu0 0.0
    %4382 = vmatprep.subr.mxu0 0.0
    %4383 = vmatpush1.msra.mxu0 0.0
    %4384 = vmatprep.subr.mxu0 0.0
    %4385 = vmatpush1.msra.mxu0 0.0
    %4386 = vmatprep.subr.mxu0 0.0
    %4387 = vmatpush1.msra.mxu0 0.0
    %4388 = vmatprep.subr.mxu0 0.0
    %4389 = vmatpush1.msra.mxu0 0.0
    %4390 = vmatprep.subr.mxu0 0.0
    %4391 = vmatpush1.msra.mxu0 0.0
    %4392 = vmatprep.subr.mxu0 0.0
    %4393 = vmatpush1.msra.mxu0 0.0
    %4394 = vmatprep.subr.mxu0 0.0
    %4395 = vmatpush1.msra.mxu0 0.0
    %4396 = vmatprep.subr.mxu0 0.0
    %4397 = vmatpush1.msra.mxu0 0.0
    %4398 = vmatprep.subr.mxu0 0.0
    %4399 = vmatpush1.msra.mxu0 0.0
    %4400 = vmatprep.subr.mxu0 0.0
    %4401 = vmatpush1.msra.mxu0 0.0
    %4402 = vmatprep.subr.mxu0 0.0
    %4403 = vmatpush1.msra.mxu0 0.0
    %4404 = vmatprep.subr.mxu0 0.0
    %4405 = vmatpush1.msra.mxu0 0.0
    %4406 = vmatprep.subr.mxu0 0.0
    %4407 = vmatpush1.msra.mxu0 0.0
    %4408 = vmatprep.subr.mxu0 0.0
    %4409 = vmatpush1.msra.mxu0 0.0
    %4410 = vmatprep.subr.mxu0 0.0
    %4411 = vmatpush1.msra.mxu0 0.0
    %4412 = vmatprep.subr.mxu0 0.0
    %4413 = vmatpush1.msra.mxu0 0.0
    %4414 = vmatprep.subr.mxu0 0.0
    %4415 = vmatpush1.msra.mxu0 0.0
    %4416 = vmatprep.subr.mxu0 0.0
    %4417 = vmatpush1.msra.mxu0 0.0
    %4418 = vmatprep.subr.mxu0 0.0
    %4419 = vmatpush1.msra.mxu0 0.0
    %4420 = vmatprep.subr.mxu0 0.0
    %4421 = vmatpush1.msra.mxu0 0.0
    %4422 = vmatprep.subr.mxu0 0.0
    %4423 = vmatpush1.msra.mxu0 0.0
    %4424 = vmatprep.subr.mxu0 0.0
    %4425 = vmatpush1.msra.mxu0 0.0
    %4426 = vmatprep.subr.mxu0 0.0
    %4427 = vmatpush1.msra.mxu0 0.0
    %4428 = vmatprep.subr.mxu0 0.0
    %4429 = vmatpush1.msra.mxu0 0.0
    %4430 = vmatprep.subr.mxu0 0.0
    %4431 = vmatpush1.msra.mxu0 0.0
    %4432 = vmatprep.subr.mxu0 0.0
    %4433 = vmatpush1.msra.mxu0 0.0
    %4434 = vmatprep.mubr.f32.mxu0 0.0
    %4435 = vmatmul.mubr.f32.gmra.mrb[0].mxu0 %v4368
    %v4436 = vpop.f32.mrb[0].mxu0
    %v4437 = vadd.f32 %v3425, %v4436
    %v4438 = vpop.f32.mrb[0].mxu0
    %4439 = vdwg.mxu0
    %v4440 = vmax.f32 %v4437, 0.0
    %v4442 = vsel %vm3426, %v4440, 0
    %4444 = vmatprep.subr.mxu0 0.0
    %4445 = vmatpush1.msra.mxu0 %v3501
    %4446 = vmatprep.subr.mxu0 0.0
    %4447 = vmatpush1.msra.mxu0 %v3502
    %4448 = vmatprep.subr.mxu0 0.0
    %4449 = vmatpush1.msra.mxu0 %v3503
    %4450 = vmatprep.subr.mxu0 0.0
    %4451 = vmatpush1.msra.mxu0 %v3504
    %4452 = vmatprep.subr.mxu0 0.0
    %4453 = vmatpush1.msra.mxu0 0.0
    %4454 = vmatprep.subr.mxu0 0.0
    %4455 = vmatpush1.msra.mxu0 0.0
    %4456 = vmatprep.subr.mxu0 0.0
    %4457 = vmatpush1.msra.mxu0 0.0
    %4458 = vmatprep.subr.mxu0 0.0
    %4459 = vmatpush1.msra.mxu0 0.0
    %4460 = vmatprep.subr.mxu0 0.0
    %4461 = vmatpush1.msra.mxu0 0.0
    %4462 = vmatprep.subr.mxu0 0.0
    %4463 = vmatpush1.msra.mxu0 0.0
    %4464 = vmatprep.subr.mxu0 0.0
    %4465 = vmatpush1.msra.mxu0 0.0
    %4466 = vmatprep.subr.mxu0 0.0
    %4467 = vmatpush1.msra.mxu0 0.0
    %4468 = vmatprep.subr.mxu0 0.0
    %4469 = vmatpush1.msra.mxu0 0.0
    %4470 = vmatprep.subr.mxu0 0.0
    %4471 = vmatpush1.msra.mxu0 0.0
    %4472 = vmatprep.subr.mxu0 0.0
    %4473 = vmatpush1.msra.mxu0 0.0
    %4474 = vmatprep.subr.mxu0 0.0
    %4475 = vmatpush1.msra.mxu0 0.0
    %4476 = vmatprep.subr.mxu0 0.0
    %4477 = vmatpush1.msra.mxu0 0.0
    %4478 = vmatprep.subr.mxu0 0.0
    %4479 = vmatpush1.msra.mxu0 0.0
    %4480 = vmatprep.subr.mxu0 0.0
    %4481 = vmatpush1.msra.mxu0 0.0
    %4482 = vmatprep.subr.mxu0 0.0
    %4483 = vmatpush1.msra.mxu0 0.0
    %4484 = vmatprep.subr.mxu0 0.0
    %4485 = vmatpush1.msra.mxu0 0.0
    %4486 = vmatprep.subr.mxu0 0.0
    %4487 = vmatpush1.msra.mxu0 0.0
    %4488 = vmatprep.subr.mxu0 0.0
    %4489 = vmatpush1.msra.mxu0 0.0
    %4490 = vmatprep.subr.mxu0 0.0
    %4491 = vmatpush1.msra.mxu0 0.0
    %4492 = vmatprep.subr.mxu0 0.0
    %4493 = vmatpush1.msra.mxu0 0.0
    %4494 = vmatprep.subr.mxu0 0.0
    %4495 = vmatpush1.msra.mxu0 0.0
    %4496 = vmatprep.subr.mxu0 0.0
    %4497 = vmatpush1.msra.mxu0 0.0
    %4498 = vmatprep.subr.mxu0 0.0
    %4499 = vmatpush1.msra.mxu0 0.0
    %4500 = vmatprep.subr.mxu0 0.0
    %4501 = vmatpush1.msra.mxu0 0.0
    %4502 = vmatprep.subr.mxu0 0.0
    %4503 = vmatpush1.msra.mxu0 0.0
    %4504 = vmatprep.subr.mxu0 0.0
    %4505 = vmatpush1.msra.mxu0 0.0
    %4506 = vmatprep.subr.mxu0 0.0
    %4507 = vmatpush1.msra.mxu0 0.0
    %4508 = vmatprep.mubr.f32.mxu0 0.0
    %4509 = vmatmul.mubr.f32.gmra.mrb[0].mxu0 %v4442
    %v4510 = vpop.f32.mrb[0].mxu0
    %v4511 = vadd.f32 %v3505, %v4510
    %v4512 = vpop.f32.mrb[0].mxu0
    %4513 = vdwg.mxu0
    %v4514 = vsel %vm3579, %v4511, -inf
    %4515 = vmax.xlane.f32.xlu0 %v4514
    %v4516 = vpop.xlane.xlu0 %4515
    %vm4517 = vcmp.ge.f32.partialorder %v4511, %v4516
    %v4518 = vsel %vm4517, %v3420, 72.0
    %v4519 = vsel %vm3579, %v4518, inf
    %4520 = vmin.xlane.f32.xlu0 %v4519
    %v4521 = vpop.xlane.xlu0 %4520
    %vm4522 = vcmp.eq.f32.partialorder %v3420, %v4521
    %v4523 = vsel %vm4522, 1, 0
    %v4524 = vcvt.s32.f32 %v4523
    %s4525 = sld [smem:[#allocation2 + $0x2]]
    %v4527 = vsel %vm3426, %v3417, 0
    %4529 = vmatprep.subr.mxu0 0.0
    %4530 = vmatpush1.msra.mxu0 %v3596
    %4531 = vmatprep.subr.mxu0 0.0
    %4532 = vmatpush1.msra.mxu0 %v3597
    %4533 = vmatprep.subr.mxu0 0.0
    %4534 = vmatpush1.msra.mxu0 %v3598
    %4535 = vmatprep.subr.mxu0 0.0
    %4536 = vmatpush1.msra.mxu0 %v3599
    %4537 = vmatprep.subr.mxu0 0.0
    %4538 = vmatpush1.msra.mxu0 0.0
    %4539 = vmatprep.subr.mxu0 0.0
    %4540 = vmatpush1.msra.mxu0 0.0
    %4541 = vmatprep.subr.mxu0 0.0
    %4542 = vmatpush1.msra.mxu0 0.0
    %4543 = vmatprep.subr.mxu0 0.0
    %4544 = vmatpush1.msra.mxu0 0.0
    %4545 = vmatprep.subr.mxu0 0.0
    %4546 = vmatpush1.msra.mxu0 0.0
    %4547 = vmatprep.subr.mxu0 0.0
    %4548 = vmatpush1.msra.mxu0 0.0
    %4549 = vmatprep.subr.mxu0 0.0
    %4550 = vmatpush1.msra.mxu0 0.0
    %4551 = vmatprep.subr.mxu0 0.0
    %4552 = vmatpush1.msra.mxu0 0.0
    %4553 = vmatprep.subr.mxu0 0.0
    %4554 = vmatpush1.msra.mxu0 0.0
    %4555 = vmatprep.subr.mxu0 0.0
    %4556 = vmatpush1.msra.mxu0 0.0
    %4557 = vmatprep.subr.mxu0 0.0
    %4558 = vmatpush1.msra.mxu0 0.0
    %4559 = vmatprep.subr.mxu0 0.0
    %4560 = vmatpush1.msra.mxu0 0.0
    %4561 = vmatprep.subr.mxu0 0.0
    %4562 = vmatpush1.msra.mxu0 0.0
    %4563 = vmatprep.subr.mxu0 0.0
    %4564 = vmatpush1.msra.mxu0 0.0
    %4565 = vmatprep.subr.mxu0 0.0
    %4566 = vmatpush1.msra.mxu0 0.0
    %4567 = vmatprep.subr.mxu0 0.0
    %4568 = vmatpush1.msra.mxu0 0.0
    %4569 = vmatprep.subr.mxu0 0.0
    %4570 = vmatpush1.msra.mxu0 0.0
    %4571 = vmatprep.subr.mxu0 0.0
    %4572 = vmatpush1.msra.mxu0 0.0
    %4573 = vmatprep.subr.mxu0 0.0
    %4574 = vmatpush1.msra.mxu0 0.0
    %4575 = vmatprep.subr.mxu0 0.0
    %4576 = vmatpush1.msra.mxu0 0.0
    %4577 = vmatprep.subr.mxu0 0.0
    %4578 = vmatpush1.msra.mxu0 0.0
    %4579 = vmatprep.subr.mxu0 0.0
    %4580 = vmatpush1.msra.mxu0 0.0
    %4581 = vmatprep.subr.mxu0 0.0
    %4582 = vmatpush1.msra.mxu0 0.0
    %4583 = vmatprep.subr.mxu0 0.0
    %4584 = vmatpush1.msra.mxu0 0.0
    %4585 = vmatprep.subr.mxu0 0.0
    %4586 = vmatpush1.msra.mxu0 0.0
    %4587 = vmatprep.subr.mxu0 0.0
    %4588 = vmatpush1.msra.mxu0 0.0
    %4589 = vmatprep.subr.mxu0 0.0
    %4590 = vmatpush1.msra.mxu0 0.0
    %4591 = vmatprep.subr.mxu0 0.0
    %4592 = vmatpush1.msra.mxu0 0.0
    %4593 = vmatprep.mubr.f32.mxu0 0.0
    %4594 = vmatmul.mubr.f32.gmra.mrb[0].mxu0 %v4527
    %v4595 = vpop.f32.mrb[0].mxu0
    %v4596 = vadd.f32 0.0, %v4595
    %v4597 = vpop.f32.mrb[0].mxu0
    %4598 = vdwg.mxu0
    %4599 = vmatprep.subr.mxu0 0.0
    %4600 = vmatpush1.msra.mxu0 %v3592
    %4601 = vmatprep.subr.mxu0 0.0
    %4602 = vmatpush1.msra.mxu0 %v3593
    %4603 = vmatprep.subr.mxu0 0.0
    %4604 = vmatpush1.msra.mxu0 %v3594
    %4605 = vmatprep.subr.mxu0 0.0
    %4606 = vmatpush1.msra.mxu0 %v3595
    %4607 = vmatprep.subr.mxu0 0.0
    %4608 = vmatpush1.msra.mxu0 0.0
    %4609 = vmatprep.subr.mxu0 0.0
    %4610 = vmatpush1.msra.mxu0 0.0
    %4611 = vmatprep.subr.mxu0 0.0
    %4612 = vmatpush1.msra.mxu0 0.0
    %4613 = vmatprep.subr.mxu0 0.0
    %4614 = vmatpush1.msra.mxu0 0.0
    %4615 = vmatprep.subr.mxu0 0.0
    %4616 = vmatpush1.msra.mxu0 0.0
    %4617 = vmatprep.subr.mxu0 0.0
    %4618 = vmatpush1.msra.mxu0 0.0
    %4619 = vmatprep.subr.mxu0 0.0
    %4620 = vmatpush1.msra.mxu0 0.0
    %4621 = vmatprep.subr.mxu0 0.0
    %4622 = vmatpush1.msra.mxu0 0.0
    %4623 = vmatprep.subr.mxu0 0.0
    %4624 = vmatpush1.msra.mxu0 0.0
    %4625 = vmatprep.subr.mxu0 0.0
    %4626 = vmatpush1.msra.mxu0 0.0
    %4627 = vmatprep.subr.mxu0 0.0
    %4628 = vmatpush1.msra.mxu0 0.0
    %4629 = vmatprep.subr.mxu0 0.0
    %4630 = vmatpush1.msra.mxu0 0.0
    %4631 = vmatprep.subr.mxu0 0.0
    %4632 = vmatpush1.msra.mxu0 0.0
    %4633 = vmatprep.subr.mxu0 0.0
    %4634 = vmatpush1.msra.mxu0 0.0
    %4635 = vmatprep.subr.mxu0 0.0
    %4636 = vmatpush1.msra.mxu0 0.0
    %4637 = vmatprep.subr.mxu0 0.0
    %4638 = vmatpush1.msra.mxu0 0.0
    %4639 = vmatprep.subr.mxu0 0.0
    %4640 = vmatpush1.msra.mxu0 0.0
    %4641 = vmatprep.subr.mxu0 0.0
    %4642 = vmatpush1.msra.mxu0 0.0
    %4643 = vmatprep.subr.mxu0 0.0
    %4644 = vmatpush1.msra.mxu0 0.0
    %4645 = vmatprep.subr.mxu0 0.0
    %4646 = vmatpush1.msra.mxu0 0.0
    %4647 = vmatprep.subr.mxu0 0.0
    %4648 = vmatpush1.msra.mxu0 0.0
    %4649 = vmatprep.subr.mxu0 0.0
    %4650 = vmatpush1.msra.mxu0 0.0
    %4651 = vmatprep.subr.mxu0 0.0
    %4652 = vmatpush1.msra.mxu0 0.0
    %4653 = vmatprep.subr.mxu0 0.0
    %4654 = vmatpush1.msra.mxu0 0.0
    %4655 = vmatprep.subr.mxu0 0.0
    %4656 = vmatpush1.msra.mxu0 0.0
    %4657 = vmatprep.subr.mxu0 0.0
    %4658 = vmatpush1.msra.mxu0 0.0
    %4659 = vmatprep.subr.mxu0 0.0
    %4660 = vmatpush1.msra.mxu0 0.0
    %4661 = vmatprep.subr.mxu0 0.0
    %4662 = vmatpush1.msra.mxu0 0.0
    %4663 = vmatprep.mubr.f32.mxu0 0.0
    %4664 = vmatmul.mubr.f32.gmra.mrb[0].mxu0 %v4368
    %v4665 = vpop.f32.mrb[0].mxu0
    %v4666 = vadd.f32 %v4596, %v4665
    %v4667 = vpop.f32.mrb[0].mxu0
    %4668 = vdwg.mxu0
    %v4670 = vsel %vm409, %v4524, 0
    %4672 = vmatprep.subr.mxu0 0.0
    %4673 = vmatpush1.msra.mxu0 %v3743
    %4674 = vmatprep.subr.mxu0 0.0
    %4675 = vmatpush1.msra.mxu0 %v3744
    %4676 = vmatprep.subr.mxu0 0.0
    %4677 = vmatpush1.msra.mxu0 %v3745
    %4678 = vmatprep.subr.mxu0 0.0
    %4679 = vmatpush1.msra.mxu0 %v3746
    %4680 = vmatprep.subr.mxu0 0.0
    %4681 = vmatpush1.msra.mxu0 %v3747
    %4682 = vmatprep.subr.mxu0 0.0
    %4683 = vmatpush1.msra.mxu0 %v3748
    %4684 = vmatprep.subr.mxu0 0.0
    %4685 = vmatpush1.msra.mxu0 %v3749
    %4686 = vmatprep.subr.mxu0 0.0
    %4687 = vmatpush1.msra.mxu0 %v3750
    %4688 = vmatprep.subr.mxu0 0.0
    %4689 = vmatpush1.msra.mxu0 %v3751
    %4690 = vmatprep.subr.mxu0 0.0
    %4691 = vmatpush1.msra.mxu0 0.0
    %4692 = vmatprep.subr.mxu0 0.0
    %4693 = vmatpush1.msra.mxu0 0.0
    %4694 = vmatprep.subr.mxu0 0.0
    %4695 = vmatpush1.msra.mxu0 0.0
    %4696 = vmatprep.subr.mxu0 0.0
    %4697 = vmatpush1.msra.mxu0 0.0
    %4698 = vmatprep.subr.mxu0 0.0
    %4699 = vmatpush1.msra.mxu0 0.0
    %4700 = vmatprep.subr.mxu0 0.0
    %4701 = vmatpush1.msra.mxu0 0.0
    %4702 = vmatprep.subr.mxu0 0.0
    %4703 = vmatpush1.msra.mxu0 0.0
    %4704 = vmatprep.subr.mxu0 0.0
    %4705 = vmatpush1.msra.mxu0 0.0
    %4706 = vmatprep.subr.mxu0 0.0
    %4707 = vmatpush1.msra.mxu0 0.0
    %4708 = vmatprep.subr.mxu0 0.0
    %4709 = vmatpush1.msra.mxu0 0.0
    %4710 = vmatprep.subr.mxu0 0.0
    %4711 = vmatpush1.msra.mxu0 0.0
    %4712 = vmatprep.subr.mxu0 0.0
    %4713 = vmatpush1.msra.mxu0 0.0
    %4714 = vmatprep.subr.mxu0 0.0
    %4715 = vmatpush1.msra.mxu0 0.0
    %4716 = vmatprep.subr.mxu0 0.0
    %4717 = vmatpush1.msra.mxu0 0.0
    %4718 = vmatprep.subr.mxu0 0.0
    %4719 = vmatpush1.msra.mxu0 0.0
    %4720 = vmatprep.subr.mxu0 0.0
    %4721 = vmatpush1.msra.mxu0 0.0
    %4722 = vmatprep.subr.mxu0 0.0
    %4723 = vmatpush1.msra.mxu0 0.0
    %4724 = vmatprep.subr.mxu0 0.0
    %4725 = vmatpush1.msra.mxu0 0.0
    %4726 = vmatprep.subr.mxu0 0.0
    %4727 = vmatpush1.msra.mxu0 0.0
    %4728 = vmatprep.subr.mxu0 0.0
    %4729 = vmatpush1.msra.mxu0 0.0
    %4730 = vmatprep.subr.mxu0 0.0
    %4731 = vmatpush1.msra.mxu0 0.0
    %4732 = vmatprep.subr.mxu0 0.0
    %4733 = vmatpush1.msra.mxu0 0.0
    %4734 = vmatprep.subr.mxu0 0.0
    %4735 = vmatpush1.msra.mxu0 0.0
    %4736 = vmatprep.mubr.f32.mxu0 0.0
    %4737 = vmatmul.mubr.f32.gmra.mrb[0].mxu0 %v4670
    %v4738 = vpop.f32.mrb[0].mxu0
    %v4739 = vadd.f32 0.0, %v4738
    %v4740 = vpop.f32.mrb[0].mxu0
    %4741 = vdwg.mxu0
    %v4742 = vadd.f32 %v4666, %v4739
    %v4743 = vstv %s4525
    %v4744 = vmul.f32 %v4743, %v3826
    %v4745 = vadd.f32 %v4742, %v4744
    %v4746 = vadd.f32 %v4745, %v3830
    %v4747 = vmax.f32 %v4746, 0.0
    %v4749 = vsel %vm3426, %v4747, 0
    %4751 = vmatprep.subr.mxu0 0.0
    %4752 = vmatpush1.msra.mxu0 %v3833
    %4753 = vmatprep.subr.mxu0 0.0
    %4754 = vmatpush1.msra.mxu0 %v3834
    %4755 = vmatprep.subr.mxu0 0.0
    %4756 = vmatpush1.msra.mxu0 %v3835
    %4757 = vmatprep.subr.mxu0 0.0
    %4758 = vmatpush1.msra.mxu0 %v3836
    %4759 = vmatprep.subr.mxu0 0.0
    %4760 = vmatpush1.msra.mxu0 0.0
    %4761 = vmatprep.subr.mxu0 0.0
    %4762 = vmatpush1.msra.mxu0 0.0
    %4763 = vmatprep.subr.mxu0 0.0
    %4764 = vmatpush1.msra.mxu0 0.0
    %4765 = vmatprep.subr.mxu0 0.0
    %4766 = vmatpush1.msra.mxu0 0.0
    %4767 = vmatprep.subr.mxu0 0.0
    %4768 = vmatpush1.msra.mxu0 0.0
    %4769 = vmatprep.subr.mxu0 0.0
    %4770 = vmatpush1.msra.mxu0 0.0
    %4771 = vmatprep.subr.mxu0 0.0
    %4772 = vmatpush1.msra.mxu0 0.0
    %4773 = vmatprep.subr.mxu0 0.0
    %4774 = vmatpush1.msra.mxu0 0.0
    %4775 = vmatprep.subr.mxu0 0.0
    %4776 = vmatpush1.msra.mxu0 0.0
    %4777 = vmatprep.subr.mxu0 0.0
    %4778 = vmatpush1.msra.mxu0 0.0
    %4779 = vmatprep.subr.mxu0 0.0
    %4780 = vmatpush1.msra.mxu0 0.0
    %4781 = vmatprep.subr.mxu0 0.0
    %4782 = vmatpush1.msra.mxu0 0.0
    %4783 = vmatprep.subr.mxu0 0.0
    %4784 = vmatpush1.msra.mxu0 0.0
    %4785 = vmatprep.subr.mxu0 0.0
    %4786 = vmatpush1.msra.mxu0 0.0
    %4787 = vmatprep.subr.mxu0 0.0
    %4788 = vmatpush1.msra.mxu0 0.0
    %4789 = vmatprep.subr.mxu0 0.0
    %4790 = vmatpush1.msra.mxu0 0.0
    %4791 = vmatprep.subr.mxu0 0.0
    %4792 = vmatpush1.msra.mxu0 0.0
    %4793 = vmatprep.subr.mxu0 0.0
    %4794 = vmatpush1.msra.mxu0 0.0
    %4795 = vmatprep.subr.mxu0 0.0
    %4796 = vmatpush1.msra.mxu0 0.0
    %4797 = vmatprep.subr.mxu0 0.0
    %4798 = vmatpush1.msra.mxu0 0.0
    %4799 = vmatprep.subr.mxu0 0.0
    %4800 = vmatpush1.msra.mxu0 0.0
    %4801 = vmatprep.subr.mxu0 0.0
    %4802 = vmatpush1.msra.mxu0 0.0
    %4803 = vmatprep.subr.mxu0 0.0
    %4804 = vmatpush1.msra.mxu0 0.0
    %4805 = vmatprep.subr.mxu0 0.0
    %4806 = vmatpush1.msra.mxu0 0.0
    %4807 = vmatprep.subr.mxu0 0.0
    %4808 = vmatpush1.msra.mxu0 0.0
    %4809 = vmatprep.subr.mxu0 0.0
    %4810 = vmatpush1.msra.mxu0 0.0
    %4811 = vmatprep.subr.mxu0 0.0
    %4812 = vmatpush1.msra.mxu0 0.0
    %4813 = vmatprep.subr.mxu0 0.0
    %4814 = vmatpush1.msra.mxu0 0.0
    %4815 = vmatprep.mubr.f32.mxu0 0.0
    %4816 = vmatmul.mubr.f32.gmra.mrb[0].mxu0 %v4749
    %v4817 = vpop.f32.mrb[0].mxu0
    %v4818 = vadd.f32 %v3837, %v4817
    %v4819 = vpop.f32.mrb[0].mxu0
    %4820 = vdwg.mxu0
    %v4821 = vadd.f32 %v4366, %v4818
    %v4822 = vld [vmem:[%s15] sm:$0xff]
    %v4823 = vld [vmem:[%s15 + $0x8] sm:$0xff]
    %v4824 = vld [vmem:[%s15 + $0x10] sm:$0xff]
    %v4825 = vld [vmem:[%s15 + $0x18] sm:$0xff]
    %v4826 = vld [vmem:[%s16] sm:$0x1]
    %v4828 = vsel %vm3426, %v4821, 0
    %4830 = vmatprep.subr.mxu0 0.0
    %4831 = vmatpush1.msra.mxu0 %v4822
    %4832 = vmatprep.subr.mxu0 0.0
    %4833 = vmatpush1.msra.mxu0 %v4823
    %4834 = vmatprep.subr.mxu0 0.0
    %4835 = vmatpush1.msra.mxu0 %v4824
    %4836 = vmatprep.subr.mxu0 0.0
    %4837 = vmatpush1.msra.mxu0 %v4825
    %4838 = vmatprep.subr.mxu0 0.0
    %4839 = vmatpush1.msra.mxu0 0.0
    %4840 = vmatprep.subr.mxu0 0.0
    %4841 = vmatpush1.msra.mxu0 0.0
    %4842 = vmatprep.subr.mxu0 0.0
    %4843 = vmatpush1.msra.mxu0 0.0
    %4844 = vmatprep.subr.mxu0 0.0
    %4845 = vmatpush1.msra.mxu0 0.0
    %4846 = vmatprep.subr.mxu0 0.0
    %4847 = vmatpush1.msra.mxu0 0.0
    %4848 = vmatprep.subr.mxu0 0.0
    %4849 = vmatpush1.msra.mxu0 0.0
    %4850 = vmatprep.subr.mxu0 0.0
    %4851 = vmatpush1.msra.mxu0 0.0
    %4852 = vmatprep.subr.mxu0 0.0
    %4853 = vmatpush1.msra.mxu0 0.0
    %4854 = vmatprep.subr.mxu0 0.0
    %4855 = vmatpush1.msra.mxu0 0.0
    %4856 = vmatprep.subr.mxu0 0.0
    %4857 = vmatpush1.msra.mxu0 0.0
    %4858 = vmatprep.subr.mxu0 0.0
    %4859 = vmatpush1.msra.mxu0 0.0
    %4860 = vmatprep.subr.mxu0 0.0
    %4861 = vmatpush1.msra.mxu0 0.0
    %4862 = vmatprep.subr.mxu0 0.0
    %4863 = vmatpush1.msra.mxu0 0.0
    %4864 = vmatprep.subr.mxu0 0.0
    %4865 = vmatpush1.msra.mxu0 0.0
    %4866 = vmatprep.subr.mxu0 0.0
    %4867 = vmatpush1.msra.mxu0 0.0
    %4868 = vmatprep.subr.mxu0 0.0
    %4869 = vmatpush1.msra.mxu0 0.0
    %4870 = vmatprep.subr.mxu0 0.0
    %4871 = vmatpush1.msra.mxu0 0.0
    %4872 = vmatprep.subr.mxu0 0.0
    %4873 = vmatpush1.msra.mxu0 0.0
    %4874 = vmatprep.subr.mxu0 0.0
    %4875 = vmatpush1.msra.mxu0 0.0
    %4876 = vmatprep.subr.mxu0 0.0
    %4877 = vmatpush1.msra.mxu0 0.0
    %4878 = vmatprep.subr.mxu0 0.0
    %4879 = vmatpush1.msra.mxu0 0.0
    %4880 = vmatprep.subr.mxu0 0.0
    %4881 = vmatpush1.msra.mxu0 0.0
    %4882 = vmatprep.subr.mxu0 0.0
    %4883 = vmatpush1.msra.mxu0 0.0
    %4884 = vmatprep.subr.mxu0 0.0
    %4885 = vmatpush1.msra.mxu0 0.0
    %4886 = vmatprep.subr.mxu0 0.0
    %4887 = vmatpush1.msra.mxu0 0.0
    %4888 = vmatprep.subr.mxu0 0.0
    %4889 = vmatpush1.msra.mxu0 0.0
    %4890 = vmatprep.subr.mxu0 0.0
    %4891 = vmatpush1.msra.mxu0 0.0
    %4892 = vmatprep.subr.mxu0 0.0
    %4893 = vmatpush1.msra.mxu0 0.0
    %4894 = vmatprep.mubr.f32.mxu0 0.0
    %4895 = vmatmul.mubr.f32.gmra.mrb[0].mxu0 %v4828
    %v4896 = vpop.f32.mrb[0].mxu0
    %v4897 = vadd.f32 %v4826, %v4896
    %v4898 = vpop.f32.mrb[0].mxu0
    %4899 = vdwg.mxu0
    %v4900 = vmax.f32 %v4897, 0.0
    %v4901 = vld [vmem:[%s17] sm:$0xff]
    %v4902 = vld [vmem:[%s17 + $0x8] sm:$0xff]
    %v4903 = vld [vmem:[%s17 + $0x10] sm:$0xff]
    %v4904 = vld [vmem:[%s17 + $0x18] sm:$0xff]
    %v4905 = vld [vmem:[%s18] sm:$0x1]
    %v4907 = vsel %vm3426, %v4900, 0
    %4909 = vmatprep.subr.mxu0 0.0
    %4910 = vmatpush1.msra.mxu0 %v4901
    %4911 = vmatprep.subr.mxu0 0.0
    %4912 = vmatpush1.msra.mxu0 %v4902
    %4913 = vmatprep.subr.mxu0 0.0
    %4914 = vmatpush1.msra.mxu0 %v4903
    %4915 = vmatprep.subr.mxu0 0.0
    %4916 = vmatpush1.msra.mxu0 %v4904
    %4917 = vmatprep.subr.mxu0 0.0
    %4918 = vmatpush1.msra.mxu0 0.0
    %4919 = vmatprep.subr.mxu0 0.0
    %4920 = vmatpush1.msra.mxu0 0.0
    %4921 = vmatprep.subr.mxu0 0.0
    %4922 = vmatpush1.msra.mxu0 0.0
    %4923 = vmatprep.subr.mxu0 0.0
    %4924 = vmatpush1.msra.mxu0 0.0
    %4925 = vmatprep.subr.mxu0 0.0
    %4926 = vmatpush1.msra.mxu0 0.0
    %4927 = vmatprep.subr.mxu0 0.0
    %4928 = vmatpush1.msra.mxu0 0.0
    %4929 = vmatprep.subr.mxu0 0.0
    %4930 = vmatpush1.msra.mxu0 0.0
    %4931 = vmatprep.subr.mxu0 0.0
    %4932 = vmatpush1.msra.mxu0 0.0
    %4933 = vmatprep.subr.mxu0 0.0
    %4934 = vmatpush1.msra.mxu0 0.0
    %4935 = vmatprep.subr.mxu0 0.0
    %4936 = vmatpush1.msra.mxu0 0.0
    %4937 = vmatprep.subr.mxu0 0.0
    %4938 = vmatpush1.msra.mxu0 0.0
    %4939 = vmatprep.subr.mxu0 0.0
    %4940 = vmatpush1.msra.mxu0 0.0
    %4941 = vmatprep.subr.mxu0 0.0
    %4942 = vmatpush1.msra.mxu0 0.0
    %4943 = vmatprep.subr.mxu0 0.0
    %4944 = vmatpush1.msra.mxu0 0.0
    %4945 = vmatprep.subr.mxu0 0.0
    %4946 = vmatpush1.msra.mxu0 0.0
    %4947 = vmatprep.subr.mxu0 0.0
    %4948 = vmatpush1.msra.mxu0 0.0
    %4949 = vmatprep.subr.mxu0 0.0
    %4950 = vmatpush1.msra.mxu0 0.0
    %4951 = vmatprep.subr.mxu0 0.0
    %4952 = vmatpush1.msra.mxu0 0.0
    %4953 = vmatprep.subr.mxu0 0.0
    %4954 = vmatpush1.msra.mxu0 0.0
    %4955 = vmatprep.subr.mxu0 0.0
    %4956 = vmatpush1.msra.mxu0 0.0
    %4957 = vmatprep.subr.mxu0 0.0
    %4958 = vmatpush1.msra.mxu0 0.0
    %4959 = vmatprep.subr.mxu0 0.0
    %4960 = vmatpush1.msra.mxu0 0.0
    %4961 = vmatprep.subr.mxu0 0.0
    %4962 = vmatpush1.msra.mxu0 0.0
    %4963 = vmatprep.subr.mxu0 0.0
    %4964 = vmatpush1.msra.mxu0 0.0
    %4965 = vmatprep.subr.mxu0 0.0
    %4966 = vmatpush1.msra.mxu0 0.0
    %4967 = vmatprep.subr.mxu0 0.0
    %4968 = vmatpush1.msra.mxu0 0.0
    %4969 = vmatprep.subr.mxu0 0.0
    %4970 = vmatpush1.msra.mxu0 0.0
    %4971 = vmatprep.subr.mxu0 0.0
    %4972 = vmatpush1.msra.mxu0 0.0
    %4973 = vmatprep.mubr.f32.mxu0 0.0
    %4974 = vmatmul.mubr.f32.gmra.mrb[0].mxu0 %v4907
    %v4975 = vpop.f32.mrb[0].mxu0
    %v4976 = vadd.f32 %v4905, %v4975
    %v4977 = vpop.f32.mrb[0].mxu0
    %4978 = vdwg.mxu0
    %v4979 = vsel %vm3579, %v4976, -inf
    %4980 = vmax.xlane.f32.xlu0 %v4979
    %v4981 = vpop.xlane.xlu0 %4980
    %v4982 = vsub.f32 %v4976, %v4981
    %v4983 = vmul.f32 %v4982, 1.442695
    %v4984 = vpow.pop %v4983
    %v4985 = vsel %vm3579, %v4984, 0.0
    %4986 = vadd.xlane.f32.xlu0 %v4985
    %v4987 = vpop.xlane.xlu0 %4986
    %v4988 = vrcp.pop %v4987
    %v4989 = vmul.f32 %v4984, %v4988
    %4990 = vst.msk [vmem:[#allocation5] sm:$0x1] %vm3579, %v4989
    // Predicated region
    $region110: #{_forward_impl.1} parent=1 // pred_check
      _
    $region111: #{_forward_impl.1} parent=1 // pred_check_branch
      %4992 = sbr.rel (0) target = $region113
    $region112: #{_forward_impl.1} parent=1 // pred_region
      %s4994 = ssub.s32 16, 16
      %4995 = vsyncadd [#allocation3], %s4994
      %s4997 = sshll.u32 [#allocation5], 4
      %s4998 = int_to_ptr.vmem [resolvable:$true] %s4997
      %5000 = dma.vmem_to_hbm [thread:$0]  %s4998, 16, %s26, [#allocation3]
    $region113: #{_forward_impl.1} parent=1 // pred_fallthru
      _
    // Predicated region
    $region114: #{_forward_impl.1} parent=1 // pred_check
      _
    $region115: #{_forward_impl.1} parent=1 // pred_check_branch
      %5002 = sbr.rel (0) target = $region117
    $region116: #{_forward_impl.1} parent=1 // pred_region
      %5003 = dma.done [#allocation3], 16
    $region117: #{_forward_impl.1} parent=1 // pred_fallthru
      _
    %5004 = vsyncpa [#allocation3], 1
    %5005 = vsyncpa [#allocation4], 1

</llo_original>
